<compile_context>
chip_gen: v7x
topology: tpu7x:2x2x1
jax: 0.10.0
libtpu: 0.0.40
codegen_flags: <defaults>
</compile_context>

<pallas_src>
import math
import functools

import jax
import jax.numpy as jnp
from jax.experimental import pallas as pl
from jax.experimental.pallas import tpu as pltpu


VMEM_LIMIT_BYTES = 64 * 1024 * 1024   # > 32 MiB default scoped limit, <= v7x physical


# ------------------------------ tiling heuristics -----------------------------

def _pick_seq_tile(S, cap=256):
    """Largest query-row tile <= cap that divides S and is a multiple of 8."""
    best = None
    for t in range(8, min(S, cap) + 1, 8):
        if S % t == 0:
            best = t
    return best if best is not None else S


def _pick_row_tile(M, cap=512):
    """Largest FFN row tile <= cap dividing M, multiple of 8, leaving >= 2 steps."""
    best = None
    for t in range(8, min(M, cap) + 1, 8):
        if M % t == 0 and M // t >= 2:
            best = t
    return best if best is not None else M


def _pick_col_tile(N, cap=512):
    """Largest d_ff tile <= cap that divides N and is a multiple of 128."""
    best = None
    for t in range(128, min(N, cap) + 1, 128):
        if N % t == 0:
            best = t
    return best if best is not None else N


def _pick_head_group(H, Dh, D, target=256):
    """Heads per grid step: largest G dividing H with G*Dh <= target and a
    lane-legal block width (G*Dh multiple of 128, or == d_model)."""
    best = H                      # fallback: all heads (G*Dh == D, always legal)
    for g in range(1, H + 1):
        gdh = g * Dh
        if H % g == 0 and gdh <= max(target, Dh) and (gdh == D or gdh % 128 == 0):
            best = g
    return best


# ------------------------- fused attention sub-layer --------------------------

def _attn_sublayer_kernel(*refs, group_heads, head_dim, use_mask, scale, eps):
    """Grid = (batch, q_tiles, head_groups).

    One grid step projects a group of G heads for one (batch, q-tile) block:
      Q/K/V : [tq,D]@[D,G*Dh] / [Skv,D]@[D,G*Dh]   (full-depth, wide matmuls)
      per-head softmax(q k^T) v, then the partial output projection for this
      group is accumulated into a persistent f32 (tq, D) VMEM scratch that was
      initialized with residual + out-proj bias at head-group 0.
    LayerNorm epilogue + lane-dense (1, tq, D) store on the last head group.
    """
    if use_mask:
        (xq_ref, xkv_ref, mask_ref, wq_ref, bq_ref, wk_ref, bk_ref, wv_ref,
         bv_ref, wo_ref, bo_ref, g_ref, beta_ref, o_ref, acc_ref) = refs
    else:
        (xq_ref, xkv_ref, wq_ref, bq_ref, wk_ref, bk_ref, wv_ref,
         bv_ref, wo_ref, bo_ref, g_ref, beta_ref, o_ref, acc_ref) = refs
        mask_ref = None

    hg = pl.program_id(2)
    x = xq_ref[0]                         # [tq, D]  bf16 query block (== residual rows)
    kv = xkv_ref[0]                       # [Skv, D] bf16 key/value source
    cdt = x.dtype

    # Residual + output-projection bias, f32, once per (b, q-tile).
    @pl.when(hg == 0)
    def _():
        acc_ref[...] = x.astype(jnp.float32) + bo_ref[...]

    # Grouped projections: bf16 inputs straight into the MXU, f32 accumulate.
    q = (jnp.dot(x, wq_ref[...], preferred_element_type=jnp.float32) + bq_ref[...]).astype(cdt)
    k = (jnp.dot(kv, wk_ref[...], preferred_element_type=jnp.float32) + bk_ref[...]).astype(cdt)
    v = (jnp.dot(kv, wv_ref[...], preferred_element_type=jnp.float32) + bv_ref[...]).astype(cdt)

    add_mask = mask_ref[...] if use_mask else None     # precomputed additive f32 mask
    Dh = head_dim
    for g in range(group_heads):
        qg = q[:, g * Dh:(g + 1) * Dh]                 # [tq, Dh]
        kg = k[:, g * Dh:(g + 1) * Dh]                 # [Skv, Dh]
        vg = v[:, g * Dh:(g + 1) * Dh]                 # [Skv, Dh]
        s = jax.lax.dot_general(qg, kg, (((1,), (1,)), ((), ())),
                                preferred_element_type=jnp.float32) * scale   # [tq, Skv]
        if use_mask:
            s = s + add_mask
        s = s - jnp.max(s, axis=-1, keepdims=True)
        probs = jnp.exp(s)
        probs = probs * pl.reciprocal(jnp.sum(probs, axis=-1, keepdims=True), approx=True)
        o_h = jnp.dot(probs.astype(cdt), vg, preferred_element_type=jnp.float32)  # [tq, Dh]
        # concat(heads) @ Wo == sum_h o_h @ Wo_rows_h  (partial out-projection).
        # TODO(synk): concatenate the G head outputs and do one depth-G*Dh
        #             out-proj matmul once minor-dim concat relayout is worth it.
        acc_ref[...] += jnp.dot(o_h.astype(cdt), wo_ref[g * Dh:(g + 1) * Dh, :],
                                preferred_element_type=jnp.float32)               # [tq, D]

    # Epilogue: LayerNorm(residual + attention output), lane-dense store.
    @pl.when(hg == pl.num_programs(2) - 1)
    def _():
        y = acc_ref[...]
        mean = jnp.mean(y, axis=-1, keepdims=True)
        var = jnp.mean((y - mean) ** 2, axis=-1, keepdims=True)
        norm = (y - mean) * jax.lax.rsqrt(var + eps)
        o_ref[0] = (norm * g_ref[...] + beta_ref[...]).astype(o_ref.dtype)


def attention_sublayer(xq, xkv, add_mask, p, gamma, beta, num_heads):
    """xq: [B, Sq, D] (query + residual), xkv: [B, Skv, D],
    add_mask: [Sq, Skv] additive f32 mask or None."""
    B, Sq, D = xq.shape
    Skv = xkv.shape[1]
    H = num_heads
    Dh = D // H
    G = _pick_head_group(H, Dh, D)
    GDh = G * Dh
    n_hg = H // G
    tq = _pick_seq_tile(Sq)
    use_mask = add_mask is not None
    scale = 1.0 / math.sqrt(Dh)

    kernel = functools.partial(_attn_sublayer_kernel, group_heads=G, head_dim=Dh,
                               use_mask=use_mask, scale=scale, eps=1e-5)

    in_specs = [
        pl.BlockSpec((1, tq, D), lambda b, qi, hg: (b, qi, 0)),    # xq (residual rows)
        pl.BlockSpec((1, Skv, D), lambda b, qi, hg: (b, 0, 0)),    # xkv
    ]
    inputs = [xq, xkv]
    if use_mask:
        in_specs.append(pl.BlockSpec((tq, Skv), lambda b, qi, hg: (qi, 0)))
        inputs.append(add_mask)
    in_specs += [
        pl.BlockSpec((D, GDh), lambda b, qi, hg: (0, hg)),   # wq column group
        pl.BlockSpec((1, GDh), lambda b, qi, hg: (0, hg)),   # bq
        pl.BlockSpec((D, GDh), lambda b, qi, hg: (0, hg)),   # wk
        pl.BlockSpec((1, GDh), lambda b, qi, hg: (0, hg)),   # bk
        pl.BlockSpec((D, GDh), lambda b, qi, hg: (0, hg)),   # wv
        pl.BlockSpec((1, GDh), lambda b, qi, hg: (0, hg)),   # bv
        pl.BlockSpec((GDh, D), lambda b, qi, hg: (hg, 0)),   # wo row group
        pl.BlockSpec((1, D), lambda b, qi, hg: (0, 0)),      # bo
        pl.BlockSpec((1, D), lambda b, qi, hg: (0, 0)),      # ln gamma
        pl.BlockSpec((1, D), lambda b, qi, hg: (0, 0)),      # ln beta
    ]
    inputs += [p['wq'], p['bq'], p['wk'], p['bk'], p['wv'], p['bv'],
               p['wo'], p['bo'], gamma, beta]

    return pl.pallas_call(
        kernel,
        out_shape=jax.ShapeDtypeStruct((B, Sq, D), xq.dtype),
        grid=(B, Sq // tq, n_hg),
        in_specs=in_specs,
        out_specs=pl.BlockSpec((1, tq, D), lambda b, qi, hg: (b, qi, 0)),
        scratch_shapes=[pltpu.VMEM((tq, D), jnp.float32)],
        compiler_params=pltpu.CompilerParams(
            dimension_semantics=("parallel", "parallel", "arbitrary"),
            vmem_limit_bytes=VMEM_LIMIT_BYTES),
    )(*inputs)


# ----------------------------- fused FFN sub-layer -----------------------------

def _ffn_ln_kernel(x_ref, w1_ref, b1_ref, w2_ref, b2_ref, g_ref, beta_ref,
                   o_ref, acc_ref, *, eps):
    """Grid = (row_tiles, dff_tiles). The d_ff axis is a reduction: each step
    computes relu(x@W1_j+b1_j) for a d_ff slab and accumulates its @W2_j
    contribution into an f32 (tm, D) scratch; LN epilogue on the last slab."""
    j = pl.program_id(1)
    x = x_ref[...]                                                 # [tm, D] bf16

    @pl.when(j == 0)
    def _():
        acc_ref[...] = x.astype(jnp.float32) + b2_ref[...]         # residual + out bias

    h = jnp.dot(x, w1_ref[...], preferred_element_type=jnp.float32) + b1_ref[...]  # [tm, tdff]
    h = jnp.maximum(h, 0.0).astype(x.dtype)                        # ReLU, bf16 for 2nd MXU pass
    acc_ref[...] += jnp.dot(h, w2_ref[...], preferred_element_type=jnp.float32)    # [tm, D]

    @pl.when(j == pl.num_programs(1) - 1)
    def _():
        y = acc_ref[...]
        mean = jnp.mean(y, axis=-1, keepdims=True)
        var = jnp.mean((y - mean) ** 2, axis=-1, keepdims=True)
        norm = (y - mean) * jax.lax.rsqrt(var + eps)
        o_ref[...] = (norm * g_ref[...] + beta_ref[...]).astype(o_ref.dtype)


def ffn_ln_sublayer(x, w1, b1, w2, b2, gamma, beta):
    B, S, D = x.shape
    M = B * S
    Dff = w1.shape[1]
    x2 = x.reshape(M, D)
    tm = _pick_row_tile(M)
    tdff = _pick_col_tile(Dff)
    out = pl.pallas_call(
        functools.partial(_ffn_ln_kernel, eps=1e-5),
        out_shape=jax.ShapeDtypeStruct((M, D), x.dtype),
        grid=(M // tm, Dff // tdff),
        in_specs=[pl.BlockSpec((tm, D), lambda i, j: (i, 0)),
                  pl.BlockSpec((D, tdff), lambda i, j: (0, j)),
                  pl.BlockSpec((1, tdff), lambda i, j: (0, j)),
                  pl.BlockSpec((tdff, D), lambda i, j: (j, 0)),
                  pl.BlockSpec((1, D), lambda i, j: (0, 0)),
                  pl.BlockSpec((1, D), lambda i, j: (0, 0)),
                  pl.BlockSpec((1, D), lambda i, j: (0, 0))],
        out_specs=pl.BlockSpec((tm, D), lambda i, j: (i, 0)),
        scratch_shapes=[pltpu.VMEM((tm, D), jnp.float32)],
        compiler_params=pltpu.CompilerParams(
            dimension_semantics=("parallel", "arbitrary"),
            vmem_limit_bytes=VMEM_LIMIT_BYTES),
    )(x2, w1, b1, w2, b2, gamma, beta)
    return out.reshape(B, S, D)


# ---------------------------------- JAX glue -----------------------------------

def sinusoidal_pos_encoding(max_len, d_model):
    pos = jnp.arange(max_len, dtype=jnp.float32)[:, None]
    i = jnp.arange(d_model // 2, dtype=jnp.float32)[None, :]
    angle = pos / jnp.power(10000.0, 2.0 * i / d_model)
    pe = jnp.zeros((max_len, d_model), jnp.float32)
    pe = pe.at[:, 0::2].set(jnp.sin(angle))
    pe = pe.at[:, 1::2].set(jnp.cos(angle))
    return pe


def input_embedding(token_ids, emb_table, pos_enc, d_model):
    # Embedding lookup (gather) + positional encoding kept as plain-JAX glue.
    emb = jnp.take(emb_table, token_ids, axis=0) * math.sqrt(d_model)   # [B, S, D]
    return emb + pos_enc[None, :token_ids.shape[1], :]


def decoder_block_forward(x, enc_out, add_mask, p, num_heads):
    # masked multi-head self-attention + add & norm (one fused kernel)
    x = attention_sublayer(x, x, add_mask, p['self_attn'], p['ln1_g'], p['ln1_b'], num_heads)
    # encoder-decoder cross-attention + add & norm (unmasked; no mask input compiled in)
    x = attention_sublayer(x, enc_out, None, p['cross_attn'], p['ln2_g'], p['ln2_b'], num_heads)
    # position-wise feed-forward + add & norm (one fused kernel, d_ff-tiled)
    x = ffn_ln_sublayer(x, p['w1'], p['b1'], p['w2'], p['b2'], p['ln3_g'], p['ln3_b'])
    return x


def transformer_decoder_forward(token_ids, enc_out, mask, params, num_heads,
                                compute_dtype=jnp.bfloat16):
    D = enc_out.shape[-1]
    x = input_embedding(token_ids, params['emb'], params['pos'], D).astype(compute_dtype)
    enc = enc_out.astype(compute_dtype)
    add_mask = None
    if mask is not None:
        # One-time conversion of the int mask (0 = blocked) to an additive mask.
        add_mask = jnp.where(mask == 0, -1e9, 0.0).astype(jnp.float32)
    for p in params['blocks']:
        x = decoder_block_forward(x, enc, add_mask, p, num_heads)
    return x.astype(jnp.float32)


# ------------------------------- parameter init --------------------------------

def init_params(key, num_blocks, d_model, num_heads, vocab_size, max_seq_len,
                pad_idx, d_ff, w_dtype=jnp.bfloat16):
    keys = jax.random.split(key, 1 + num_blocks)
    emb = jax.random.normal(keys[0], (vocab_size, d_model), jnp.float32) * 0.02
    if pad_idx is not None:
        emb = emb.at[pad_idx].set(0.0)   # nn.Embedding(padding_idx=...) semantics
    pos = sinusoidal_pos_encoding(max_seq_len, d_model)

    def dense(k, shape):
        return (jax.random.normal(k, shape, jnp.float32) * 0.02).astype(w_dtype)

    def attn_params(ks):
        # Flat [D, D] projections; head h owns columns (rows for wo) h*Dh:(h+1)*Dh,
        # so the BlockSpec column/row blocks perform the head-group split.
        return dict(
            wq=dense(ks[0], (d_model, d_model)), bq=jnp.zeros((1, d_model), jnp.float32),
            wk=dense(ks[1], (d_model, d_model)), bk=jnp.zeros((1, d_model), jnp.float32),
            wv=dense(ks[2], (d_model, d_model)), bv=jnp.zeros((1, d_model), jnp.float32),
            wo=dense(ks[3], (d_model, d_model)), bo=jnp.zeros((1, d_model), jnp.float32),
        )

    blocks = []
    for b in range(num_blocks):
        bk = jax.random.split(keys[1 + b], 10)
        blocks.append(dict(
            self_attn=attn_params(bk[0:4]),
            cross_attn=attn_params(bk[4:8]),
            w1=dense(bk[8], (d_model, d_ff)), b1=jnp.zeros((1, d_ff), jnp.float32),
            w2=dense(bk[9], (d_ff, d_model)), b2=jnp.zeros((1, d_model), jnp.float32),
            ln1_g=jnp.ones((1, d_model), jnp.float32), ln1_b=jnp.zeros((1, d_model), jnp.float32),
            ln2_g=jnp.ones((1, d_model), jnp.float32), ln2_b=jnp.zeros((1, d_model), jnp.float32),
            ln3_g=jnp.ones((1, d_model), jnp.float32), ln3_b=jnp.zeros((1, d_model), jnp.float32),
        ))
    return dict(emb=emb, pos=pos, blocks=blocks)


# ------------------------------------ main --------------------------------------

if __name__ == "__main__":
    num_blocks = 2
    d_model = 32
    num_attn_heads = 4
    vocab_size = 50
    max_seq_len = 8
    pad_idx = 0
    d_ff = 4 * d_model
    B, S = 2, max_seq_len

    key = jax.random.PRNGKey(0)
    k_tok, k_enc, k_par = jax.random.split(key, 3)

    token_ids = jax.random.randint(k_tok, (B, S), 1, vocab_size, dtype=jnp.int32)
    enc_out = jax.random.normal(k_enc, (B, S, d_model), jnp.float32)
    mask = jnp.tril(jnp.ones((S, S), jnp.int32))   # causal target mask (0 = blocked)

    params = init_params(k_par, num_blocks, d_model, num_attn_heads,
                         vocab_size, max_seq_len, pad_idx, d_ff)

    fwd = jax.jit(functools.partial(transformer_decoder_forward, num_heads=num_attn_heads))
    out = fwd(token_ids, enc_out, mask, params)
    jax.block_until_ready(out)

    assert out.shape == (B, S, d_model), out.shape
    assert jnp.all(jnp.isfinite(out))
    print("KERNEL_OK")
</pallas_src>

<mosaic_0001>
module attributes {stable_mosaic.version = 11 : i64} {
  func.func @_attn_sublayer_kernel(%arg0: i32, %arg1: i32, %arg2: i32, %arg3: memref<1x8x32xbf16, #tpu.memory_space<vmem>>, %arg4: memref<1x8x32xbf16, #tpu.memory_space<vmem>>, %arg5: memref<8x8xf32, #tpu.memory_space<vmem>>, %arg6: memref<32x32xbf16, #tpu.memory_space<vmem>>, %arg7: memref<1x32xf32, #tpu.memory_space<vmem>>, %arg8: memref<32x32xbf16, #tpu.memory_space<vmem>>, %arg9: memref<1x32xf32, #tpu.memory_space<vmem>>, %arg10: memref<32x32xbf16, #tpu.memory_space<vmem>>, %arg11: memref<1x32xf32, #tpu.memory_space<vmem>>, %arg12: memref<32x32xbf16, #tpu.memory_space<vmem>>, %arg13: memref<1x32xf32, #tpu.memory_space<vmem>>, %arg14: memref<1x32xf32, #tpu.memory_space<vmem>>, %arg15: memref<1x32xf32, #tpu.memory_space<vmem>>, %arg16: memref<1x8x32xbf16, #tpu.memory_space<vmem>>, %arg17: memref<8x32xf32, #tpu.memory_space<vmem>>) attributes {dimension_semantics = [#tpu.dimension_semantics<parallel>, #tpu.dimension_semantics<parallel>, #tpu.dimension_semantics<arbitrary>], iteration_bounds = array<i64: 2, 1, 1>, scalar_prefetch = 0 : i64, scratch_operands = 1 : i64, tpu.core_type = #tpu.core_type<tc>, window_params = [{transform_indices = @transform_0, window_bounds = array<i64: 1, 8, 32>}, {transform_indices = @transform_1, window_bounds = array<i64: 1, 8, 32>}, {transform_indices = @transform_2, window_bounds = array<i64: 8, 8>}, {transform_indices = @transform_3, window_bounds = array<i64: 32, 32>}, {transform_indices = @transform_4, window_bounds = array<i64: 1, 32>}, {transform_indices = @transform_5, window_bounds = array<i64: 32, 32>}, {transform_indices = @transform_6, window_bounds = array<i64: 1, 32>}, {transform_indices = @transform_7, window_bounds = array<i64: 32, 32>}, {transform_indices = @transform_8, window_bounds = array<i64: 1, 32>}, {transform_indices = @transform_9, window_bounds = array<i64: 32, 32>}, {pipeline_mode = #tpu.pipeline_mode<synchronous>, transform_indices = @transform_10, window_bounds = array<i64: 1, 32>}, {pipeline_mode = #tpu.pipeline_mode<synchronous>, transform_indices = @transform_11, window_bounds = array<i64: 1, 32>}, {pipeline_mode = #tpu.pipeline_mode<synchronous>, transform_indices = @transform_12, window_bounds = array<i64: 1, 32>}, {transform_indices = @transform_13, window_bounds = array<i64: 1, 8, 32>}]} {
    %c0 = arith.constant 0 : index
    %c0_0 = arith.constant 0 : index
    %c0_1 = arith.constant 0 : index
    %0 = vector.load %arg3[%c0, %c0_0, %c0_1] : memref<1x8x32xbf16, #tpu.memory_space<vmem>>, vector<1x8x32xbf16>
    %1 = vector.shape_cast %0 : vector<1x8x32xbf16> to vector<8x32xbf16>
    %c0_2 = arith.constant 0 : index
    %c0_3 = arith.constant 0 : index
    %c0_4 = arith.constant 0 : index
    %2 = vector.load %arg4[%c0_2, %c0_3, %c0_4] : memref<1x8x32xbf16, #tpu.memory_space<vmem>>, vector<1x8x32xbf16>
    %3 = vector.shape_cast %2 : vector<1x8x32xbf16> to vector<8x32xbf16>
    %c0_i32 = arith.constant 0 : i32
    %4 = arith.cmpi eq, %arg2, %c0_i32 : i32
    %5 = arith.extui %4 : i1 to i32
    %c0_i32_5 = arith.constant 0 : i32
    %6 = arith.cmpi ne, %5, %c0_i32_5 : i32
    scf.if %6 {
      %129 = arith.extf %1 : vector<8x32xbf16> to vector<8x32xf32>
      %c0_69 = arith.constant 0 : index
      %c0_70 = arith.constant 0 : index
      %130 = vector.load %arg13[%c0_69, %c0_70] : memref<1x32xf32, #tpu.memory_space<vmem>>, vector<1x32xf32>
      %131 = vector.broadcast %130 : vector<1x32xf32> to vector<8x32xf32>
      %132 = arith.addf %129, %131 : vector<8x32xf32>
      %c0_71 = arith.constant 0 : index
      %c0_72 = arith.constant 0 : index
      %133 = vector.load %arg17[%c0_71, %c0_72] : memref<8x32xf32, #tpu.memory_space<vmem>>, vector<8x32xf32>
      tpu.vector_store %arg17[%c0_71, %c0_72], %132 {strides = array<i32>} : memref<8x32xf32, #tpu.memory_space<vmem>>, vector<8x32xf32>,
    } else {
    }
    %c0_6 = arith.constant 0 : index
    %c0_7 = arith.constant 0 : index
    %7 = vector.load %arg6[%c0_6, %c0_7] : memref<32x32xbf16, #tpu.memory_space<vmem>>, vector<32x32xbf16>
    %cst = arith.constant dense<0.000000e+00> : vector<8x32xf32>
    %8 = tpu.matmul %1, %7, %cst {dimension_numbers = #tpu.dot_dimension_numbers<[1], [0], [0], [1], [0, 0, 1, 1], [], []>} : vector<8x32xbf16>, vector<32x32xbf16>, vector<8x32xf32> -> vector<8x32xf32>
    %c0_8 = arith.constant 0 : index
    %c0_9 = arith.constant 0 : index
    %9 = vector.load %arg7[%c0_8, %c0_9] : memref<1x32xf32, #tpu.memory_space<vmem>>, vector<1x32xf32>
    %10 = vector.broadcast %9 : vector<1x32xf32> to vector<8x32xf32>
    %11 = arith.addf %8, %10 : vector<8x32xf32>
    %12 = arith.truncf %11 : vector<8x32xf32> to vector<8x32xbf16>
    %c0_10 = arith.constant 0 : index
    %c0_11 = arith.constant 0 : index
    %13 = vector.load %arg8[%c0_10, %c0_11] : memref<32x32xbf16, #tpu.memory_space<vmem>>, vector<32x32xbf16>
    %cst_12 = arith.constant dense<0.000000e+00> : vector<8x32xf32>
    %14 = tpu.matmul %3, %13, %cst_12 {dimension_numbers = #tpu.dot_dimension_numbers<[1], [0], [0], [1], [0, 0, 1, 1], [], []>} : vector<8x32xbf16>, vector<32x32xbf16>, vector<8x32xf32> -> vector<8x32xf32>
    %c0_13 = arith.constant 0 : index
    %c0_14 = arith.constant 0 : index
    %15 = vector.load %arg9[%c0_13, %c0_14] : memref<1x32xf32, #tpu.memory_space<vmem>>, vector<1x32xf32>
    %16 = vector.broadcast %15 : vector<1x32xf32> to vector<8x32xf32>
    %17 = arith.addf %14, %16 : vector<8x32xf32>
    %18 = arith.truncf %17 : vector<8x32xf32> to vector<8x32xbf16>
    %c0_15 = arith.constant 0 : index
    %c0_16 = arith.constant 0 : index
    %19 = vector.load %arg10[%c0_15, %c0_16] : memref<32x32xbf16, #tpu.memory_space<vmem>>, vector<32x32xbf16>
    %cst_17 = arith.constant dense<0.000000e+00> : vector<8x32xf32>
    %20 = tpu.matmul %3, %19, %cst_17 {dimension_numbers = #tpu.dot_dimension_numbers<[1], [0], [0], [1], [0, 0, 1, 1], [], []>} : vector<8x32xbf16>, vector<32x32xbf16>, vector<8x32xf32> -> vector<8x32xf32>
    %c0_18 = arith.constant 0 : index
    %c0_19 = arith.constant 0 : index
    %21 = vector.load %arg11[%c0_18, %c0_19] : memref<1x32xf32, #tpu.memory_space<vmem>>, vector<1x32xf32>
    %22 = vector.broadcast %21 : vector<1x32xf32> to vector<8x32xf32>
    %23 = arith.addf %20, %22 : vector<8x32xf32>
    %24 = arith.truncf %23 : vector<8x32xf32> to vector<8x32xbf16>
    %c0_20 = arith.constant 0 : index
    %c0_21 = arith.constant 0 : index
    %25 = vector.load %arg5[%c0_20, %c0_21] : memref<8x8xf32, #tpu.memory_space<vmem>>, vector<8x8xf32>
    %26 = vector.extract_strided_slice %12 {offsets = [0, 0], sizes = [8, 8], strides = [1, 1]} : vector<8x32xbf16> to vector<8x8xbf16>
    %27 = vector.extract_strided_slice %18 {offsets = [0, 0], sizes = [8, 8], strides = [1, 1]} : vector<8x32xbf16> to vector<8x8xbf16>
    %28 = vector.extract_strided_slice %24 {offsets = [0, 0], sizes = [8, 8], strides = [1, 1]} : vector<8x32xbf16> to vector<8x8xbf16>
    %cst_22 = arith.constant dense<0.000000e+00> : vector<8x8xf32>
    %29 = tpu.matmul %26, %27, %cst_22 {dimension_numbers = #tpu.dot_dimension_numbers<[1], [1], [0], [0], [0, 0, 1, 0], [], []>} : vector<8x8xbf16>, vector<8x8xbf16>, vector<8x8xf32> -> vector<8x8xf32>
    %cst_23 = arith.constant 0.353553385 : f32
    %30 = vector.broadcast %cst_23 : f32 to vector<8x8xf32>
    %31 = arith.mulf %29, %30 : vector<8x8xf32>
    %32 = arith.addf %31, %25 : vector<8x8xf32>
    %cst_24 = arith.constant dense<0xFF800000> : vector<8xf32>
    %33 = vector.multi_reduction <maximumf>, %32, %cst_24 [1] : vector<8x8xf32> to vector<8xf32>
    %34 = vector.shape_cast %33 : vector<8xf32> to vector<8x1xf32>
    %35 = vector.broadcast %34 : vector<8x1xf32> to vector<8x8xf32>
    %36 = arith.subf %32, %35 : vector<8x8xf32>
    %37 = math.exp %36 : vector<8x8xf32>
    %cst_25 = arith.constant dense<0.000000e+00> : vector<8xf32>
    %38 = vector.multi_reduction <add>, %37, %cst_25 [1] : vector<8x8xf32> to vector<8xf32>
    %39 = vector.shape_cast %38 : vector<8xf32> to vector<8x1xf32>
    %40 = tpu.reciprocal %39 {approx = true} : vector<8x1xf32> -> vector<8x1xf32>
    %41 = vector.broadcast %40 : vector<8x1xf32> to vector<8x8xf32>
    %42 = arith.mulf %37, %41 : vector<8x8xf32>
    %43 = arith.truncf %42 : vector<8x8xf32> to vector<8x8xbf16>
    %cst_26 = arith.constant dense<0.000000e+00> : vector<8x8xf32>
    %44 = tpu.matmul %43, %28, %cst_26 {dimension_numbers = #tpu.dot_dimension_numbers<[1], [0], [0], [1], [0, 0, 1, 1], [], []>} : vector<8x8xbf16>, vector<8x8xbf16>, vector<8x8xf32> -> vector<8x8xf32>
    %c0_27 = arith.constant 0 : index
    %c0_28 = arith.constant 0 : index
    %45 = vector.load %arg17[%c0_27, %c0_28] : memref<8x32xf32, #tpu.memory_space<vmem>>, vector<8x32xf32>
    %46 = arith.truncf %44 : vector<8x8xf32> to vector<8x8xbf16>
    %c0_29 = arith.constant 0 : index
    %c0_30 = arith.constant 0 : index
    %47 = vector.load %arg12[%c0_29, %c0_30] : memref<32x32xbf16, #tpu.memory_space<vmem>>, vector<8x32xbf16>
    %cst_31 = arith.constant dense<0.000000e+00> : vector<8x32xf32>
    %48 = tpu.matmul %46, %47, %cst_31 {dimension_numbers = #tpu.dot_dimension_numbers<[1], [0], [0], [1], [0, 0, 1, 1], [], []>} : vector<8x8xbf16>, vector<8x32xbf16>, vector<8x32xf32> -> vector<8x32xf32>
    %49 = arith.addf %45, %48 : vector<8x32xf32>
    %c0_32 = arith.constant 0 : index
    %c0_33 = arith.constant 0 : index
    %50 = vector.load %arg17[%c0_32, %c0_33] : memref<8x32xf32, #tpu.memory_space<vmem>>, vector<8x32xf32>
    tpu.vector_store %arg17[%c0_32, %c0_33], %49 {strides = array<i32>} : memref<8x32xf32, #tpu.memory_space<vmem>>, vector<8x32xf32>,
    %51 = vector.extract_strided_slice %12 {offsets = [0, 8], sizes = [8, 8], strides = [1, 1]} : vector<8x32xbf16> to vector<8x8xbf16>
    %52 = vector.extract_strided_slice %18 {offsets = [0, 8], sizes = [8, 8], strides = [1, 1]} : vector<8x32xbf16> to vector<8x8xbf16>
    %53 = vector.extract_strided_slice %24 {offsets = [0, 8], sizes = [8, 8], strides = [1, 1]} : vector<8x32xbf16> to vector<8x8xbf16>
    %cst_34 = arith.constant dense<0.000000e+00> : vector<8x8xf32>
    %54 = tpu.matmul %51, %52, %cst_34 {dimension_numbers = #tpu.dot_dimension_numbers<[1], [1], [0], [0], [0, 0, 1, 0], [], []>} : vector<8x8xbf16>, vector<8x8xbf16>, vector<8x8xf32> -> vector<8x8xf32>
    %cst_35 = arith.constant 0.353553385 : f32
    %55 = vector.broadcast %cst_35 : f32 to vector<8x8xf32>
    %56 = arith.mulf %54, %55 : vector<8x8xf32>
    %57 = arith.addf %56, %25 : vector<8x8xf32>
    %cst_36 = arith.constant dense<0xFF800000> : vector<8xf32>
    %58 = vector.multi_reduction <maximumf>, %57, %cst_36 [1] : vector<8x8xf32> to vector<8xf32>
    %59 = vector.shape_cast %58 : vector<8xf32> to vector<8x1xf32>
    %60 = vector.broadcast %59 : vector<8x1xf32> to vector<8x8xf32>
    %61 = arith.subf %57, %60 : vector<8x8xf32>
    %62 = math.exp %61 : vector<8x8xf32>
    %cst_37 = arith.constant dense<0.000000e+00> : vector<8xf32>
    %63 = vector.multi_reduction <add>, %62, %cst_37 [1] : vector<8x8xf32> to vector<8xf32>
    %64 = vector.shape_cast %63 : vector<8xf32> to vector<8x1xf32>
    %65 = tpu.reciprocal %64 {approx = true} : vector<8x1xf32> -> vector<8x1xf32>
    %66 = vector.broadcast %65 : vector<8x1xf32> to vector<8x8xf32>
    %67 = arith.mulf %62, %66 : vector<8x8xf32>
    %68 = arith.truncf %67 : vector<8x8xf32> to vector<8x8xbf16>
    %cst_38 = arith.constant dense<0.000000e+00> : vector<8x8xf32>
    %69 = tpu.matmul %68, %53, %cst_38 {dimension_numbers = #tpu.dot_dimension_numbers<[1], [0], [0], [1], [0, 0, 1, 1], [], []>} : vector<8x8xbf16>, vector<8x8xbf16>, vector<8x8xf32> -> vector<8x8xf32>
    %c0_39 = arith.constant 0 : index
    %c0_40 = arith.constant 0 : index
    %70 = vector.load %arg17[%c0_39, %c0_40] : memref<8x32xf32, #tpu.memory_space<vmem>>, vector<8x32xf32>
    %71 = arith.truncf %69 : vector<8x8xf32> to vector<8x8xbf16>
    %c8 = arith.constant 8 : index
    %c0_41 = arith.constant 0 : index
    %72 = vector.load %arg12[%c8, %c0_41] : memref<32x32xbf16, #tpu.memory_space<vmem>>, vector<8x32xbf16>
    %cst_42 = arith.constant dense<0.000000e+00> : vector<8x32xf32>
    %73 = tpu.matmul %71, %72, %cst_42 {dimension_numbers = #tpu.dot_dimension_numbers<[1], [0], [0], [1], [0, 0, 1, 1], [], []>} : vector<8x8xbf16>, vector<8x32xbf16>, vector<8x32xf32> -> vector<8x32xf32>
    %74 = arith.addf %70, %73 : vector<8x32xf32>
    %c0_43 = arith.constant 0 : index
    %c0_44 = arith.constant 0 : index
    %75 = vector.load %arg17[%c0_43, %c0_44] : memref<8x32xf32, #tpu.memory_space<vmem>>, vector<8x32xf32>
    tpu.vector_store %arg17[%c0_43, %c0_44], %74 {strides = array<i32>} : memref<8x32xf32, #tpu.memory_space<vmem>>, vector<8x32xf32>,
    %76 = vector.extract_strided_slice %12 {offsets = [0, 16], sizes = [8, 8], strides = [1, 1]} : vector<8x32xbf16> to vector<8x8xbf16>
    %77 = vector.extract_strided_slice %18 {offsets = [0, 16], sizes = [8, 8], strides = [1, 1]} : vector<8x32xbf16> to vector<8x8xbf16>
    %78 = vector.extract_strided_slice %24 {offsets = [0, 16], sizes = [8, 8], strides = [1, 1]} : vector<8x32xbf16> to vector<8x8xbf16>
    %cst_45 = arith.constant dense<0.000000e+00> : vector<8x8xf32>
    %79 = tpu.matmul %76, %77, %cst_45 {dimension_numbers = #tpu.dot_dimension_numbers<[1], [1], [0], [0], [0, 0, 1, 0], [], []>} : vector<8x8xbf16>, vector<8x8xbf16>, vector<8x8xf32> -> vector<8x8xf32>
    %cst_46 = arith.constant 0.353553385 : f32
    %80 = vector.broadcast %cst_46 : f32 to vector<8x8xf32>
    %81 = arith.mulf %79, %80 : vector<8x8xf32>
    %82 = arith.addf %81, %25 : vector<8x8xf32>
    %cst_47 = arith.constant dense<0xFF800000> : vector<8xf32>
    %83 = vector.multi_reduction <maximumf>, %82, %cst_47 [1] : vector<8x8xf32> to vector<8xf32>
    %84 = vector.shape_cast %83 : vector<8xf32> to vector<8x1xf32>
    %85 = vector.broadcast %84 : vector<8x1xf32> to vector<8x8xf32>
    %86 = arith.subf %82, %85 : vector<8x8xf32>
    %87 = math.exp %86 : vector<8x8xf32>
    %cst_48 = arith.constant dense<0.000000e+00> : vector<8xf32>
    %88 = vector.multi_reduction <add>, %87, %cst_48 [1] : vector<8x8xf32> to vector<8xf32>
    %89 = vector.shape_cast %88 : vector<8xf32> to vector<8x1xf32>
    %90 = tpu.reciprocal %89 {approx = true} : vector<8x1xf32> -> vector<8x1xf32>
    %91 = vector.broadcast %90 : vector<8x1xf32> to vector<8x8xf32>
    %92 = arith.mulf %87, %91 : vector<8x8xf32>
    %93 = arith.truncf %92 : vector<8x8xf32> to vector<8x8xbf16>
    %cst_49 = arith.constant dense<0.000000e+00> : vector<8x8xf32>
    %94 = tpu.matmul %93, %78, %cst_49 {dimension_numbers = #tpu.dot_dimension_numbers<[1], [0], [0], [1], [0, 0, 1, 1], [], []>} : vector<8x8xbf16>, vector<8x8xbf16>, vector<8x8xf32> -> vector<8x8xf32>
    %c0_50 = arith.constant 0 : index
    %c0_51 = arith.constant 0 : index
    %95 = vector.load %arg17[%c0_50, %c0_51] : memref<8x32xf32, #tpu.memory_space<vmem>>, vector<8x32xf32>
    %96 = arith.truncf %94 : vector<8x8xf32> to vector<8x8xbf16>
    %c16 = arith.constant 16 : index
    %c0_52 = arith.constant 0 : index
    %97 = vector.load %arg12[%c16, %c0_52] : memref<32x32xbf16, #tpu.memory_space<vmem>>, vector<8x32xbf16>
    %cst_53 = arith.constant dense<0.000000e+00> : vector<8x32xf32>
    %98 = tpu.matmul %96, %97, %cst_53 {dimension_numbers = #tpu.dot_dimension_numbers<[1], [0], [0], [1], [0, 0, 1, 1], [], []>} : vector<8x8xbf16>, vector<8x32xbf16>, vector<8x32xf32> -> vector<8x32xf32>
    %99 = arith.addf %95, %98 : vector<8x32xf32>
    %c0_54 = arith.constant 0 : index
    %c0_55 = arith.constant 0 : index
    %100 = vector.load %arg17[%c0_54, %c0_55] : memref<8x32xf32, #tpu.memory_space<vmem>>, vector<8x32xf32>
    tpu.vector_store %arg17[%c0_54, %c0_55], %99 {strides = array<i32>} : memref<8x32xf32, #tpu.memory_space<vmem>>, vector<8x32xf32>,
    %101 = vector.extract_strided_slice %12 {offsets = [0, 24], sizes = [8, 8], strides = [1, 1]} : vector<8x32xbf16> to vector<8x8xbf16>
    %102 = vector.extract_strided_slice %18 {offsets = [0, 24], sizes = [8, 8], strides = [1, 1]} : vector<8x32xbf16> to vector<8x8xbf16>
    %103 = vector.extract_strided_slice %24 {offsets = [0, 24], sizes = [8, 8], strides = [1, 1]} : vector<8x32xbf16> to vector<8x8xbf16>
    %cst_56 = arith.constant dense<0.000000e+00> : vector<8x8xf32>
    %104 = tpu.matmul %101, %102, %cst_56 {dimension_numbers = #tpu.dot_dimension_numbers<[1], [1], [0], [0], [0, 0, 1, 0], [], []>} : vector<8x8xbf16>, vector<8x8xbf16>, vector<8x8xf32> -> vector<8x8xf32>
    %cst_57 = arith.constant 0.353553385 : f32
    %105 = vector.broadcast %cst_57 : f32 to vector<8x8xf32>
    %106 = arith.mulf %104, %105 : vector<8x8xf32>
    %107 = arith.addf %106, %25 : vector<8x8xf32>
    %cst_58 = arith.constant dense<0xFF800000> : vector<8xf32>
    %108 = vector.multi_reduction <maximumf>, %107, %cst_58 [1] : vector<8x8xf32> to vector<8xf32>
    %109 = vector.shape_cast %108 : vector<8xf32> to vector<8x1xf32>
    %110 = vector.broadcast %109 : vector<8x1xf32> to vector<8x8xf32>
    %111 = arith.subf %107, %110 : vector<8x8xf32>
    %112 = math.exp %111 : vector<8x8xf32>
    %cst_59 = arith.constant dense<0.000000e+00> : vector<8xf32>
    %113 = vector.multi_reduction <add>, %112, %cst_59 [1] : vector<8x8xf32> to vector<8xf32>
    %114 = vector.shape_cast %113 : vector<8xf32> to vector<8x1xf32>
    %115 = tpu.reciprocal %114 {approx = true} : vector<8x1xf32> -> vector<8x1xf32>
    %116 = vector.broadcast %115 : vector<8x1xf32> to vector<8x8xf32>
    %117 = arith.mulf %112, %116 : vector<8x8xf32>
    %118 = arith.truncf %117 : vector<8x8xf32> to vector<8x8xbf16>
    %cst_60 = arith.constant dense<0.000000e+00> : vector<8x8xf32>
    %119 = tpu.matmul %118, %103, %cst_60 {dimension_numbers = #tpu.dot_dimension_numbers<[1], [0], [0], [1], [0, 0, 1, 1], [], []>} : vector<8x8xbf16>, vector<8x8xbf16>, vector<8x8xf32> -> vector<8x8xf32>
    %c0_61 = arith.constant 0 : index
    %c0_62 = arith.constant 0 : index
    %120 = vector.load %arg17[%c0_61, %c0_62] : memref<8x32xf32, #tpu.memory_space<vmem>>, vector<8x32xf32>
    %121 = arith.truncf %119 : vector<8x8xf32> to vector<8x8xbf16>
    %c24 = arith.constant 24 : index
    %c0_63 = arith.constant 0 : index
    %122 = vector.load %arg12[%c24, %c0_63] : memref<32x32xbf16, #tpu.memory_space<vmem>>, vector<8x32xbf16>
    %cst_64 = arith.constant dense<0.000000e+00> : vector<8x32xf32>
    %123 = tpu.matmul %121, %122, %cst_64 {dimension_numbers = #tpu.dot_dimension_numbers<[1], [0], [0], [1], [0, 0, 1, 1], [], []>} : vector<8x8xbf16>, vector<8x32xbf16>, vector<8x32xf32> -> vector<8x32xf32>
    %124 = arith.addf %120, %123 : vector<8x32xf32>
    %c0_65 = arith.constant 0 : index
    %c0_66 = arith.constant 0 : index
    %125 = vector.load %arg17[%c0_65, %c0_66] : memref<8x32xf32, #tpu.memory_space<vmem>>, vector<8x32xf32>
    tpu.vector_store %arg17[%c0_65, %c0_66], %124 {strides = array<i32>} : memref<8x32xf32, #tpu.memory_space<vmem>>, vector<8x32xf32>,
    %c0_i32_67 = arith.constant 0 : i32
    %126 = arith.cmpi eq, %arg2, %c0_i32_67 : i32
    %127 = arith.extui %126 : i1 to i32
    %c0_i32_68 = arith.constant 0 : i32
    %128 = arith.cmpi ne, %127, %c0_i32_68 : i32
    scf.if %128 {
      %c0_69 = arith.constant 0 : index
      %c0_70 = arith.constant 0 : index
      %129 = vector.load %arg17[%c0_69, %c0_70] : memref<8x32xf32, #tpu.memory_space<vmem>>, vector<8x32xf32>
      %cst_71 = arith.constant dense<0.000000e+00> : vector<8xf32>
      %130 = vector.multi_reduction <add>, %129, %cst_71 [1] : vector<8x32xf32> to vector<8xf32>
      %131 = vector.shape_cast %130 : vector<8xf32> to vector<8x1xf32>
      %cst_72 = arith.constant 3.200000e+01 : f32
      %132 = vector.broadcast %cst_72 : f32 to vector<8x1xf32>
      %133 = arith.divf %131, %132 : vector<8x1xf32>
      %134 = vector.broadcast %133 : vector<8x1xf32> to vector<8x32xf32>
      %135 = arith.subf %129, %134 : vector<8x32xf32>
      %136 = arith.mulf %135, %135 : vector<8x32xf32>
      %cst_73 = arith.constant dense<0.000000e+00> : vector<8xf32>
      %137 = vector.multi_reduction <add>, %136, %cst_73 [1] : vector<8x32xf32> to vector<8xf32>
      %138 = vector.shape_cast %137 : vector<8xf32> to vector<8x1xf32>
      %cst_74 = arith.constant 3.200000e+01 : f32
      %139 = vector.broadcast %cst_74 : f32 to vector<8x1xf32>
      %140 = arith.divf %138, %139 : vector<8x1xf32>
      %141 = vector.broadcast %133 : vector<8x1xf32> to vector<8x32xf32>
      %142 = arith.subf %129, %141 : vector<8x32xf32>
      %cst_75 = arith.constant 9.99999974E-6 : f32
      %143 = vector.broadcast %cst_75 : f32 to vector<8x1xf32>
      %144 = arith.addf %140, %143 : vector<8x1xf32>
      %145 = math.rsqrt %144 : vector<8x1xf32>
      %146 = vector.broadcast %145 : vector<8x1xf32> to vector<8x32xf32>
      %147 = arith.mulf %142, %146 : vector<8x32xf32>
      %c0_76 = arith.constant 0 : index
      %c0_77 = arith.constant 0 : index
      %148 = vector.load %arg14[%c0_76, %c0_77] : memref<1x32xf32, #tpu.memory_space<vmem>>, vector<1x32xf32>
      %149 = vector.broadcast %148 : vector<1x32xf32> to vector<8x32xf32>
      %150 = arith.mulf %147, %149 : vector<8x32xf32>
      %c0_78 = arith.constant 0 : index
      %c0_79 = arith.constant 0 : index
      %151 = vector.load %arg15[%c0_78, %c0_79] : memref<1x32xf32, #tpu.memory_space<vmem>>, vector<1x32xf32>
      %152 = vector.broadcast %151 : vector<1x32xf32> to vector<8x32xf32>
      %153 = arith.addf %150, %152 : vector<8x32xf32>
      %154 = arith.truncf %153 : vector<8x32xf32> to vector<8x32xbf16>
      %c0_80 = arith.constant 0 : index
      %c0_81 = arith.constant 0 : index
      %c0_82 = arith.constant 0 : index
      %155 = vector.load %arg16[%c0_80, %c0_81, %c0_82] : memref<1x8x32xbf16, #tpu.memory_space<vmem>>, vector<1x8x32xbf16>
      %156 = vector.shape_cast %155 : vector<1x8x32xbf16> to vector<8x32xbf16>
      %157 = vector.shape_cast %154 : vector<8x32xbf16> to vector<1x8x32xbf16>
      tpu.vector_store %arg16[%c0_80, %c0_81, %c0_82], %157 {strides = array<i32>} : memref<1x8x32xbf16, #tpu.memory_space<vmem>>, vector<1x8x32xbf16>,
    } else {
    }
    return
  }
  func.func @transform_0(%arg0: i32, %arg1: i32, %arg2: i32) -> (i32, i32, i32) {
    %c0_i32 = arith.constant 0 : i32
    %c0_i32_0 = arith.constant 0 : i32
    return %arg0, %arg1, %c0_i32 : i32, i32, i32
  }
  func.func @transform_1(%arg0: i32, %arg1: i32, %arg2: i32) -> (i32, i32, i32) {
    %c0_i32 = arith.constant 0 : i32
    %c0_i32_0 = arith.constant 0 : i32
    %c0_i32_1 = arith.constant 0 : i32
    return %arg0, %c0_i32, %c0_i32_0 : i32, i32, i32
  }
  func.func @transform_2(%arg0: i32, %arg1: i32, %arg2: i32) -> (i32, i32) {
    %c0_i32 = arith.constant 0 : i32
    %c0_i32_0 = arith.constant 0 : i32
    return %arg1, %c0_i32 : i32, i32
  }
  func.func @transform_3(%arg0: i32, %arg1: i32, %arg2: i32) -> (i32, i32) {
    %c0_i32 = arith.constant 0 : i32
    %c0_i32_0 = arith.constant 0 : i32
    return %c0_i32, %arg2 : i32, i32
  }
  func.func @transform_4(%arg0: i32, %arg1: i32, %arg2: i32) -> (i32, i32) {
    %c0_i32 = arith.constant 0 : i32
    %c0_i32_0 = arith.constant 0 : i32
    return %c0_i32, %arg2 : i32, i32
  }
  func.func @transform_5(%arg0: i32, %arg1: i32, %arg2: i32) -> (i32, i32) {
    %c0_i32 = arith.constant 0 : i32
    %c0_i32_0 = arith.constant 0 : i32
    return %c0_i32, %arg2 : i32, i32
  }
  func.func @transform_6(%arg0: i32, %arg1: i32, %arg2: i32) -> (i32, i32) {
    %c0_i32 = arith.constant 0 : i32
    %c0_i32_0 = arith.constant 0 : i32
    return %c0_i32, %arg2 : i32, i32
  }
  func.func @transform_7(%arg0: i32, %arg1: i32, %arg2: i32) -> (i32, i32) {
    %c0_i32 = arith.constant 0 : i32
    %c0_i32_0 = arith.constant 0 : i32
    return %c0_i32, %arg2 : i32, i32
  }
  func.func @transform_8(%arg0: i32, %arg1: i32, %arg2: i32) -> (i32, i32) {
    %c0_i32 = arith.constant 0 : i32
    %c0_i32_0 = arith.constant 0 : i32
    return %c0_i32, %arg2 : i32, i32
  }
  func.func @transform_9(%arg0: i32, %arg1: i32, %arg2: i32) -> (i32, i32) {
    %c0_i32 = arith.constant 0 : i32
    %c0_i32_0 = arith.constant 0 : i32
    return %arg2, %c0_i32 : i32, i32
  }
  func.func @transform_10(%arg0: i32, %arg1: i32, %arg2: i32) -> (i32, i32) {
    %c0_i32 = arith.constant 0 : i32
    %c0_i32_0 = arith.constant 0 : i32
    %c0_i32_1 = arith.constant 0 : i32
    return %c0_i32, %c0_i32_0 : i32, i32
  }
  func.func @transform_11(%arg0: i32, %arg1: i32, %arg2: i32) -> (i32, i32) {
    %c0_i32 = arith.constant 0 : i32
    %c0_i32_0 = arith.constant 0 : i32
    %c0_i32_1 = arith.constant 0 : i32
    return %c0_i32, %c0_i32_0 : i32, i32
  }
  func.func @transform_12(%arg0: i32, %arg1: i32, %arg2: i32) -> (i32, i32) {
    %c0_i32 = arith.constant 0 : i32
    %c0_i32_0 = arith.constant 0 : i32
    %c0_i32_1 = arith.constant 0 : i32
    return %c0_i32, %c0_i32_0 : i32, i32
  }
  func.func @transform_13(%arg0: i32, %arg1: i32, %arg2: i32) -> (i32, i32, i32) {
    %c0_i32 = arith.constant 0 : i32
    %c0_i32_0 = arith.constant 0 : i32
    return %arg0, %arg1, %c0_i32 : i32, i32, i32
  }
}

module attributes {stable_mosaic.version = 11 : i64} {
  func.func @_ffn_ln_kernel(%arg0: i32, %arg1: i32, %arg2: memref<8x32xbf16, #tpu.memory_space<vmem>>, %arg3: memref<32x128xbf16, #tpu.memory_space<vmem>>, %arg4: memref<1x128xf32, #tpu.memory_space<vmem>>, %arg5: memref<128x32xbf16, #tpu.memory_space<vmem>>, %arg6: memref<1x32xf32, #tpu.memory_space<vmem>>, %arg7: memref<1x32xf32, #tpu.memory_space<vmem>>, %arg8: memref<1x32xf32, #tpu.memory_space<vmem>>, %arg9: memref<8x32xbf16, #tpu.memory_space<vmem>>, %arg10: memref<8x32xf32, #tpu.memory_space<vmem>>) attributes {dimension_semantics = [#tpu.dimension_semantics<parallel>, #tpu.dimension_semantics<arbitrary>], iteration_bounds = array<i64: 2, 1>, scalar_prefetch = 0 : i64, scratch_operands = 1 : i64, tpu.core_type = #tpu.core_type<tc>, window_params = [{transform_indices = @transform_0, window_bounds = array<i64: 8, 32>}, {transform_indices = @transform_1, window_bounds = array<i64: 32, 128>}, {transform_indices = @transform_2, window_bounds = array<i64: 1, 128>}, {transform_indices = @transform_3, window_bounds = array<i64: 128, 32>}, {pipeline_mode = #tpu.pipeline_mode<synchronous>, transform_indices = @transform_4, window_bounds = array<i64: 1, 32>}, {pipeline_mode = #tpu.pipeline_mode<synchronous>, transform_indices = @transform_5, window_bounds = array<i64: 1, 32>}, {pipeline_mode = #tpu.pipeline_mode<synchronous>, transform_indices = @transform_6, window_bounds = array<i64: 1, 32>}, {transform_indices = @transform_7, window_bounds = array<i64: 8, 32>}]} {
    %c0 = arith.constant 0 : index
    %c0_0 = arith.constant 0 : index
    %0 = vector.load %arg2[%c0, %c0_0] : memref<8x32xbf16, #tpu.memory_space<vmem>>, vector<8x32xbf16>
    %c0_i32 = arith.constant 0 : i32
    %1 = arith.cmpi eq, %arg1, %c0_i32 : i32
    %2 = arith.extui %1 : i1 to i32
    %c0_i32_1 = arith.constant 0 : i32
    %3 = arith.cmpi ne, %2, %c0_i32_1 : i32
    scf.if %3 {
      %20 = arith.extf %0 : vector<8x32xbf16> to vector<8x32xf32>
      %c0_16 = arith.constant 0 : index
      %c0_17 = arith.constant 0 : index
      %21 = vector.load %arg6[%c0_16, %c0_17] : memref<1x32xf32, #tpu.memory_space<vmem>>, vector<1x32xf32>
      %22 = vector.broadcast %21 : vector<1x32xf32> to vector<8x32xf32>
      %23 = arith.addf %20, %22 : vector<8x32xf32>
      %c0_18 = arith.constant 0 : index
      %c0_19 = arith.constant 0 : index
      %24 = vector.load %arg10[%c0_18, %c0_19] : memref<8x32xf32, #tpu.memory_space<vmem>>, vector<8x32xf32>
      tpu.vector_store %arg10[%c0_18, %c0_19], %23 {strides = array<i32>} : memref<8x32xf32, #tpu.memory_space<vmem>>, vector<8x32xf32>,
    } else {
    }
    %c0_2 = arith.constant 0 : index
    %c0_3 = arith.constant 0 : index
    %4 = vector.load %arg3[%c0_2, %c0_3] : memref<32x128xbf16, #tpu.memory_space<vmem>>, vector<32x128xbf16>
    %cst = arith.constant dense<0.000000e+00> : vector<8x128xf32>
    %5 = tpu.matmul %0, %4, %cst {dimension_numbers = #tpu.dot_dimension_numbers<[1], [0], [0], [1], [0, 0, 1, 1], [], []>} : vector<8x32xbf16>, vector<32x128xbf16>, vector<8x128xf32> -> vector<8x128xf32>
    %c0_4 = arith.constant 0 : index
    %c0_5 = arith.constant 0 : index
    %6 = vector.load %arg4[%c0_4, %c0_5] : memref<1x128xf32, #tpu.memory_space<vmem>>, vector<1x128xf32>
    %7 = vector.broadcast %6 : vector<1x128xf32> to vector<8x128xf32>
    %8 = arith.addf %5, %7 : vector<8x128xf32>
    %cst_6 = arith.constant 0.000000e+00 : f32
    %9 = vector.broadcast %cst_6 : f32 to vector<8x128xf32>
    %10 = arith.maximumf %8, %9 : vector<8x128xf32>
    %11 = arith.truncf %10 : vector<8x128xf32> to vector<8x128xbf16>
    %c0_7 = arith.constant 0 : index
    %c0_8 = arith.constant 0 : index
    %12 = vector.load %arg10[%c0_7, %c0_8] : memref<8x32xf32, #tpu.memory_space<vmem>>, vector<8x32xf32>
    %c0_9 = arith.constant 0 : index
    %c0_10 = arith.constant 0 : index
    %13 = vector.load %arg5[%c0_9, %c0_10] : memref<128x32xbf16, #tpu.memory_space<vmem>>, vector<128x32xbf16>
    %cst_11 = arith.constant dense<0.000000e+00> : vector<8x32xf32>
    %14 = tpu.matmul %11, %13, %cst_11 {dimension_numbers = #tpu.dot_dimension_numbers<[1], [0], [0], [1], [0, 0, 1, 1], [], []>} : vector<8x128xbf16>, vector<128x32xbf16>, vector<8x32xf32> -> vector<8x32xf32>
    %15 = arith.addf %12, %14 : vector<8x32xf32>
    %c0_12 = arith.constant 0 : index
    %c0_13 = arith.constant 0 : index
    %16 = vector.load %arg10[%c0_12, %c0_13] : memref<8x32xf32, #tpu.memory_space<vmem>>, vector<8x32xf32>
    tpu.vector_store %arg10[%c0_12, %c0_13], %15 {strides = array<i32>} : memref<8x32xf32, #tpu.memory_space<vmem>>, vector<8x32xf32>,
    %c0_i32_14 = arith.constant 0 : i32
    %17 = arith.cmpi eq, %arg1, %c0_i32_14 : i32
    %18 = arith.extui %17 : i1 to i32
    %c0_i32_15 = arith.constant 0 : i32
    %19 = arith.cmpi ne, %18, %c0_i32_15 : i32
    scf.if %19 {
      %c0_16 = arith.constant 0 : index
      %c0_17 = arith.constant 0 : index
      %20 = vector.load %arg10[%c0_16, %c0_17] : memref<8x32xf32, #tpu.memory_space<vmem>>, vector<8x32xf32>
      %cst_18 = arith.constant dense<0.000000e+00> : vector<8xf32>
      %21 = vector.multi_reduction <add>, %20, %cst_18 [1] : vector<8x32xf32> to vector<8xf32>
      %22 = vector.shape_cast %21 : vector<8xf32> to vector<8x1xf32>
      %cst_19 = arith.constant 3.200000e+01 : f32
      %23 = vector.broadcast %cst_19 : f32 to vector<8x1xf32>
      %24 = arith.divf %22, %23 : vector<8x1xf32>
      %25 = vector.broadcast %24 : vector<8x1xf32> to vector<8x32xf32>
      %26 = arith.subf %20, %25 : vector<8x32xf32>
      %27 = arith.mulf %26, %26 : vector<8x32xf32>
      %cst_20 = arith.constant dense<0.000000e+00> : vector<8xf32>
      %28 = vector.multi_reduction <add>, %27, %cst_20 [1] : vector<8x32xf32> to vector<8xf32>
      %29 = vector.shape_cast %28 : vector<8xf32> to vector<8x1xf32>
      %cst_21 = arith.constant 3.200000e+01 : f32
      %30 = vector.broadcast %cst_21 : f32 to vector<8x1xf32>
      %31 = arith.divf %29, %30 : vector<8x1xf32>
      %32 = vector.broadcast %24 : vector<8x1xf32> to vector<8x32xf32>
      %33 = arith.subf %20, %32 : vector<8x32xf32>
      %cst_22 = arith.constant 9.99999974E-6 : f32
      %34 = vector.broadcast %cst_22 : f32 to vector<8x1xf32>
      %35 = arith.addf %31, %34 : vector<8x1xf32>
      %36 = math.rsqrt %35 : vector<8x1xf32>
      %37 = vector.broadcast %36 : vector<8x1xf32> to vector<8x32xf32>
      %38 = arith.mulf %33, %37 : vector<8x32xf32>
      %c0_23 = arith.constant 0 : index
      %c0_24 = arith.constant 0 : index
      %39 = vector.load %arg7[%c0_23, %c0_24] : memref<1x32xf32, #tpu.memory_space<vmem>>, vector<1x32xf32>
      %40 = vector.broadcast %39 : vector<1x32xf32> to vector<8x32xf32>
      %41 = arith.mulf %38, %40 : vector<8x32xf32>
      %c0_25 = arith.constant 0 : index
      %c0_26 = arith.constant 0 : index
      %42 = vector.load %arg8[%c0_25, %c0_26] : memref<1x32xf32, #tpu.memory_space<vmem>>, vector<1x32xf32>
      %43 = vector.broadcast %42 : vector<1x32xf32> to vector<8x32xf32>
      %44 = arith.addf %41, %43 : vector<8x32xf32>
      %45 = arith.truncf %44 : vector<8x32xf32> to vector<8x32xbf16>
      %c0_27 = arith.constant 0 : index
      %c0_28 = arith.constant 0 : index
      %46 = vector.load %arg9[%c0_27, %c0_28] : memref<8x32xbf16, #tpu.memory_space<vmem>>, vector<8x32xbf16>
      tpu.vector_store %arg9[%c0_27, %c0_28], %45 {strides = array<i32>} : memref<8x32xbf16, #tpu.memory_space<vmem>>, vector<8x32xbf16>,
    } else {
    }
    return
  }
  func.func @transform_0(%arg0: i32, %arg1: i32) -> (i32, i32) {
    %c0_i32 = arith.constant 0 : i32
    %c0_i32_0 = arith.constant 0 : i32
    return %arg0, %c0_i32 : i32, i32
  }
  func.func @transform_1(%arg0: i32, %arg1: i32) -> (i32, i32) {
    %c0_i32 = arith.constant 0 : i32
    %c0_i32_0 = arith.constant 0 : i32
    return %c0_i32, %arg1 : i32, i32
  }
  func.func @transform_2(%arg0: i32, %arg1: i32) -> (i32, i32) {
    %c0_i32 = arith.constant 0 : i32
    %c0_i32_0 = arith.constant 0 : i32
    return %c0_i32, %arg1 : i32, i32
  }
  func.func @transform_3(%arg0: i32, %arg1: i32) -> (i32, i32) {
    %c0_i32 = arith.constant 0 : i32
    %c0_i32_0 = arith.constant 0 : i32
    return %arg1, %c0_i32 : i32, i32
  }
  func.func @transform_4(%arg0: i32, %arg1: i32) -> (i32, i32) {
    %c0_i32 = arith.constant 0 : i32
    %c0_i32_0 = arith.constant 0 : i32
    %c0_i32_1 = arith.constant 0 : i32
    return %c0_i32, %c0_i32_0 : i32, i32
  }
  func.func @transform_5(%arg0: i32, %arg1: i32) -> (i32, i32) {
    %c0_i32 = arith.constant 0 : i32
    %c0_i32_0 = arith.constant 0 : i32
    %c0_i32_1 = arith.constant 0 : i32
    return %c0_i32, %c0_i32_0 : i32, i32
  }
  func.func @transform_6(%arg0: i32, %arg1: i32) -> (i32, i32) {
    %c0_i32 = arith.constant 0 : i32
    %c0_i32_0 = arith.constant 0 : i32
    %c0_i32_1 = arith.constant 0 : i32
    return %c0_i32, %c0_i32_0 : i32, i32
  }
  func.func @transform_7(%arg0: i32, %arg1: i32) -> (i32, i32) {
    %c0_i32 = arith.constant 0 : i32
    %c0_i32_0 = arith.constant 0 : i32
    return %arg0, %c0_i32 : i32, i32
  }
}

module attributes {stable_mosaic.version = 11 : i64} {
  func.func @_attn_sublayer_kernel(%arg0: i32, %arg1: i32, %arg2: i32, %arg3: memref<1x8x32xbf16, #tpu.memory_space<vmem>>, %arg4: memref<1x8x32xbf16, #tpu.memory_space<vmem>>, %arg5: memref<32x32xbf16, #tpu.memory_space<vmem>>, %arg6: memref<1x32xf32, #tpu.memory_space<vmem>>, %arg7: memref<32x32xbf16, #tpu.memory_space<vmem>>, %arg8: memref<1x32xf32, #tpu.memory_space<vmem>>, %arg9: memref<32x32xbf16, #tpu.memory_space<vmem>>, %arg10: memref<1x32xf32, #tpu.memory_space<vmem>>, %arg11: memref<32x32xbf16, #tpu.memory_space<vmem>>, %arg12: memref<1x32xf32, #tpu.memory_space<vmem>>, %arg13: memref<1x32xf32, #tpu.memory_space<vmem>>, %arg14: memref<1x32xf32, #tpu.memory_space<vmem>>, %arg15: memref<1x8x32xbf16, #tpu.memory_space<vmem>>, %arg16: memref<8x32xf32, #tpu.memory_space<vmem>>) attributes {dimension_semantics = [#tpu.dimension_semantics<parallel>, #tpu.dimension_semantics<parallel>, #tpu.dimension_semantics<arbitrary>], iteration_bounds = array<i64: 2, 1, 1>, scalar_prefetch = 0 : i64, scratch_operands = 1 : i64, tpu.core_type = #tpu.core_type<tc>, window_params = [{transform_indices = @transform_0, window_bounds = array<i64: 1, 8, 32>}, {transform_indices = @transform_1, window_bounds = array<i64: 1, 8, 32>}, {transform_indices = @transform_2, window_bounds = array<i64: 32, 32>}, {transform_indices = @transform_3, window_bounds = array<i64: 1, 32>}, {transform_indices = @transform_4, window_bounds = array<i64: 32, 32>}, {transform_indices = @transform_5, window_bounds = array<i64: 1, 32>}, {transform_indices = @transform_6, window_bounds = array<i64: 32, 32>}, {transform_indices = @transform_7, window_bounds = array<i64: 1, 32>}, {transform_indices = @transform_8, window_bounds = array<i64: 32, 32>}, {pipeline_mode = #tpu.pipeline_mode<synchronous>, transform_indices = @transform_9, window_bounds = array<i64: 1, 32>}, {pipeline_mode = #tpu.pipeline_mode<synchronous>, transform_indices = @transform_10, window_bounds = array<i64: 1, 32>}, {pipeline_mode = #tpu.pipeline_mode<synchronous>, transform_indices = @transform_11, window_bounds = array<i64: 1, 32>}, {transform_indices = @transform_12, window_bounds = array<i64: 1, 8, 32>}]} {
    %c0 = arith.constant 0 : index
    %c0_0 = arith.constant 0 : index
    %c0_1 = arith.constant 0 : index
    %0 = vector.load %arg3[%c0, %c0_0, %c0_1] : memref<1x8x32xbf16, #tpu.memory_space<vmem>>, vector<1x8x32xbf16>
    %1 = vector.shape_cast %0 : vector<1x8x32xbf16> to vector<8x32xbf16>
    %c0_2 = arith.constant 0 : index
    %c0_3 = arith.constant 0 : index
    %c0_4 = arith.constant 0 : index
    %2 = vector.load %arg4[%c0_2, %c0_3, %c0_4] : memref<1x8x32xbf16, #tpu.memory_space<vmem>>, vector<1x8x32xbf16>
    %3 = vector.shape_cast %2 : vector<1x8x32xbf16> to vector<8x32xbf16>
    %c0_i32 = arith.constant 0 : i32
    %4 = arith.cmpi eq, %arg2, %c0_i32 : i32
    %5 = arith.extui %4 : i1 to i32
    %c0_i32_5 = arith.constant 0 : i32
    %6 = arith.cmpi ne, %5, %c0_i32_5 : i32
    scf.if %6 {
      %124 = arith.extf %1 : vector<8x32xbf16> to vector<8x32xf32>
      %c0_67 = arith.constant 0 : index
      %c0_68 = arith.constant 0 : index
      %125 = vector.load %arg12[%c0_67, %c0_68] : memref<1x32xf32, #tpu.memory_space<vmem>>, vector<1x32xf32>
      %126 = vector.broadcast %125 : vector<1x32xf32> to vector<8x32xf32>
      %127 = arith.addf %124, %126 : vector<8x32xf32>
      %c0_69 = arith.constant 0 : index
      %c0_70 = arith.constant 0 : index
      %128 = vector.load %arg16[%c0_69, %c0_70] : memref<8x32xf32, #tpu.memory_space<vmem>>, vector<8x32xf32>
      tpu.vector_store %arg16[%c0_69, %c0_70], %127 {strides = array<i32>} : memref<8x32xf32, #tpu.memory_space<vmem>>, vector<8x32xf32>,
    } else {
    }
    %c0_6 = arith.constant 0 : index
    %c0_7 = arith.constant 0 : index
    %7 = vector.load %arg5[%c0_6, %c0_7] : memref<32x32xbf16, #tpu.memory_space<vmem>>, vector<32x32xbf16>
    %cst = arith.constant dense<0.000000e+00> : vector<8x32xf32>
    %8 = tpu.matmul %1, %7, %cst {dimension_numbers = #tpu.dot_dimension_numbers<[1], [0], [0], [1], [0, 0, 1, 1], [], []>} : vector<8x32xbf16>, vector<32x32xbf16>, vector<8x32xf32> -> vector<8x32xf32>
    %c0_8 = arith.constant 0 : index
    %c0_9 = arith.constant 0 : index
    %9 = vector.load %arg6[%c0_8, %c0_9] : memref<1x32xf32, #tpu.memory_space<vmem>>, vector<1x32xf32>
    %10 = vector.broadcast %9 : vector<1x32xf32> to vector<8x32xf32>
    %11 = arith.addf %8, %10 : vector<8x32xf32>
    %12 = arith.truncf %11 : vector<8x32xf32> to vector<8x32xbf16>
    %c0_10 = arith.constant 0 : index
    %c0_11 = arith.constant 0 : index
    %13 = vector.load %arg7[%c0_10, %c0_11] : memref<32x32xbf16, #tpu.memory_space<vmem>>, vector<32x32xbf16>
    %cst_12 = arith.constant dense<0.000000e+00> : vector<8x32xf32>
    %14 = tpu.matmul %3, %13, %cst_12 {dimension_numbers = #tpu.dot_dimension_numbers<[1], [0], [0], [1], [0, 0, 1, 1], [], []>} : vector<8x32xbf16>, vector<32x32xbf16>, vector<8x32xf32> -> vector<8x32xf32>
    %c0_13 = arith.constant 0 : index
    %c0_14 = arith.constant 0 : index
    %15 = vector.load %arg8[%c0_13, %c0_14] : memref<1x32xf32, #tpu.memory_space<vmem>>, vector<1x32xf32>
    %16 = vector.broadcast %15 : vector<1x32xf32> to vector<8x32xf32>
    %17 = arith.addf %14, %16 : vector<8x32xf32>
    %18 = arith.truncf %17 : vector<8x32xf32> to vector<8x32xbf16>
    %c0_15 = arith.constant 0 : index
    %c0_16 = arith.constant 0 : index
    %19 = vector.load %arg9[%c0_15, %c0_16] : memref<32x32xbf16, #tpu.memory_space<vmem>>, vector<32x32xbf16>
    %cst_17 = arith.constant dense<0.000000e+00> : vector<8x32xf32>
    %20 = tpu.matmul %3, %19, %cst_17 {dimension_numbers = #tpu.dot_dimension_numbers<[1], [0], [0], [1], [0, 0, 1, 1], [], []>} : vector<8x32xbf16>, vector<32x32xbf16>, vector<8x32xf32> -> vector<8x32xf32>
    %c0_18 = arith.constant 0 : index
    %c0_19 = arith.constant 0 : index
    %21 = vector.load %arg10[%c0_18, %c0_19] : memref<1x32xf32, #tpu.memory_space<vmem>>, vector<1x32xf32>
    %22 = vector.broadcast %21 : vector<1x32xf32> to vector<8x32xf32>
    %23 = arith.addf %20, %22 : vector<8x32xf32>
    %24 = arith.truncf %23 : vector<8x32xf32> to vector<8x32xbf16>
    %25 = vector.extract_strided_slice %12 {offsets = [0, 0], sizes = [8, 8], strides = [1, 1]} : vector<8x32xbf16> to vector<8x8xbf16>
    %26 = vector.extract_strided_slice %18 {offsets = [0, 0], sizes = [8, 8], strides = [1, 1]} : vector<8x32xbf16> to vector<8x8xbf16>
    %27 = vector.extract_strided_slice %24 {offsets = [0, 0], sizes = [8, 8], strides = [1, 1]} : vector<8x32xbf16> to vector<8x8xbf16>
    %cst_20 = arith.constant dense<0.000000e+00> : vector<8x8xf32>
    %28 = tpu.matmul %25, %26, %cst_20 {dimension_numbers = #tpu.dot_dimension_numbers<[1], [1], [0], [0], [0, 0, 1, 0], [], []>} : vector<8x8xbf16>, vector<8x8xbf16>, vector<8x8xf32> -> vector<8x8xf32>
    %cst_21 = arith.constant 0.353553385 : f32
    %29 = vector.broadcast %cst_21 : f32 to vector<8x8xf32>
    %30 = arith.mulf %28, %29 : vector<8x8xf32>
    %cst_22 = arith.constant dense<0xFF800000> : vector<8xf32>
    %31 = vector.multi_reduction <maximumf>, %30, %cst_22 [1] : vector<8x8xf32> to vector<8xf32>
    %32 = vector.shape_cast %31 : vector<8xf32> to vector<8x1xf32>
    %33 = vector.broadcast %32 : vector<8x1xf32> to vector<8x8xf32>
    %34 = arith.subf %30, %33 : vector<8x8xf32>
    %35 = math.exp %34 : vector<8x8xf32>
    %cst_23 = arith.constant dense<0.000000e+00> : vector<8xf32>
    %36 = vector.multi_reduction <add>, %35, %cst_23 [1] : vector<8x8xf32> to vector<8xf32>
    %37 = vector.shape_cast %36 : vector<8xf32> to vector<8x1xf32>
    %38 = tpu.reciprocal %37 {approx = true} : vector<8x1xf32> -> vector<8x1xf32>
    %39 = vector.broadcast %38 : vector<8x1xf32> to vector<8x8xf32>
    %40 = arith.mulf %35, %39 : vector<8x8xf32>
    %41 = arith.truncf %40 : vector<8x8xf32> to vector<8x8xbf16>
    %cst_24 = arith.constant dense<0.000000e+00> : vector<8x8xf32>
    %42 = tpu.matmul %41, %27, %cst_24 {dimension_numbers = #tpu.dot_dimension_numbers<[1], [0], [0], [1], [0, 0, 1, 1], [], []>} : vector<8x8xbf16>, vector<8x8xbf16>, vector<8x8xf32> -> vector<8x8xf32>
    %c0_25 = arith.constant 0 : index
    %c0_26 = arith.constant 0 : index
    %43 = vector.load %arg16[%c0_25, %c0_26] : memref<8x32xf32, #tpu.memory_space<vmem>>, vector<8x32xf32>
    %44 = arith.truncf %42 : vector<8x8xf32> to vector<8x8xbf16>
    %c0_27 = arith.constant 0 : index
    %c0_28 = arith.constant 0 : index
    %45 = vector.load %arg11[%c0_27, %c0_28] : memref<32x32xbf16, #tpu.memory_space<vmem>>, vector<8x32xbf16>
    %cst_29 = arith.constant dense<0.000000e+00> : vector<8x32xf32>
    %46 = tpu.matmul %44, %45, %cst_29 {dimension_numbers = #tpu.dot_dimension_numbers<[1], [0], [0], [1], [0, 0, 1, 1], [], []>} : vector<8x8xbf16>, vector<8x32xbf16>, vector<8x32xf32> -> vector<8x32xf32>
    %47 = arith.addf %43, %46 : vector<8x32xf32>
    %c0_30 = arith.constant 0 : index
    %c0_31 = arith.constant 0 : index
    %48 = vector.load %arg16[%c0_30, %c0_31] : memref<8x32xf32, #tpu.memory_space<vmem>>, vector<8x32xf32>
    tpu.vector_store %arg16[%c0_30, %c0_31], %47 {strides = array<i32>} : memref<8x32xf32, #tpu.memory_space<vmem>>, vector<8x32xf32>,
    %49 = vector.extract_strided_slice %12 {offsets = [0, 8], sizes = [8, 8], strides = [1, 1]} : vector<8x32xbf16> to vector<8x8xbf16>
    %50 = vector.extract_strided_slice %18 {offsets = [0, 8], sizes = [8, 8], strides = [1, 1]} : vector<8x32xbf16> to vector<8x8xbf16>
    %51 = vector.extract_strided_slice %24 {offsets = [0, 8], sizes = [8, 8], strides = [1, 1]} : vector<8x32xbf16> to vector<8x8xbf16>
    %cst_32 = arith.constant dense<0.000000e+00> : vector<8x8xf32>
    %52 = tpu.matmul %49, %50, %cst_32 {dimension_numbers = #tpu.dot_dimension_numbers<[1], [1], [0], [0], [0, 0, 1, 0], [], []>} : vector<8x8xbf16>, vector<8x8xbf16>, vector<8x8xf32> -> vector<8x8xf32>
    %cst_33 = arith.constant 0.353553385 : f32
    %53 = vector.broadcast %cst_33 : f32 to vector<8x8xf32>
    %54 = arith.mulf %52, %53 : vector<8x8xf32>
    %cst_34 = arith.constant dense<0xFF800000> : vector<8xf32>
    %55 = vector.multi_reduction <maximumf>, %54, %cst_34 [1] : vector<8x8xf32> to vector<8xf32>
    %56 = vector.shape_cast %55 : vector<8xf32> to vector<8x1xf32>
    %57 = vector.broadcast %56 : vector<8x1xf32> to vector<8x8xf32>
    %58 = arith.subf %54, %57 : vector<8x8xf32>
    %59 = math.exp %58 : vector<8x8xf32>
    %cst_35 = arith.constant dense<0.000000e+00> : vector<8xf32>
    %60 = vector.multi_reduction <add>, %59, %cst_35 [1] : vector<8x8xf32> to vector<8xf32>
    %61 = vector.shape_cast %60 : vector<8xf32> to vector<8x1xf32>
    %62 = tpu.reciprocal %61 {approx = true} : vector<8x1xf32> -> vector<8x1xf32>
    %63 = vector.broadcast %62 : vector<8x1xf32> to vector<8x8xf32>
    %64 = arith.mulf %59, %63 : vector<8x8xf32>
    %65 = arith.truncf %64 : vector<8x8xf32> to vector<8x8xbf16>
    %cst_36 = arith.constant dense<0.000000e+00> : vector<8x8xf32>
    %66 = tpu.matmul %65, %51, %cst_36 {dimension_numbers = #tpu.dot_dimension_numbers<[1], [0], [0], [1], [0, 0, 1, 1], [], []>} : vector<8x8xbf16>, vector<8x8xbf16>, vector<8x8xf32> -> vector<8x8xf32>
    %c0_37 = arith.constant 0 : index
    %c0_38 = arith.constant 0 : index
    %67 = vector.load %arg16[%c0_37, %c0_38] : memref<8x32xf32, #tpu.memory_space<vmem>>, vector<8x32xf32>
    %68 = arith.truncf %66 : vector<8x8xf32> to vector<8x8xbf16>
    %c8 = arith.constant 8 : index
    %c0_39 = arith.constant 0 : index
    %69 = vector.load %arg11[%c8, %c0_39] : memref<32x32xbf16, #tpu.memory_space<vmem>>, vector<8x32xbf16>
    %cst_40 = arith.constant dense<0.000000e+00> : vector<8x32xf32>
    %70 = tpu.matmul %68, %69, %cst_40 {dimension_numbers = #tpu.dot_dimension_numbers<[1], [0], [0], [1], [0, 0, 1, 1], [], []>} : vector<8x8xbf16>, vector<8x32xbf16>, vector<8x32xf32> -> vector<8x32xf32>
    %71 = arith.addf %67, %70 : vector<8x32xf32>
    %c0_41 = arith.constant 0 : index
    %c0_42 = arith.constant 0 : index
    %72 = vector.load %arg16[%c0_41, %c0_42] : memref<8x32xf32, #tpu.memory_space<vmem>>, vector<8x32xf32>
    tpu.vector_store %arg16[%c0_41, %c0_42], %71 {strides = array<i32>} : memref<8x32xf32, #tpu.memory_space<vmem>>, vector<8x32xf32>,
    %73 = vector.extract_strided_slice %12 {offsets = [0, 16], sizes = [8, 8], strides = [1, 1]} : vector<8x32xbf16> to vector<8x8xbf16>
    %74 = vector.extract_strided_slice %18 {offsets = [0, 16], sizes = [8, 8], strides = [1, 1]} : vector<8x32xbf16> to vector<8x8xbf16>
    %75 = vector.extract_strided_slice %24 {offsets = [0, 16], sizes = [8, 8], strides = [1, 1]} : vector<8x32xbf16> to vector<8x8xbf16>
    %cst_43 = arith.constant dense<0.000000e+00> : vector<8x8xf32>
    %76 = tpu.matmul %73, %74, %cst_43 {dimension_numbers = #tpu.dot_dimension_numbers<[1], [1], [0], [0], [0, 0, 1, 0], [], []>} : vector<8x8xbf16>, vector<8x8xbf16>, vector<8x8xf32> -> vector<8x8xf32>
    %cst_44 = arith.constant 0.353553385 : f32
    %77 = vector.broadcast %cst_44 : f32 to vector<8x8xf32>
    %78 = arith.mulf %76, %77 : vector<8x8xf32>
    %cst_45 = arith.constant dense<0xFF800000> : vector<8xf32>
    %79 = vector.multi_reduction <maximumf>, %78, %cst_45 [1] : vector<8x8xf32> to vector<8xf32>
    %80 = vector.shape_cast %79 : vector<8xf32> to vector<8x1xf32>
    %81 = vector.broadcast %80 : vector<8x1xf32> to vector<8x8xf32>
    %82 = arith.subf %78, %81 : vector<8x8xf32>
    %83 = math.exp %82 : vector<8x8xf32>
    %cst_46 = arith.constant dense<0.000000e+00> : vector<8xf32>
    %84 = vector.multi_reduction <add>, %83, %cst_46 [1] : vector<8x8xf32> to vector<8xf32>
    %85 = vector.shape_cast %84 : vector<8xf32> to vector<8x1xf32>
    %86 = tpu.reciprocal %85 {approx = true} : vector<8x1xf32> -> vector<8x1xf32>
    %87 = vector.broadcast %86 : vector<8x1xf32> to vector<8x8xf32>
    %88 = arith.mulf %83, %87 : vector<8x8xf32>
    %89 = arith.truncf %88 : vector<8x8xf32> to vector<8x8xbf16>
    %cst_47 = arith.constant dense<0.000000e+00> : vector<8x8xf32>
    %90 = tpu.matmul %89, %75, %cst_47 {dimension_numbers = #tpu.dot_dimension_numbers<[1], [0], [0], [1], [0, 0, 1, 1], [], []>} : vector<8x8xbf16>, vector<8x8xbf16>, vector<8x8xf32> -> vector<8x8xf32>
    %c0_48 = arith.constant 0 : index
    %c0_49 = arith.constant 0 : index
    %91 = vector.load %arg16[%c0_48, %c0_49] : memref<8x32xf32, #tpu.memory_space<vmem>>, vector<8x32xf32>
    %92 = arith.truncf %90 : vector<8x8xf32> to vector<8x8xbf16>
    %c16 = arith.constant 16 : index
    %c0_50 = arith.constant 0 : index
    %93 = vector.load %arg11[%c16, %c0_50] : memref<32x32xbf16, #tpu.memory_space<vmem>>, vector<8x32xbf16>
    %cst_51 = arith.constant dense<0.000000e+00> : vector<8x32xf32>
    %94 = tpu.matmul %92, %93, %cst_51 {dimension_numbers = #tpu.dot_dimension_numbers<[1], [0], [0], [1], [0, 0, 1, 1], [], []>} : vector<8x8xbf16>, vector<8x32xbf16>, vector<8x32xf32> -> vector<8x32xf32>
    %95 = arith.addf %91, %94 : vector<8x32xf32>
    %c0_52 = arith.constant 0 : index
    %c0_53 = arith.constant 0 : index
    %96 = vector.load %arg16[%c0_52, %c0_53] : memref<8x32xf32, #tpu.memory_space<vmem>>, vector<8x32xf32>
    tpu.vector_store %arg16[%c0_52, %c0_53], %95 {strides = array<i32>} : memref<8x32xf32, #tpu.memory_space<vmem>>, vector<8x32xf32>,
    %97 = vector.extract_strided_slice %12 {offsets = [0, 24], sizes = [8, 8], strides = [1, 1]} : vector<8x32xbf16> to vector<8x8xbf16>
    %98 = vector.extract_strided_slice %18 {offsets = [0, 24], sizes = [8, 8], strides = [1, 1]} : vector<8x32xbf16> to vector<8x8xbf16>
    %99 = vector.extract_strided_slice %24 {offsets = [0, 24], sizes = [8, 8], strides = [1, 1]} : vector<8x32xbf16> to vector<8x8xbf16>
    %cst_54 = arith.constant dense<0.000000e+00> : vector<8x8xf32>
    %100 = tpu.matmul %97, %98, %cst_54 {dimension_numbers = #tpu.dot_dimension_numbers<[1], [1], [0], [0], [0, 0, 1, 0], [], []>} : vector<8x8xbf16>, vector<8x8xbf16>, vector<8x8xf32> -> vector<8x8xf32>
    %cst_55 = arith.constant 0.353553385 : f32
    %101 = vector.broadcast %cst_55 : f32 to vector<8x8xf32>
    %102 = arith.mulf %100, %101 : vector<8x8xf32>
    %cst_56 = arith.constant dense<0xFF800000> : vector<8xf32>
    %103 = vector.multi_reduction <maximumf>, %102, %cst_56 [1] : vector<8x8xf32> to vector<8xf32>
    %104 = vector.shape_cast %103 : vector<8xf32> to vector<8x1xf32>
    %105 = vector.broadcast %104 : vector<8x1xf32> to vector<8x8xf32>
    %106 = arith.subf %102, %105 : vector<8x8xf32>
    %107 = math.exp %106 : vector<8x8xf32>
    %cst_57 = arith.constant dense<0.000000e+00> : vector<8xf32>
    %108 = vector.multi_reduction <add>, %107, %cst_57 [1] : vector<8x8xf32> to vector<8xf32>
    %109 = vector.shape_cast %108 : vector<8xf32> to vector<8x1xf32>
    %110 = tpu.reciprocal %109 {approx = true} : vector<8x1xf32> -> vector<8x1xf32>
    %111 = vector.broadcast %110 : vector<8x1xf32> to vector<8x8xf32>
    %112 = arith.mulf %107, %111 : vector<8x8xf32>
    %113 = arith.truncf %112 : vector<8x8xf32> to vector<8x8xbf16>
    %cst_58 = arith.constant dense<0.000000e+00> : vector<8x8xf32>
    %114 = tpu.matmul %113, %99, %cst_58 {dimension_numbers = #tpu.dot_dimension_numbers<[1], [0], [0], [1], [0, 0, 1, 1], [], []>} : vector<8x8xbf16>, vector<8x8xbf16>, vector<8x8xf32> -> vector<8x8xf32>
    %c0_59 = arith.constant 0 : index
    %c0_60 = arith.constant 0 : index
    %115 = vector.load %arg16[%c0_59, %c0_60] : memref<8x32xf32, #tpu.memory_space<vmem>>, vector<8x32xf32>
    %116 = arith.truncf %114 : vector<8x8xf32> to vector<8x8xbf16>
    %c24 = arith.constant 24 : index
    %c0_61 = arith.constant 0 : index
    %117 = vector.load %arg11[%c24, %c0_61] : memref<32x32xbf16, #tpu.memory_space<vmem>>, vector<8x32xbf16>
    %cst_62 = arith.constant dense<0.000000e+00> : vector<8x32xf32>
    %118 = tpu.matmul %116, %117, %cst_62 {dimension_numbers = #tpu.dot_dimension_numbers<[1], [0], [0], [1], [0, 0, 1, 1], [], []>} : vector<8x8xbf16>, vector<8x32xbf16>, vector<8x32xf32> -> vector<8x32xf32>
    %119 = arith.addf %115, %118 : vector<8x32xf32>
    %c0_63 = arith.constant 0 : index
    %c0_64 = arith.constant 0 : index
    %120 = vector.load %arg16[%c0_63, %c0_64] : memref<8x32xf32, #tpu.memory_space<vmem>>, vector<8x32xf32>
    tpu.vector_store %arg16[%c0_63, %c0_64], %119 {strides = array<i32>} : memref<8x32xf32, #tpu.memory_space<vmem>>, vector<8x32xf32>,
    %c0_i32_65 = arith.constant 0 : i32
    %121 = arith.cmpi eq, %arg2, %c0_i32_65 : i32
    %122 = arith.extui %121 : i1 to i32
    %c0_i32_66 = arith.constant 0 : i32
    %123 = arith.cmpi ne, %122, %c0_i32_66 : i32
    scf.if %123 {
      %c0_67 = arith.constant 0 : index
      %c0_68 = arith.constant 0 : index
      %124 = vector.load %arg16[%c0_67, %c0_68] : memref<8x32xf32, #tpu.memory_space<vmem>>, vector<8x32xf32>
      %cst_69 = arith.constant dense<0.000000e+00> : vector<8xf32>
      %125 = vector.multi_reduction <add>, %124, %cst_69 [1] : vector<8x32xf32> to vector<8xf32>
      %126 = vector.shape_cast %125 : vector<8xf32> to vector<8x1xf32>
      %cst_70 = arith.constant 3.200000e+01 : f32
      %127 = vector.broadcast %cst_70 : f32 to vector<8x1xf32>
      %128 = arith.divf %126, %127 : vector<8x1xf32>
      %129 = vector.broadcast %128 : vector<8x1xf32> to vector<8x32xf32>
      %130 = arith.subf %124, %129 : vector<8x32xf32>
      %131 = arith.mulf %130, %130 : vector<8x32xf32>
      %cst_71 = arith.constant dense<0.000000e+00> : vector<8xf32>
      %132 = vector.multi_reduction <add>, %131, %cst_71 [1] : vector<8x32xf32> to vector<8xf32>
      %133 = vector.shape_cast %132 : vector<8xf32> to vector<8x1xf32>
      %cst_72 = arith.constant 3.200000e+01 : f32
      %134 = vector.broadcast %cst_72 : f32 to vector<8x1xf32>
      %135 = arith.divf %133, %134 : vector<8x1xf32>
      %136 = vector.broadcast %128 : vector<8x1xf32> to vector<8x32xf32>
      %137 = arith.subf %124, %136 : vector<8x32xf32>
      %cst_73 = arith.constant 9.99999974E-6 : f32
      %138 = vector.broadcast %cst_73 : f32 to vector<8x1xf32>
      %139 = arith.addf %135, %138 : vector<8x1xf32>
      %140 = math.rsqrt %139 : vector<8x1xf32>
      %141 = vector.broadcast %140 : vector<8x1xf32> to vector<8x32xf32>
      %142 = arith.mulf %137, %141 : vector<8x32xf32>
      %c0_74 = arith.constant 0 : index
      %c0_75 = arith.constant 0 : index
      %143 = vector.load %arg13[%c0_74, %c0_75] : memref<1x32xf32, #tpu.memory_space<vmem>>, vector<1x32xf32>
      %144 = vector.broadcast %143 : vector<1x32xf32> to vector<8x32xf32>
      %145 = arith.mulf %142, %144 : vector<8x32xf32>
      %c0_76 = arith.constant 0 : index
      %c0_77 = arith.constant 0 : index
      %146 = vector.load %arg14[%c0_76, %c0_77] : memref<1x32xf32, #tpu.memory_space<vmem>>, vector<1x32xf32>
      %147 = vector.broadcast %146 : vector<1x32xf32> to vector<8x32xf32>
      %148 = arith.addf %145, %147 : vector<8x32xf32>
      %149 = arith.truncf %148 : vector<8x32xf32> to vector<8x32xbf16>
      %c0_78 = arith.constant 0 : index
      %c0_79 = arith.constant 0 : index
      %c0_80 = arith.constant 0 : index
      %150 = vector.load %arg15[%c0_78, %c0_79, %c0_80] : memref<1x8x32xbf16, #tpu.memory_space<vmem>>, vector<1x8x32xbf16>
      %151 = vector.shape_cast %150 : vector<1x8x32xbf16> to vector<8x32xbf16>
      %152 = vector.shape_cast %149 : vector<8x32xbf16> to vector<1x8x32xbf16>
      tpu.vector_store %arg15[%c0_78, %c0_79, %c0_80], %152 {strides = array<i32>} : memref<1x8x32xbf16, #tpu.memory_space<vmem>>, vector<1x8x32xbf16>,
    } else {
    }
    return
  }
  func.func @transform_0(%arg0: i32, %arg1: i32, %arg2: i32) -> (i32, i32, i32) {
    %c0_i32 = arith.constant 0 : i32
    %c0_i32_0 = arith.constant 0 : i32
    return %arg0, %arg1, %c0_i32 : i32, i32, i32
  }
  func.func @transform_1(%arg0: i32, %arg1: i32, %arg2: i32) -> (i32, i32, i32) {
    %c0_i32 = arith.constant 0 : i32
    %c0_i32_0 = arith.constant 0 : i32
    %c0_i32_1 = arith.constant 0 : i32
    return %arg0, %c0_i32, %c0_i32_0 : i32, i32, i32
  }
  func.func @transform_2(%arg0: i32, %arg1: i32, %arg2: i32) -> (i32, i32) {
    %c0_i32 = arith.constant 0 : i32
    %c0_i32_0 = arith.constant 0 : i32
    return %c0_i32, %arg2 : i32, i32
  }
  func.func @transform_3(%arg0: i32, %arg1: i32, %arg2: i32) -> (i32, i32) {
    %c0_i32 = arith.constant 0 : i32
    %c0_i32_0 = arith.constant 0 : i32
    return %c0_i32, %arg2 : i32, i32
  }
  func.func @transform_4(%arg0: i32, %arg1: i32, %arg2: i32) -> (i32, i32) {
    %c0_i32 = arith.constant 0 : i32
    %c0_i32_0 = arith.constant 0 : i32
    return %c0_i32, %arg2 : i32, i32
  }
  func.func @transform_5(%arg0: i32, %arg1: i32, %arg2: i32) -> (i32, i32) {
    %c0_i32 = arith.constant 0 : i32
    %c0_i32_0 = arith.constant 0 : i32
    return %c0_i32, %arg2 : i32, i32
  }
  func.func @transform_6(%arg0: i32, %arg1: i32, %arg2: i32) -> (i32, i32) {
    %c0_i32 = arith.constant 0 : i32
    %c0_i32_0 = arith.constant 0 : i32
    return %c0_i32, %arg2 : i32, i32
  }
  func.func @transform_7(%arg0: i32, %arg1: i32, %arg2: i32) -> (i32, i32) {
    %c0_i32 = arith.constant 0 : i32
    %c0_i32_0 = arith.constant 0 : i32
    return %c0_i32, %arg2 : i32, i32
  }
  func.func @transform_8(%arg0: i32, %arg1: i32, %arg2: i32) -> (i32, i32) {
    %c0_i32 = arith.constant 0 : i32
    %c0_i32_0 = arith.constant 0 : i32
    return %arg2, %c0_i32 : i32, i32
  }
  func.func @transform_9(%arg0: i32, %arg1: i32, %arg2: i32) -> (i32, i32) {
    %c0_i32 = arith.constant 0 : i32
    %c0_i32_0 = arith.constant 0 : i32
    %c0_i32_1 = arith.constant 0 : i32
    return %c0_i32, %c0_i32_0 : i32, i32
  }
  func.func @transform_10(%arg0: i32, %arg1: i32, %arg2: i32) -> (i32, i32) {
    %c0_i32 = arith.constant 0 : i32
    %c0_i32_0 = arith.constant 0 : i32
    %c0_i32_1 = arith.constant 0 : i32
    return %c0_i32, %c0_i32_0 : i32, i32
  }
  func.func @transform_11(%arg0: i32, %arg1: i32, %arg2: i32) -> (i32, i32) {
    %c0_i32 = arith.constant 0 : i32
    %c0_i32_0 = arith.constant 0 : i32
    %c0_i32_1 = arith.constant 0 : i32
    return %c0_i32, %c0_i32_0 : i32, i32
  }
  func.func @transform_12(%arg0: i32, %arg1: i32, %arg2: i32) -> (i32, i32, i32) {
    %c0_i32 = arith.constant 0 : i32
    %c0_i32_0 = arith.constant 0 : i32
    return %arg0, %arg1, %c0_i32 : i32, i32, i32
  }
}

</mosaic_0001>

<llo_original>
// kernel: transformer_decoder_forward.8
$region0: #{transformer_decoder_forward.8}
  #allocation0 [shape = 'u32[]', space=smem, size = 0x4, offset = 0x4, fixed_abs, tag = 'smem constant byte address 0x4 - core index']
  #allocation1 [shape = 'u32[144,128]{1,0:T(1,128)}', space=vmem, size = 0x12000, scoped, tag = 'internal scratch']
  #allocation2 [shape = 'f32[8,32]{1,0:T(8,128)}', space=vmem, size = 0x1000, scoped, tag = 'scratch operand']
  %s0 = inlined_call_operand.hbm [shape: bf16[16,32], index: 0, kind: input, shape index: {}]
  %s1 = inlined_call_operand.hbm [shape: bf16[32,128], index: 1, kind: input, shape index: {}]
  %s2 = inlined_call_operand.hbm [shape: f32[1,128], index: 2, kind: input, shape index: {}]
  %s3 = inlined_call_operand.hbm [shape: bf16[128,32], index: 3, kind: input, shape index: {}]
  %s4 = inlined_call_operand.hbm [shape: f32[1,32], index: 4, kind: input, shape index: {}]
  %s5 = inlined_call_operand.hbm [shape: f32[1,32], index: 5, kind: input, shape index: {}]
  %s6 = inlined_call_operand.hbm [shape: f32[1,32], index: 6, kind: input, shape index: {}]
  %s7 = inlined_call_operand.hbm [shape: bf16[16,32], index: 7, kind: output, shape index: {}]
  %s8 = sld [smem:[#allocation0]]
  $region97: #{transformer_decoder_forward.8} parent=0
    _
  %s10 = ssub.s32 1, %s8
  %s11 = scalar_select 0, %s10, %s8
  $region1: #{transformer_decoder_forward.8} parent=0
    #allocation3 [shape = 'u8[4096]{0}', space=vmem, size = 0x1000, scoped, tag = 'input window, operand 0']
    #allocation4 [shape = 's32[2]{0}', space=sflag, size = 0x8, scoped, tag = 'scoped memory for transformer_decoder_forward.8']
    #allocation5 [shape = 's32[2]{0}', space=sflag, size = 0x8, scoped, tag = 'scoped memory for transformer_decoder_forward.8']
    #allocation6 [shape = 'u8[8192]{0}', space=vmem, size = 0x2000, scoped, tag = 'input window, operand 1, single buffered']
    #allocation7 [shape = 's32[1]{0}', space=sflag, size = 0x4, scoped, tag = 'scoped memory for transformer_decoder_forward.8']
    #allocation8 [shape = 'u8[512]{0}', space=vmem, size = 0x400, scoped, tag = 'input window, operand 2, single buffered']
    #allocation9 [shape = 'u8[32768]{0}', space=vmem, size = 0x8000, scoped, tag = 'input window, operand 3, single buffered']
    #allocation10 [shape = 's32[1]{0}', space=sflag, size = 0x4, scoped, tag = 'scoped memory for transformer_decoder_forward.8']
    #allocation11 [shape = 'u8[512]{0}', space=vmem, size = 0x400, scoped, tag = 'input window, operand 4, single buffered']
    #allocation12 [shape = 'u8[512]{0}', space=vmem, size = 0x400, scoped, tag = 'input window, operand 5, single buffered']
    #allocation13 [shape = 's32[1]{0}', space=sflag, size = 0x4, scoped, tag = 'scoped memory for transformer_decoder_forward.8']
    #allocation14 [shape = 'u8[512]{0}', space=vmem, size = 0x400, scoped, tag = 'input window, operand 6, single buffered']
    #allocation15 [shape = 'u8[4096]{0}', space=vmem, size = 0x1000, scoped, tag = 'output window, operand 0']
    %12 = vsyncpa [#allocation4], 0
    %s13 = scalar_lea.sflag [#allocation4], 1
    %14 = vsyncpa %s13, 0
    %15 = vsyncpa [#allocation7], 0
    %16 = vsyncpa [#allocation10], 0
    %17 = vsyncpa [#allocation13], 0
    %18 = vsyncpa [#allocation5], 0
    %s19 = scalar_lea.sflag [#allocation5], 1
    %20 = vsyncpa %s19, 0
    loop: start=0, step=1, limit=4
    $region2: #{transformer_decoder_forward.8} parent=1 // loop_pre_header
      _
    $region3: #{transformer_decoder_forward.8} parent=1 // loop_header
      %s22 = sphi 0, %s26
      %p23 = scmp.ge.s32.totalorder %s22, 4
      %s29 = sphi 0, %s41
      %s30 = sphi 0, %s37
      %s31 = sphi 0, %s29
      %s32 = sphi 0, %s30
      %s33 = sphi 0, %s31
      %s34 = sphi 0, %s32
      %s44 = sphi 0, %s46
      %s47 = sphi 0, %s44
      %s48 = sphi 0, %s47
      %s64 = sphi 0, %s48
      %s70 = sphi 0, %s72
      %s73 = sphi 0, %s70
      %s74 = sphi 0, %s73
      %s90 = sphi 0, %s74
      %s96 = sphi 0, %s98
      %s99 = sphi 0, %s96
      %s100 = sphi 0, %s99
      %s116 = sphi 0, %s100
      %s122 = sphi 0, %s124
      %s125 = sphi 0, %s122
      %s126 = sphi 0, %s125
      %s142 = sphi 0, %s126
      %s146 = sphi 0, %s146
      %s148 = sphi 0, %s146
      %s149 = sphi 0, %s148
      %s163 = sphi 0, %s149
      %s167 = sphi 0, %s167
      %s169 = sphi 0, %s167
      %s170 = sphi 0, %s169
      %s184 = sphi 0, %s170
      %s188 = sphi 0, %s188
      %s190 = sphi 0, %s188
      %s191 = sphi 0, %s190
      %s205 = sphi 0, %s191
      %s211 = sphi 0, %s213
      %s214 = sphi 0, %s211
      %s215 = sphi 0, %s214
      %s231 = sphi 0, %s215
    $region4: #{transformer_decoder_forward.8} parent=1 // loop_header_branch
      %25 = sbr.rel (%p23) target = $region8
    $region5: #{transformer_decoder_forward.8} parent=1 // loop_body
      %s27 = ssub.s32 %s22, 1
      %s28 = ssub.s32 %s22, 2
      %s35 = sadd.s32 1, %s30
      %p36 = scmp.ge.s32.totalorder %s35, 1
      %s37 = scalar_select %p36, 0, %s35
      %s38 = sadd.s32 1, %s29
      %s39 = scalar_select %p36, %s38, %s29
      %p40 = scmp.ge.s32.totalorder %s39, 2
      %s41 = scalar_select %p40, 0, %s39
      %s42 = ssub.s32 %s29, %s41
      %p43 = scmp.eq.s32.totalorder %s42, 0
      %s45 = sadd.s32 %s44, 1
      %s46 = scalar_select %p43, %s44, %s45
      %p49 = pneg %p43
      %p50 = scmp.eq.s32.totalorder %s22, 1
      %p51 = por %p49, %p50
      %p52 = scmp.ne.s32.totalorder %s44, %s47
      %p53 = scmp.eq.s32.totalorder %s22, 0
      %p54 = por %p52, %p53
      %p55 = scmp.ne.s32.totalorder %s44, %s47
      %p56 = scmp.eq.s32.totalorder %s27, 1
      %p57 = por %p55, %p56
      %p58 = scmp.ne.s32.totalorder %s47, %s48
      %p59 = scmp.eq.s32.totalorder %s27, 0
      %p60 = por %p58, %p59
      %p61 = scmp.ne.s32.totalorder %s47, %s48
      %p62 = scmp.eq.s32.totalorder %s28, 1
      %p63 = por %p61, %p62
      %p65 = scmp.ne.s32.totalorder %s48, %s64
      %p66 = scmp.eq.s32.totalorder %s28, 0
      %p67 = por %p65, %p66
      %s68 = ssub.s32 %s30, %s37
      %p69 = scmp.eq.s32.totalorder %s68, 0
      %s71 = sadd.s32 %s70, 1
      %s72 = scalar_select %p69, %s70, %s71
      %p75 = pneg %p69
      %p76 = scmp.eq.s32.totalorder %s22, 1
      %p77 = por %p75, %p76
      %p78 = scmp.ne.s32.totalorder %s70, %s73
      %p79 = scmp.eq.s32.totalorder %s22, 0
      %p80 = por %p78, %p79
      %p81 = scmp.ne.s32.totalorder %s70, %s73
      %p82 = scmp.eq.s32.totalorder %s27, 1
      %p83 = por %p81, %p82
      %p84 = scmp.ne.s32.totalorder %s73, %s74
      %p85 = scmp.eq.s32.totalorder %s27, 0
      %p86 = por %p84, %p85
      %p87 = scmp.ne.s32.totalorder %s73, %s74
      %p88 = scmp.eq.s32.totalorder %s28, 1
      %p89 = por %p87, %p88
      %p91 = scmp.ne.s32.totalorder %s74, %s90
      %p92 = scmp.eq.s32.totalorder %s28, 0
      %p93 = por %p91, %p92
      %s94 = ssub.s32 %s30, %s37
      %p95 = scmp.eq.s32.totalorder %s94, 0
      %s97 = sadd.s32 %s96, 1
      %s98 = scalar_select %p95, %s96, %s97
      %p101 = pneg %p95
      %p102 = scmp.eq.s32.totalorder %s22, 1
      %p103 = por %p101, %p102
      %p104 = scmp.ne.s32.totalorder %s96, %s99
      %p105 = scmp.eq.s32.totalorder %s22, 0
      %p106 = por %p104, %p105
      %p107 = scmp.ne.s32.totalorder %s96, %s99
      %p108 = scmp.eq.s32.totalorder %s27, 1
      %p109 = por %p107, %p108
      %p110 = scmp.ne.s32.totalorder %s99, %s100
      %p111 = scmp.eq.s32.totalorder %s27, 0
      %p112 = por %p110, %p111
      %p113 = scmp.ne.s32.totalorder %s99, %s100
      %p114 = scmp.eq.s32.totalorder %s28, 1
      %p115 = por %p113, %p114
      %p117 = scmp.ne.s32.totalorder %s100, %s116
      %p118 = scmp.eq.s32.totalorder %s28, 0
      %p119 = por %p117, %p118
      %s120 = ssub.s32 %s30, %s37
      %p121 = scmp.eq.s32.totalorder %s120, 0
      %s123 = sadd.s32 %s122, 1
      %s124 = scalar_select %p121, %s122, %s123
      %p127 = pneg %p121
      %p128 = scmp.eq.s32.totalorder %s22, 1
      %p129 = por %p127, %p128
      %p130 = scmp.ne.s32.totalorder %s122, %s125
      %p131 = scmp.eq.s32.totalorder %s22, 0
      %p132 = por %p130, %p131
      %p133 = scmp.ne.s32.totalorder %s122, %s125
      %p134 = scmp.eq.s32.totalorder %s27, 1
      %p135 = por %p133, %p134
      %p136 = scmp.ne.s32.totalorder %s125, %s126
      %p137 = scmp.eq.s32.totalorder %s27, 0
      %p138 = por %p136, %p137
      %p139 = scmp.ne.s32.totalorder %s125, %s126
      %p140 = scmp.eq.s32.totalorder %s28, 1
      %p141 = por %p139, %p140
      %p143 = scmp.ne.s32.totalorder %s126, %s142
      %p144 = scmp.eq.s32.totalorder %s28, 0
      %p145 = por %p143, %p144
      %s147 = sadd.s32 %s146, 1
      %p150 = scmp.eq.s32.totalorder %s22, 1
      %p151 = scmp.ne.s32.totalorder %s146, %s148
      %p152 = scmp.eq.s32.totalorder %s22, 0
      %p153 = por %p151, %p152
      %p154 = scmp.ne.s32.totalorder %s146, %s148
      %p155 = scmp.eq.s32.totalorder %s27, 1
      %p156 = por %p154, %p155
      %p157 = scmp.ne.s32.totalorder %s148, %s149
      %p158 = scmp.eq.s32.totalorder %s27, 0
      %p159 = por %p157, %p158
      %p160 = scmp.ne.s32.totalorder %s148, %s149
      %p161 = scmp.eq.s32.totalorder %s28, 1
      %p162 = por %p160, %p161
      %p164 = scmp.ne.s32.totalorder %s149, %s163
      %p165 = scmp.eq.s32.totalorder %s28, 0
      %p166 = por %p164, %p165
      %s168 = sadd.s32 %s167, 1
      %p171 = scmp.eq.s32.totalorder %s22, 1
      %p172 = scmp.ne.s32.totalorder %s167, %s169
      %p173 = scmp.eq.s32.totalorder %s22, 0
      %p174 = por %p172, %p173
      %p175 = scmp.ne.s32.totalorder %s167, %s169
      %p176 = scmp.eq.s32.totalorder %s27, 1
      %p177 = por %p175, %p176
      %p178 = scmp.ne.s32.totalorder %s169, %s170
      %p179 = scmp.eq.s32.totalorder %s27, 0
      %p180 = por %p178, %p179
      %p181 = scmp.ne.s32.totalorder %s169, %s170
      %p182 = scmp.eq.s32.totalorder %s28, 1
      %p183 = por %p181, %p182
      %p185 = scmp.ne.s32.totalorder %s170, %s184
      %p186 = scmp.eq.s32.totalorder %s28, 0
      %p187 = por %p185, %p186
      %s189 = sadd.s32 %s188, 1
      %p192 = scmp.eq.s32.totalorder %s22, 1
      %p193 = scmp.ne.s32.totalorder %s188, %s190
      %p194 = scmp.eq.s32.totalorder %s22, 0
      %p195 = por %p193, %p194
      %p196 = scmp.ne.s32.totalorder %s188, %s190
      %p197 = scmp.eq.s32.totalorder %s27, 1
      %p198 = por %p196, %p197
      %p199 = scmp.ne.s32.totalorder %s190, %s191
      %p200 = scmp.eq.s32.totalorder %s27, 0
      %p201 = por %p199, %p200
      %p202 = scmp.ne.s32.totalorder %s190, %s191
      %p203 = scmp.eq.s32.totalorder %s28, 1
      %p204 = por %p202, %p203
      %p206 = scmp.ne.s32.totalorder %s191, %s205
      %p207 = scmp.eq.s32.totalorder %s28, 0
      %p208 = por %p206, %p207
      %s209 = ssub.s32 %s29, %s41
      %p210 = scmp.eq.s32.totalorder %s209, 0
      %s212 = sadd.s32 %s211, 1
      %s213 = scalar_select %p210, %s211, %s212
      %p216 = pneg %p210
      %p217 = scmp.eq.s32.totalorder %s22, 1
      %p218 = por %p216, %p217
      %p219 = scmp.ne.s32.totalorder %s211, %s214
      %p220 = scmp.eq.s32.totalorder %s22, 0
      %p221 = por %p219, %p220
      %p222 = scmp.ne.s32.totalorder %s211, %s214
      %p223 = scmp.eq.s32.totalorder %s27, 1
      %p224 = por %p222, %p223
      %p225 = scmp.ne.s32.totalorder %s214, %s215
      %p226 = scmp.eq.s32.totalorder %s27, 0
      %p227 = por %p225, %p226
      %p228 = scmp.ne.s32.totalorder %s214, %s215
      %p229 = scmp.eq.s32.totalorder %s28, 1
      %p230 = por %p228, %p229
      %p232 = scmp.ne.s32.totalorder %s215, %s231
      %p233 = scmp.eq.s32.totalorder %s28, 0
      %p234 = por %p232, %p233
      %p235 = scmp.le.s32.totalorder 1, %s22
      %p236 = scmp.lt.s32.totalorder %s22, 3
      %p237 = pnand %p235, %p236
      %p238 = pneg %p237
      // Predicated region
      $region9: #{transformer_decoder_forward.8} parent=5 // pred_check
        _
      $region10: #{transformer_decoder_forward.8} parent=5 // pred_check_branch
        %240 = sbr.rel (%p237) target = $region12
      $region11: #{transformer_decoder_forward.8} parent=5 // pred_region
        %s241 = ssub.s32 %s22, 1
        // Predicated region
        $region13: #{transformer_decoder_forward.8} parent=11 // pred_check
          %p242 = pneg %p86
        $region14: #{transformer_decoder_forward.8} parent=11 // pred_check_branch
          %244 = sbr.rel (%p242) target = $region16
        $region15: #{transformer_decoder_forward.8} parent=11 // pred_region
          %s246 = ssub.s32 256, 256
          %247 = vsyncadd [#allocation7], %s246
          %s248 = smul.addr %s32, 64
          %s249 = scalar_lea.hbm %s1, %s248
          %s250 = sshll.u32 [#allocation6], 4
          %s251 = int_to_ptr.vmem [resolvable:$true] %s250
          %256 = dma.hbm_to_vmem [thread:$0]  %s249, 256, %s251, [#allocation7], 64, 64, 4
        $region16: #{transformer_decoder_forward.8} parent=11 // pred_fallthru
          _
        // Predicated region
        $region17: #{transformer_decoder_forward.8} parent=11 // pred_check
          %p257 = pneg %p112
        $region18: #{transformer_decoder_forward.8} parent=11 // pred_check_branch
          %259 = sbr.rel (%p257) target = $region20
        $region19: #{transformer_decoder_forward.8} parent=11 // pred_region
          %s261 = ssub.s32 16, 16
          %262 = vsyncadd [#allocation7], %s261
          %s263 = smul.addr %s32, 16
          %s264 = scalar_lea.hbm %s2, %s263
          %s266 = sshll.u32 [#allocation8], 4
          %s267 = int_to_ptr.vmem [resolvable:$true] %s266
          %269 = dma.hbm_to_vmem [thread:$0]  %s264, 16, %s267, [#allocation7]
        $region20: #{transformer_decoder_forward.8} parent=11 // pred_fallthru
          _
        // Predicated region
        $region21: #{transformer_decoder_forward.8} parent=11 // pred_check
          %p270 = pneg %p138
        $region22: #{transformer_decoder_forward.8} parent=11 // pred_check_branch
          %272 = sbr.rel (%p270) target = $region24
        $region23: #{transformer_decoder_forward.8} parent=11 // pred_region
          %s273 = smul.u32 16, %s32
          %s275 = ssub.s32 1024, 1024
          %276 = vsyncadd [#allocation10], %s275
          %s277 = smul.addr %s273, 64
          %s278 = scalar_lea.hbm %s3, %s277
          %s279 = sshll.u32 [#allocation9], 4
          %s280 = int_to_ptr.vmem [resolvable:$true] %s279
          %285 = dma.hbm_to_vmem [thread:$0]  %s278, 1024, %s280, [#allocation10], 64, 64, 4
        $region24: #{transformer_decoder_forward.8} parent=11 // pred_fallthru
          _
        // Predicated region
        $region25: #{transformer_decoder_forward.8} parent=11 // pred_check
          %p286 = pneg %p159
        $region26: #{transformer_decoder_forward.8} parent=11 // pred_check_branch
          %288 = sbr.rel (%p286) target = $region28
        $region27: #{transformer_decoder_forward.8} parent=11 // pred_region
          %s290 = ssub.s32 16, 16
          %291 = vsyncadd [#allocation10], %s290
          %s293 = sshll.u32 [#allocation11], 4
          %s294 = int_to_ptr.vmem [resolvable:$true] %s293
          %296 = dma.hbm_to_vmem [thread:$0]  %s4, 16, %s294, [#allocation10]
        $region28: #{transformer_decoder_forward.8} parent=11 // pred_fallthru
          _
        // Predicated region
        $region29: #{transformer_decoder_forward.8} parent=11 // pred_check
          %p297 = pneg %p180
        $region30: #{transformer_decoder_forward.8} parent=11 // pred_check_branch
          %299 = sbr.rel (%p297) target = $region32
        $region31: #{transformer_decoder_forward.8} parent=11 // pred_region
          %s301 = ssub.s32 16, 16
          %302 = vsyncadd [#allocation13], %s301
          %s304 = sshll.u32 [#allocation12], 4
          %s305 = int_to_ptr.vmem [resolvable:$true] %s304
          %307 = dma.hbm_to_vmem [thread:$0]  %s5, 16, %s305, [#allocation13]
        $region32: #{transformer_decoder_forward.8} parent=11 // pred_fallthru
          _
        // Predicated region
        $region33: #{transformer_decoder_forward.8} parent=11 // pred_check
          %p308 = pneg %p201
        $region34: #{transformer_decoder_forward.8} parent=11 // pred_check_branch
          %310 = sbr.rel (%p308) target = $region36
        $region35: #{transformer_decoder_forward.8} parent=11 // pred_region
          %s312 = ssub.s32 16, 16
          %313 = vsyncadd [#allocation13], %s312
          %s315 = sshll.u32 [#allocation14], 4
          %s316 = int_to_ptr.vmem [resolvable:$true] %s315
          %318 = dma.hbm_to_vmem [thread:$0]  %s6, 16, %s316, [#allocation13]
        $region36: #{transformer_decoder_forward.8} parent=11 // pred_fallthru
          _
      $region12: #{transformer_decoder_forward.8} parent=5 // pred_fallthru
        _
      %p319 = scmp.lt.s32.totalorder %s22, 2
      // Predicated region
      $region37: #{transformer_decoder_forward.8} parent=5 // pred_check
        %p320 = pneg %p319
      $region38: #{transformer_decoder_forward.8} parent=5 // pred_check_branch
        %322 = sbr.rel (%p320) target = $region40
      $region39: #{transformer_decoder_forward.8} parent=5 // pred_region
        // Predicated region
        $region41: #{transformer_decoder_forward.8} parent=39 // pred_check
          %p323 = pneg %p54
        $region42: #{transformer_decoder_forward.8} parent=39 // pred_check_branch
          %325 = sbr.rel (%p323) target = $region44
        $region43: #{transformer_decoder_forward.8} parent=39 // pred_region
          %s326 = sand.u32 %s44, 1
          %s327 = scalar_lea.sflag [#allocation4], %s326
          %s328 = sand.u32 %s44, 1
          %s329 = smul.addr %s328, 4
          %s330 = scalar_lea.vmem [#allocation3], %s329
          %s332 = ssub.s32 64, 64
          %333 = vsyncadd %s327, %s332
          %s334 = smul.addr %s29, 64
          %s335 = scalar_lea.hbm %s0, %s334
          %s337 = sshll.u32 %s330, 4
          %s338 = int_to_ptr.vmem [resolvable:$true] %s337
          %340 = dma.hbm_to_vmem [thread:$0]  %s335, 64, %s338, %s327
        $region44: #{transformer_decoder_forward.8} parent=39 // pred_fallthru
          _
      $region40: #{transformer_decoder_forward.8} parent=5 // pred_fallthru
        _
      %p341 = scmp.le.s32.totalorder 1, %s22
      %p342 = scmp.lt.s32.totalorder %s22, 3
      %p343 = pnand %p341, %p342
      %p344 = pneg %p343
      // Predicated region
      $region45: #{transformer_decoder_forward.8} parent=5 // pred_check
        _
      $region46: #{transformer_decoder_forward.8} parent=5 // pred_check_branch
        %346 = sbr.rel (%p343) target = $region48
      $region47: #{transformer_decoder_forward.8} parent=5 // pred_region
        %s347 = ssub.s32 %s22, 1
        %s348 = sand.u32 %s47, 1
        %s349 = scalar_lea.sflag [#allocation4], %s348
        %s350 = sand.u32 %s47, 1
        %s351 = smul.addr %s350, 4
        %s352 = scalar_lea.vmem [#allocation3], %s351
        // Predicated region
        $region49: #{transformer_decoder_forward.8} parent=47 // pred_check
          %p353 = pneg %p60
        $region50: #{transformer_decoder_forward.8} parent=47 // pred_check_branch
          %355 = sbr.rel (%p353) target = $region52
        $region51: #{transformer_decoder_forward.8} parent=47 // pred_region
          %356 = dma.done %s349, 64
        $region52: #{transformer_decoder_forward.8} parent=47 // pred_fallthru
          _
        // Predicated region
        $region53: #{transformer_decoder_forward.8} parent=47 // pred_check
          %p357 = pneg %p86
        $region54: #{transformer_decoder_forward.8} parent=47 // pred_check_branch
          %359 = sbr.rel (%p357) target = $region56
        $region55: #{transformer_decoder_forward.8} parent=47 // pred_region
          %360 = dma.done [#allocation7], 256
        $region56: #{transformer_decoder_forward.8} parent=47 // pred_fallthru
          _
        // Predicated region
        $region57: #{transformer_decoder_forward.8} parent=47 // pred_check
          %p361 = pneg %p112
        $region58: #{transformer_decoder_forward.8} parent=47 // pred_check_branch
          %363 = sbr.rel (%p361) target = $region60
        $region59: #{transformer_decoder_forward.8} parent=47 // pred_region
          %364 = dma.done [#allocation7], 16
        $region60: #{transformer_decoder_forward.8} parent=47 // pred_fallthru
          _
        // Predicated region
        $region61: #{transformer_decoder_forward.8} parent=47 // pred_check
          %p365 = pneg %p138
        $region62: #{transformer_decoder_forward.8} parent=47 // pred_check_branch
          %367 = sbr.rel (%p365) target = $region64
        $region63: #{transformer_decoder_forward.8} parent=47 // pred_region
          %368 = dma.done [#allocation10], 1024
        $region64: #{transformer_decoder_forward.8} parent=47 // pred_fallthru
          _
        // Predicated region
        $region65: #{transformer_decoder_forward.8} parent=47 // pred_check
          %p369 = pneg %p159
        $region66: #{transformer_decoder_forward.8} parent=47 // pred_check_branch
          %371 = sbr.rel (%p369) target = $region68
        $region67: #{transformer_decoder_forward.8} parent=47 // pred_region
          %372 = dma.done [#allocation10], 16
        $region68: #{transformer_decoder_forward.8} parent=47 // pred_fallthru
          _
        // Predicated region
        $region69: #{transformer_decoder_forward.8} parent=47 // pred_check
          %p373 = pneg %p180
        $region70: #{transformer_decoder_forward.8} parent=47 // pred_check_branch
          %375 = sbr.rel (%p373) target = $region72
        $region71: #{transformer_decoder_forward.8} parent=47 // pred_region
          %376 = dma.done [#allocation13], 16
        $region72: #{transformer_decoder_forward.8} parent=47 // pred_fallthru
          _
        // Predicated region
        $region73: #{transformer_decoder_forward.8} parent=47 // pred_check
          %p377 = pneg %p201
        $region74: #{transformer_decoder_forward.8} parent=47 // pred_check_branch
          %379 = sbr.rel (%p377) target = $region76
        $region75: #{transformer_decoder_forward.8} parent=47 // pred_region
          %380 = dma.done [#allocation13], 16
        $region76: #{transformer_decoder_forward.8} parent=47 // pred_fallthru
          _
        %s381 = sand.u32 %s47, 1
        %s382 = scalar_lea.sflag [#allocation4], %s381
        %s383 = sand.u32 %s47, 1
        %s384 = smul.addr %s383, 4
        %s385 = scalar_lea.vmem [#allocation3], %s384
        %p386 = pneg %p60
        %p387 = pneg %p57
        %p388 = pneg %p86
        %p389 = pneg %p83
        %p390 = pneg %p112
        %p391 = pneg %p109
        %p392 = pneg %p138
        %p393 = pneg %p135
        %p394 = pneg %p159
        %p395 = pneg %p156
        %p396 = pneg %p180
        %p397 = pneg %p177
        %p398 = pneg %p201
        %p399 = pneg %p198
        %p400 = pneg %p227
        %p401 = pneg %p224
        %s402 = sand.u32 %s214, 1
        %s403 = scalar_lea.sflag [#allocation5], %s402
        %s404 = sand.u32 %s214, 1
        %s405 = smul.addr %s404, 4
        %s406 = scalar_lea.vmem [#allocation15], %s405
        %s407 = smul.u32 16, %s32
        %v409 = vld [vmem:[%s352] sm:$0xf]
        %p410 = scmp.eq.s32.totalorder %s32, 0
        // Predicated region
        $region77: #{transformer_decoder_forward.8} parent=47 // pred_check
          %p411 = pneg %p410
        $region78: #{transformer_decoder_forward.8} parent=47 // pred_check_branch
          %413 = sbr.rel (%p411) target = $region80
        $region79: #{transformer_decoder_forward.8} parent=47 // pred_region
          %v414 = vunpack.c.l.bf16 %v409
          %v415 = vld [vmem:[#allocation11] sm:$0x1]
          %v417 = vlaneseq
          %v418 = vshrl.u32 %v417, 7
          %v419 = vsub.s32 0, %v418
          %v420 = vrot.slane %v415, %v419
          %v422 = vadd.f32 %v414, %v420
          %vm423 = vcmask 261120
          %424 = vst.msk [vmem:[#allocation2] sm:$0xff] %vm423, %v422
        $region80: #{transformer_decoder_forward.8} parent=47 // pred_fallthru
          _
        %v425 = vld [vmem:[#allocation6] sm:$0xf]
        %v426 = vld [vmem:[#allocation6 + $0x4] sm:$0xf]
        %v427 = vld [vmem:[#allocation6 + $0x8] sm:$0xf]
        %v428 = vld [vmem:[#allocation6 + $0xc] sm:$0xf]
        %v429 = vld [vmem:[#allocation8] sm:$0x1]
        %v431 = vlaneseq
        %v432 = vshrl.u32 %v431, 7
        %v433 = vsub.s32 0, %v432
        %v434 = vrot.slane %v429, %v433
        %v440 = vunpack.c.l.b16 %v425
        %v441 = vunpack.c.l.b16 %v426
        %v442 = vunpack.c.l.b16 %v427
        %v443 = vunpack.c.l.b16 %v428
        %v444 = vpack.c.b16 %v441, %v440
        %v445 = vpack.c.b16 %v443, %v442
        %vm448 = vcmask 261120
        %v450 = vsel %vm448, %v409, 0
        %452 = vmatprep.subr.bf16.mxu0 0
        %453 = vmatpush1.bf16.msra.mxu0 %v444
        %454 = vmatprep.subr.bf16.mxu0 0
        %455 = vmatpush1.bf16.msra.mxu0 %v445
        %456 = vmatprep.subr.bf16.mxu0 0
        %457 = vmatpush1.bf16.msra.mxu0 0
        %458 = vmatprep.subr.bf16.mxu0 0
        %459 = vmatpush1.bf16.msra.mxu0 0
        %460 = vmatprep.subr.bf16.mxu0 0
        %461 = vmatpush1.bf16.msra.mxu0 0
        %462 = vmatprep.subr.bf16.mxu0 0
        %463 = vmatpush1.bf16.msra.mxu0 0
        %464 = vmatprep.subr.bf16.mxu0 0
        %465 = vmatpush1.bf16.msra.mxu0 0
        %466 = vmatprep.subr.bf16.mxu0 0
        %467 = vmatpush1.bf16.msra.mxu0 0
        %468 = vmatprep.subr.bf16.mxu0 0
        %469 = vmatpush1.bf16.msra.mxu0 0
        %470 = vmatprep.subr.bf16.mxu0 0
        %471 = vmatpush1.bf16.msra.mxu0 0
        %472 = vmatprep.subr.bf16.mxu0 0
        %473 = vmatpush1.bf16.msra.mxu0 0
        %474 = vmatprep.subr.bf16.mxu0 0
        %475 = vmatpush1.bf16.msra.mxu0 0
        %476 = vmatprep.subr.bf16.mxu0 0
        %477 = vmatpush1.bf16.msra.mxu0 0
        %478 = vmatprep.subr.bf16.mxu0 0
        %479 = vmatpush1.bf16.msra.mxu0 0
        %480 = vmatprep.subr.bf16.mxu0 0
        %481 = vmatpush1.bf16.msra.mxu0 0
        %482 = vmatprep.subr.bf16.mxu0 0
        %483 = vmatpush1.bf16.msra.mxu0 0
        %484 = vmatprep.mubr.bf16.mxu0 0
        %485 = vmatmul.mubr.bf16.gmra.mrb[0].mxu0 %v450
        %v486 = vpop.f32.mrb[0].mxu0
        %v487 = vadd.f32 %v434, %v486
        %v488 = vpop.f32.mrb[0].mxu0
        %v489 = vpop.f32.mrb[0].mxu0
        %v490 = vpop.f32.mrb[0].mxu0
        %491 = vdwg.mxu0
        %v492 = vmax.f32 %v487, 0.0
        %v493 = vpack.c.bf16 %v492, %v492
        %v494 = vld [vmem:[#allocation2] sm:$0xff]
        %v495 = vld [vmem:[#allocation9] sm:$0xf]
        %v496 = vld [vmem:[#allocation9 + $0x4] sm:$0xf]
        %v497 = vld [vmem:[#allocation9 + $0x8] sm:$0xf]
        %v498 = vld [vmem:[#allocation9 + $0xc] sm:$0xf]
        %v499 = vld [vmem:[#allocation9 + $0x10] sm:$0xf]
        %v500 = vld [vmem:[#allocation9 + $0x14] sm:$0xf]
        %v501 = vld [vmem:[#allocation9 + $0x18] sm:$0xf]
        %v502 = vld [vmem:[#allocation9 + $0x1c] sm:$0xf]
        %v503 = vld [vmem:[#allocation9 + $0x20] sm:$0xf]
        %v504 = vld [vmem:[#allocation9 + $0x24] sm:$0xf]
        %v505 = vld [vmem:[#allocation9 + $0x28] sm:$0xf]
        %v506 = vld [vmem:[#allocation9 + $0x2c] sm:$0xf]
        %v507 = vld [vmem:[#allocation9 + $0x30] sm:$0xf]
        %v508 = vld [vmem:[#allocation9 + $0x34] sm:$0xf]
        %v509 = vld [vmem:[#allocation9 + $0x38] sm:$0xf]
        %v510 = vld [vmem:[#allocation9 + $0x3c] sm:$0xf]
        %v527 = vunpack.c.l.b16 %v495
        %v528 = vunpack.c.l.b16 %v496
        %v529 = vunpack.c.l.b16 %v497
        %v530 = vunpack.c.l.b16 %v498
        %v531 = vunpack.c.l.b16 %v499
        %v532 = vunpack.c.l.b16 %v500
        %v533 = vunpack.c.l.b16 %v501
        %v534 = vunpack.c.l.b16 %v502
        %v535 = vunpack.c.l.b16 %v503
        %v536 = vunpack.c.l.b16 %v504
        %v537 = vunpack.c.l.b16 %v505
        %v538 = vunpack.c.l.b16 %v506
        %v539 = vunpack.c.l.b16 %v507
        %v540 = vunpack.c.l.b16 %v508
        %v541 = vunpack.c.l.b16 %v509
        %v542 = vunpack.c.l.b16 %v510
        %v543 = vpack.c.b16 %v528, %v527
        %v544 = vpack.c.b16 %v530, %v529
        %v545 = vpack.c.b16 %v532, %v531
        %v546 = vpack.c.b16 %v534, %v533
        %v547 = vpack.c.b16 %v536, %v535
        %v548 = vpack.c.b16 %v538, %v537
        %v549 = vpack.c.b16 %v540, %v539
        %v550 = vpack.c.b16 %v542, %v541
        %559 = vmatprep.subr.bf16.mxu0 0
        %560 = vmatpush1.bf16.msra.mxu0 %v543
        %561 = vmatprep.subr.bf16.mxu0 0
        %562 = vmatpush1.bf16.msra.mxu0 %v544
        %563 = vmatprep.subr.bf16.mxu0 0
        %564 = vmatpush1.bf16.msra.mxu0 %v545
        %565 = vmatprep.subr.bf16.mxu0 0
        %566 = vmatpush1.bf16.msra.mxu0 %v546
        %567 = vmatprep.subr.bf16.mxu0 0
        %568 = vmatpush1.bf16.msra.mxu0 %v547
        %569 = vmatprep.subr.bf16.mxu0 0
        %570 = vmatpush1.bf16.msra.mxu0 %v548
        %571 = vmatprep.subr.bf16.mxu0 0
        %572 = vmatpush1.bf16.msra.mxu0 %v549
        %573 = vmatprep.subr.bf16.mxu0 0
        %574 = vmatpush1.bf16.msra.mxu0 %v550
        %575 = vmatprep.subr.bf16.mxu0 0
        %576 = vmatpush1.bf16.msra.mxu0 0
        %577 = vmatprep.subr.bf16.mxu0 0
        %578 = vmatpush1.bf16.msra.mxu0 0
        %579 = vmatprep.subr.bf16.mxu0 0
        %580 = vmatpush1.bf16.msra.mxu0 0
        %581 = vmatprep.subr.bf16.mxu0 0
        %582 = vmatpush1.bf16.msra.mxu0 0
        %583 = vmatprep.subr.bf16.mxu0 0
        %584 = vmatpush1.bf16.msra.mxu0 0
        %585 = vmatprep.subr.bf16.mxu0 0
        %586 = vmatpush1.bf16.msra.mxu0 0
        %587 = vmatprep.subr.bf16.mxu0 0
        %588 = vmatpush1.bf16.msra.mxu0 0
        %589 = vmatprep.subr.bf16.mxu0 0
        %590 = vmatpush1.bf16.msra.mxu0 0
        %591 = vmatprep.mubr.bf16.mxu0 0
        %592 = vmatmul.mubr.bf16.gmra.mrb[0].mxu0 %v493
        %v593 = vpop.f32.mrb[0].mxu0
        %v594 = vadd.f32 0.0, %v593
        %v595 = vpop.f32.mrb[0].mxu0
        %v596 = vpop.f32.mrb[0].mxu0
        %v597 = vpop.f32.mrb[0].mxu0
        %598 = vdwg.mxu0
        %v599 = vadd.f32 %v494, %v594
        %600 = vst.msk [vmem:[#allocation2] sm:$0xff] %vm448, %v599
        // Predicated region
        $region81: #{transformer_decoder_forward.8} parent=47 // pred_check
          %p601 = pneg %p410
        $region82: #{transformer_decoder_forward.8} parent=47 // pred_check_branch
          %603 = sbr.rel (%p601) target = $region84
        $region83: #{transformer_decoder_forward.8} parent=47 // pred_region
          %v604 = vld [vmem:[#allocation2] sm:$0xff]
          %v605 = vsel %vm448, %v604, 0.0
          %606 = vadd.xlane.f32.xlu0 %v605
          %v607 = vpop.xlane.xlu0 %606
          %v608 = vrcp.pop 32.0
          %v609 = vmul.f32 %v607, %v608
          %v610 = vsub.f32 %v604, %v609
          %v611 = vmul.f32 %v610, %v610
          %v612 = vsel %vm448, %v611, 0.0
          %613 = vadd.xlane.f32.xlu0 %v612
          %v614 = vpop.xlane.xlu0 %613
          %v615 = vmul.f32 %v614, %v608
          %v616 = vadd.f32 %v615, 1e-05
          %v617 = vrsqrt.pop %v616
          %v618 = vmul.f32 %v610, %v617
          %v619 = vld [vmem:[#allocation12] sm:$0x1]
          %v621 = vlaneseq
          %v622 = vshrl.u32 %v621, 7
          %v623 = vsub.s32 0, %v622
          %v624 = vrot.slane %v619, %v623
          %v626 = vmul.f32 %v618, %v624
          %v627 = vld [vmem:[#allocation14] sm:$0x1]
          %v629 = vlaneseq
          %v630 = vshrl.u32 %v629, 7
          %v631 = vsub.s32 0, %v630
          %v632 = vrot.slane %v627, %v631
          %v634 = vadd.f32 %v626, %v632
          %v635 = vpack.c.bf16 %v634, %v634
          %vm636 = vcmask 257024
          %637 = vst.msk [vmem:[%s406] sm:$0xf] %vm636, %v635
        $region84: #{transformer_decoder_forward.8} parent=47 // pred_fallthru
          _
        %s638 = sand.u32 %s214, 1
        %s639 = scalar_lea.sflag [#allocation5], %s638
        %s640 = sand.u32 %s214, 1
        %s641 = smul.addr %s640, 4
        %s642 = scalar_lea.vmem [#allocation15], %s641
        // Predicated region
        $region85: #{transformer_decoder_forward.8} parent=47 // pred_check
          %p643 = pneg %p224
        $region86: #{transformer_decoder_forward.8} parent=47 // pred_check_branch
          %645 = sbr.rel (%p643) target = $region88
        $region87: #{transformer_decoder_forward.8} parent=47 // pred_region
          %s647 = ssub.s32 64, 64
          %648 = vsyncadd %s639, %s647
          %s649 = smul.addr %s31, 64
          %s650 = scalar_lea.hbm %s7, %s649
          %s652 = sshll.u32 %s642, 4
          %s653 = int_to_ptr.vmem [resolvable:$true] %s652
          %655 = dma.vmem_to_hbm [thread:$0]  %s653, 64, %s650, %s639
        $region88: #{transformer_decoder_forward.8} parent=47 // pred_fallthru
          _
      $region48: #{transformer_decoder_forward.8} parent=5 // pred_fallthru
        _
      %p656 = scmp.le.s32.totalorder 2, %s22
      // Predicated region
      $region89: #{transformer_decoder_forward.8} parent=5 // pred_check
        %p657 = pneg %p656
      $region90: #{transformer_decoder_forward.8} parent=5 // pred_check_branch
        %659 = sbr.rel (%p657) target = $region92
      $region91: #{transformer_decoder_forward.8} parent=5 // pred_region
        %s660 = ssub.s32 %s22, 2
        // Predicated region
        $region93: #{transformer_decoder_forward.8} parent=91 // pred_check
          %p661 = pneg %p230
        $region94: #{transformer_decoder_forward.8} parent=91 // pred_check_branch
          %663 = sbr.rel (%p661) target = $region96
        $region95: #{transformer_decoder_forward.8} parent=91 // pred_region
          %s664 = sand.u32 %s215, 1
          %s665 = scalar_lea.sflag [#allocation5], %s664
          %s666 = sand.u32 %s215, 1
          %s667 = smul.addr %s666, 4
          %s668 = scalar_lea.vmem [#allocation15], %s667
          %669 = dma.done %s665, 64
        $region96: #{transformer_decoder_forward.8} parent=91 // pred_fallthru
          _
      $region92: #{transformer_decoder_forward.8} parent=5 // pred_fallthru
        _
    $region6: #{transformer_decoder_forward.8} parent=1 // loop_footer
      %s26 = sadd.s32 1, %s22
    $region7: #{transformer_decoder_forward.8} parent=1 // loop_footer_branch
      %21 = sbr.rel target = $region3
    $region8: #{transformer_decoder_forward.8} parent=1 // loop_exit
      _
    %670 = vsyncpa [#allocation4], 1
    %s671 = scalar_lea.sflag [#allocation4], 1
    %672 = vsyncpa %s671, 1
    %673 = vsyncpa [#allocation7], 1
    %674 = vsyncpa [#allocation10], 1
    %675 = vsyncpa [#allocation13], 1
    %676 = vsyncpa [#allocation5], 1
    %s677 = scalar_lea.sflag [#allocation5], 1
    %678 = vsyncpa %s677, 1

// kernel: transformer_decoder_forward.7
$region0: #{transformer_decoder_forward.7}
  #allocation0 [shape = 'u32[]', space=smem, size = 0x4, offset = 0x4, fixed_abs, tag = 'smem constant byte address 0x4 - core index']
  #allocation1 [shape = 'u32[144,128]{1,0:T(1,128)}', space=vmem, size = 0x12000, scoped, tag = 'internal scratch']
  #allocation2 [shape = 'f32[8,32]{1,0:T(8,128)}', space=vmem, size = 0x1000, scoped, tag = 'scratch operand']
  %s0 = inlined_call_operand.hbm [shape: bf16[2,8,32], index: 0, kind: input, shape index: {}]
  %s1 = inlined_call_operand.hbm [shape: bf16[2,8,32], index: 1, kind: input, shape index: {}]
  %s2 = inlined_call_operand.hbm [shape: bf16[32,32], index: 2, kind: input, shape index: {}]
  %s3 = inlined_call_operand.hbm [shape: f32[1,32], index: 3, kind: input, shape index: {}]
  %s4 = inlined_call_operand.hbm [shape: bf16[32,32], index: 4, kind: input, shape index: {}]
  %s5 = inlined_call_operand.hbm [shape: f32[1,32], index: 5, kind: input, shape index: {}]
  %s6 = inlined_call_operand.hbm [shape: bf16[32,32], index: 6, kind: input, shape index: {}]
  %s7 = inlined_call_operand.hbm [shape: f32[1,32], index: 7, kind: input, shape index: {}]
  %s8 = inlined_call_operand.hbm [shape: bf16[32,32], index: 8, kind: input, shape index: {}]
  %s9 = inlined_call_operand.hbm [shape: f32[1,32], index: 9, kind: input, shape index: {}]
  %s10 = inlined_call_operand.hbm [shape: f32[1,32], index: 10, kind: input, shape index: {}]
  %s11 = inlined_call_operand.hbm [shape: f32[1,32], index: 11, kind: input, shape index: {}]
  %s12 = inlined_call_operand.hbm [shape: bf16[2,8,32], index: 12, kind: output, shape index: {}]
  %s13 = sld [smem:[#allocation0]]
  $region137: #{transformer_decoder_forward.7} parent=0
    _
  %s15 = ssub.s32 1, %s13
  %s16 = scalar_select 0, %s15, %s13
  $region1: #{transformer_decoder_forward.7} parent=0
    #allocation3 [shape = 'u8[4096]{0}', space=vmem, size = 0x1000, scoped, tag = 'input window, operand 0']
    #allocation4 [shape = 's32[2]{0}', space=sflag, size = 0x8, scoped, tag = 'scoped memory for transformer_decoder_forward.7']
    #allocation5 [shape = 's32[2]{0}', space=sflag, size = 0x8, scoped, tag = 'scoped memory for transformer_decoder_forward.7']
    #allocation6 [shape = 'u8[4096]{0}', space=vmem, size = 0x1000, scoped, tag = 'input window, operand 1']
    #allocation7 [shape = 's32[2]{0}', space=sflag, size = 0x8, scoped, tag = 'scoped memory for transformer_decoder_forward.7']
    #allocation8 [shape = 'u8[8192]{0}', space=vmem, size = 0x2000, scoped, tag = 'input window, operand 2, single buffered']
    #allocation9 [shape = 'u8[512]{0}', space=vmem, size = 0x400, scoped, tag = 'input window, operand 3, single buffered']
    #allocation10 [shape = 's32[1]{0}', space=sflag, size = 0x4, scoped, tag = 'scoped memory for transformer_decoder_forward.7']
    #allocation11 [shape = 'u8[8192]{0}', space=vmem, size = 0x2000, scoped, tag = 'input window, operand 4, single buffered']
    #allocation12 [shape = 'u8[512]{0}', space=vmem, size = 0x400, scoped, tag = 'input window, operand 5, single buffered']
    #allocation13 [shape = 's32[1]{0}', space=sflag, size = 0x4, scoped, tag = 'scoped memory for transformer_decoder_forward.7']
    #allocation14 [shape = 'u8[8192]{0}', space=vmem, size = 0x2000, scoped, tag = 'input window, operand 6, single buffered']
    #allocation15 [shape = 'u8[512]{0}', space=vmem, size = 0x400, scoped, tag = 'input window, operand 7, single buffered']
    #allocation16 [shape = 's32[1]{0}', space=sflag, size = 0x4, scoped, tag = 'scoped memory for transformer_decoder_forward.7']
    #allocation17 [shape = 'u8[8192]{0}', space=vmem, size = 0x2000, scoped, tag = 'input window, operand 8, single buffered']
    #allocation18 [shape = 'u8[512]{0}', space=vmem, size = 0x400, scoped, tag = 'input window, operand 9, single buffered']
    #allocation19 [shape = 's32[1]{0}', space=sflag, size = 0x4, scoped, tag = 'scoped memory for transformer_decoder_forward.7']
    #allocation20 [shape = 'u8[512]{0}', space=vmem, size = 0x400, scoped, tag = 'input window, operand 10, single buffered']
    #allocation21 [shape = 'u8[512]{0}', space=vmem, size = 0x400, scoped, tag = 'input window, operand 11, single buffered']
    #allocation22 [shape = 's32[1]{0}', space=sflag, size = 0x4, scoped, tag = 'scoped memory for transformer_decoder_forward.7']
    #allocation23 [shape = 'u8[4096]{0}', space=vmem, size = 0x1000, scoped, tag = 'output window, operand 0']
    %17 = vsyncpa [#allocation4], 0
    %s18 = scalar_lea.sflag [#allocation4], 1
    %19 = vsyncpa %s18, 0
    %20 = vsyncpa [#allocation7], 0
    %s21 = scalar_lea.sflag [#allocation7], 1
    %22 = vsyncpa %s21, 0
    %23 = vsyncpa [#allocation10], 0
    %24 = vsyncpa [#allocation13], 0
    %25 = vsyncpa [#allocation16], 0
    %26 = vsyncpa [#allocation19], 0
    %27 = vsyncpa [#allocation22], 0
    %28 = vsyncpa [#allocation5], 0
    %s29 = scalar_lea.sflag [#allocation5], 1
    %30 = vsyncpa %s29, 0
    loop: start=0, step=1, limit=4
    $region2: #{transformer_decoder_forward.7} parent=1 // loop_pre_header
      _
    $region3: #{transformer_decoder_forward.7} parent=1 // loop_header
      %s32 = sphi 0, %s36
      %p33 = scmp.ge.s32.totalorder %s32, 4
      %s39 = sphi 0, %s58
      %s40 = sphi 0, %s54
      %s41 = sphi 0, %s50
      %s42 = sphi 0, %s39
      %s43 = sphi 0, %s40
      %s44 = sphi 0, %s41
      %s45 = sphi 0, %s42
      %s46 = sphi 0, %s43
      %s47 = sphi 0, %s44
      %s63 = sphi 0, %s65
      %s66 = sphi 0, %s63
      %s67 = sphi 0, %s66
      %s83 = sphi 0, %s67
      %s89 = sphi 0, %s91
      %s92 = sphi 0, %s89
      %s93 = sphi 0, %s92
      %s109 = sphi 0, %s93
      %s115 = sphi 0, %s117
      %s118 = sphi 0, %s115
      %s119 = sphi 0, %s118
      %s135 = sphi 0, %s119
      %s141 = sphi 0, %s143
      %s144 = sphi 0, %s141
      %s145 = sphi 0, %s144
      %s161 = sphi 0, %s145
      %s167 = sphi 0, %s169
      %s170 = sphi 0, %s167
      %s171 = sphi 0, %s170
      %s187 = sphi 0, %s171
      %s193 = sphi 0, %s195
      %s196 = sphi 0, %s193
      %s197 = sphi 0, %s196
      %s213 = sphi 0, %s197
      %s219 = sphi 0, %s221
      %s222 = sphi 0, %s219
      %s223 = sphi 0, %s222
      %s239 = sphi 0, %s223
      %s245 = sphi 0, %s247
      %s248 = sphi 0, %s245
      %s249 = sphi 0, %s248
      %s265 = sphi 0, %s249
      %s271 = sphi 0, %s273
      %s274 = sphi 0, %s271
      %s275 = sphi 0, %s274
      %s291 = sphi 0, %s275
      %s295 = sphi 0, %s295
      %s297 = sphi 0, %s295
      %s298 = sphi 0, %s297
      %s312 = sphi 0, %s298
      %s316 = sphi 0, %s316
      %s318 = sphi 0, %s316
      %s319 = sphi 0, %s318
      %s333 = sphi 0, %s319
      %s337 = sphi 0, %s337
      %s339 = sphi 0, %s337
      %s340 = sphi 0, %s339
      %s354 = sphi 0, %s340
      %s362 = sphi 0, %s364
      %s365 = sphi 0, %s362
      %s366 = sphi 0, %s365
      %s382 = sphi 0, %s366
    $region4: #{transformer_decoder_forward.7} parent=1 // loop_header_branch
      %35 = sbr.rel (%p33) target = $region8
    $region5: #{transformer_decoder_forward.7} parent=1 // loop_body
      %s37 = ssub.s32 %s32, 1
      %s38 = ssub.s32 %s32, 2
      %s48 = sadd.s32 1, %s41
      %p49 = scmp.ge.s32.totalorder %s48, 1
      %s50 = scalar_select %p49, 0, %s48
      %s51 = sadd.s32 1, %s40
      %s52 = scalar_select %p49, %s51, %s40
      %p53 = scmp.ge.s32.totalorder %s52, 1
      %s54 = scalar_select %p53, 0, %s52
      %s55 = sadd.s32 1, %s39
      %s56 = scalar_select %p53, %s55, %s39
      %p57 = scmp.ge.s32.totalorder %s56, 2
      %s58 = scalar_select %p57, 0, %s56
      %s59 = ssub.s32 %s39, %s58
      %s60 = ssub.s32 %s40, %s54
      %s61 = sor.u32 %s59, %s60
      %p62 = scmp.eq.s32.totalorder %s61, 0
      %s64 = sadd.s32 %s63, 1
      %s65 = scalar_select %p62, %s63, %s64
      %p68 = pneg %p62
      %p69 = scmp.eq.s32.totalorder %s32, 1
      %p70 = por %p68, %p69
      %p71 = scmp.ne.s32.totalorder %s63, %s66
      %p72 = scmp.eq.s32.totalorder %s32, 0
      %p73 = por %p71, %p72
      %p74 = scmp.ne.s32.totalorder %s63, %s66
      %p75 = scmp.eq.s32.totalorder %s37, 1
      %p76 = por %p74, %p75
      %p77 = scmp.ne.s32.totalorder %s66, %s67
      %p78 = scmp.eq.s32.totalorder %s37, 0
      %p79 = por %p77, %p78
      %p80 = scmp.ne.s32.totalorder %s66, %s67
      %p81 = scmp.eq.s32.totalorder %s38, 1
      %p82 = por %p80, %p81
      %p84 = scmp.ne.s32.totalorder %s67, %s83
      %p85 = scmp.eq.s32.totalorder %s38, 0
      %p86 = por %p84, %p85
      %s87 = ssub.s32 %s39, %s58
      %p88 = scmp.eq.s32.totalorder %s87, 0
      %s90 = sadd.s32 %s89, 1
      %s91 = scalar_select %p88, %s89, %s90
      %p94 = pneg %p88
      %p95 = scmp.eq.s32.totalorder %s32, 1
      %p96 = por %p94, %p95
      %p97 = scmp.ne.s32.totalorder %s89, %s92
      %p98 = scmp.eq.s32.totalorder %s32, 0
      %p99 = por %p97, %p98
      %p100 = scmp.ne.s32.totalorder %s89, %s92
      %p101 = scmp.eq.s32.totalorder %s37, 1
      %p102 = por %p100, %p101
      %p103 = scmp.ne.s32.totalorder %s92, %s93
      %p104 = scmp.eq.s32.totalorder %s37, 0
      %p105 = por %p103, %p104
      %p106 = scmp.ne.s32.totalorder %s92, %s93
      %p107 = scmp.eq.s32.totalorder %s38, 1
      %p108 = por %p106, %p107
      %p110 = scmp.ne.s32.totalorder %s93, %s109
      %p111 = scmp.eq.s32.totalorder %s38, 0
      %p112 = por %p110, %p111
      %s113 = ssub.s32 %s41, %s50
      %p114 = scmp.eq.s32.totalorder %s113, 0
      %s116 = sadd.s32 %s115, 1
      %s117 = scalar_select %p114, %s115, %s116
      %p120 = pneg %p114
      %p121 = scmp.eq.s32.totalorder %s32, 1
      %p122 = por %p120, %p121
      %p123 = scmp.ne.s32.totalorder %s115, %s118
      %p124 = scmp.eq.s32.totalorder %s32, 0
      %p125 = por %p123, %p124
      %p126 = scmp.ne.s32.totalorder %s115, %s118
      %p127 = scmp.eq.s32.totalorder %s37, 1
      %p128 = por %p126, %p127
      %p129 = scmp.ne.s32.totalorder %s118, %s119
      %p130 = scmp.eq.s32.totalorder %s37, 0
      %p131 = por %p129, %p130
      %p132 = scmp.ne.s32.totalorder %s118, %s119
      %p133 = scmp.eq.s32.totalorder %s38, 1
      %p134 = por %p132, %p133
      %p136 = scmp.ne.s32.totalorder %s119, %s135
      %p137 = scmp.eq.s32.totalorder %s38, 0
      %p138 = por %p136, %p137
      %s139 = ssub.s32 %s41, %s50
      %p140 = scmp.eq.s32.totalorder %s139, 0
      %s142 = sadd.s32 %s141, 1
      %s143 = scalar_select %p140, %s141, %s142
      %p146 = pneg %p140
      %p147 = scmp.eq.s32.totalorder %s32, 1
      %p148 = por %p146, %p147
      %p149 = scmp.ne.s32.totalorder %s141, %s144
      %p150 = scmp.eq.s32.totalorder %s32, 0
      %p151 = por %p149, %p150
      %p152 = scmp.ne.s32.totalorder %s141, %s144
      %p153 = scmp.eq.s32.totalorder %s37, 1
      %p154 = por %p152, %p153
      %p155 = scmp.ne.s32.totalorder %s144, %s145
      %p156 = scmp.eq.s32.totalorder %s37, 0
      %p157 = por %p155, %p156
      %p158 = scmp.ne.s32.totalorder %s144, %s145
      %p159 = scmp.eq.s32.totalorder %s38, 1
      %p160 = por %p158, %p159
      %p162 = scmp.ne.s32.totalorder %s145, %s161
      %p163 = scmp.eq.s32.totalorder %s38, 0
      %p164 = por %p162, %p163
      %s165 = ssub.s32 %s41, %s50
      %p166 = scmp.eq.s32.totalorder %s165, 0
      %s168 = sadd.s32 %s167, 1
      %s169 = scalar_select %p166, %s167, %s168
      %p172 = pneg %p166
      %p173 = scmp.eq.s32.totalorder %s32, 1
      %p174 = por %p172, %p173
      %p175 = scmp.ne.s32.totalorder %s167, %s170
      %p176 = scmp.eq.s32.totalorder %s32, 0
      %p177 = por %p175, %p176
      %p178 = scmp.ne.s32.totalorder %s167, %s170
      %p179 = scmp.eq.s32.totalorder %s37, 1
      %p180 = por %p178, %p179
      %p181 = scmp.ne.s32.totalorder %s170, %s171
      %p182 = scmp.eq.s32.totalorder %s37, 0
      %p183 = por %p181, %p182
      %p184 = scmp.ne.s32.totalorder %s170, %s171
      %p185 = scmp.eq.s32.totalorder %s38, 1
      %p186 = por %p184, %p185
      %p188 = scmp.ne.s32.totalorder %s171, %s187
      %p189 = scmp.eq.s32.totalorder %s38, 0
      %p190 = por %p188, %p189
      %s191 = ssub.s32 %s41, %s50
      %p192 = scmp.eq.s32.totalorder %s191, 0
      %s194 = sadd.s32 %s193, 1
      %s195 = scalar_select %p192, %s193, %s194
      %p198 = pneg %p192
      %p199 = scmp.eq.s32.totalorder %s32, 1
      %p200 = por %p198, %p199
      %p201 = scmp.ne.s32.totalorder %s193, %s196
      %p202 = scmp.eq.s32.totalorder %s32, 0
      %p203 = por %p201, %p202
      %p204 = scmp.ne.s32.totalorder %s193, %s196
      %p205 = scmp.eq.s32.totalorder %s37, 1
      %p206 = por %p204, %p205
      %p207 = scmp.ne.s32.totalorder %s196, %s197
      %p208 = scmp.eq.s32.totalorder %s37, 0
      %p209 = por %p207, %p208
      %p210 = scmp.ne.s32.totalorder %s196, %s197
      %p211 = scmp.eq.s32.totalorder %s38, 1
      %p212 = por %p210, %p211
      %p214 = scmp.ne.s32.totalorder %s197, %s213
      %p215 = scmp.eq.s32.totalorder %s38, 0
      %p216 = por %p214, %p215
      %s217 = ssub.s32 %s41, %s50
      %p218 = scmp.eq.s32.totalorder %s217, 0
      %s220 = sadd.s32 %s219, 1
      %s221 = scalar_select %p218, %s219, %s220
      %p224 = pneg %p218
      %p225 = scmp.eq.s32.totalorder %s32, 1
      %p226 = por %p224, %p225
      %p227 = scmp.ne.s32.totalorder %s219, %s222
      %p228 = scmp.eq.s32.totalorder %s32, 0
      %p229 = por %p227, %p228
      %p230 = scmp.ne.s32.totalorder %s219, %s222
      %p231 = scmp.eq.s32.totalorder %s37, 1
      %p232 = por %p230, %p231
      %p233 = scmp.ne.s32.totalorder %s222, %s223
      %p234 = scmp.eq.s32.totalorder %s37, 0
      %p235 = por %p233, %p234
      %p236 = scmp.ne.s32.totalorder %s222, %s223
      %p237 = scmp.eq.s32.totalorder %s38, 1
      %p238 = por %p236, %p237
      %p240 = scmp.ne.s32.totalorder %s223, %s239
      %p241 = scmp.eq.s32.totalorder %s38, 0
      %p242 = por %p240, %p241
      %s243 = ssub.s32 %s41, %s50
      %p244 = scmp.eq.s32.totalorder %s243, 0
      %s246 = sadd.s32 %s245, 1
      %s247 = scalar_select %p244, %s245, %s246
      %p250 = pneg %p244
      %p251 = scmp.eq.s32.totalorder %s32, 1
      %p252 = por %p250, %p251
      %p253 = scmp.ne.s32.totalorder %s245, %s248
      %p254 = scmp.eq.s32.totalorder %s32, 0
      %p255 = por %p253, %p254
      %p256 = scmp.ne.s32.totalorder %s245, %s248
      %p257 = scmp.eq.s32.totalorder %s37, 1
      %p258 = por %p256, %p257
      %p259 = scmp.ne.s32.totalorder %s248, %s249
      %p260 = scmp.eq.s32.totalorder %s37, 0
      %p261 = por %p259, %p260
      %p262 = scmp.ne.s32.totalorder %s248, %s249
      %p263 = scmp.eq.s32.totalorder %s38, 1
      %p264 = por %p262, %p263
      %p266 = scmp.ne.s32.totalorder %s249, %s265
      %p267 = scmp.eq.s32.totalorder %s38, 0
      %p268 = por %p266, %p267
      %s269 = ssub.s32 %s41, %s50
      %p270 = scmp.eq.s32.totalorder %s269, 0
      %s272 = sadd.s32 %s271, 1
      %s273 = scalar_select %p270, %s271, %s272
      %p276 = pneg %p270
      %p277 = scmp.eq.s32.totalorder %s32, 1
      %p278 = por %p276, %p277
      %p279 = scmp.ne.s32.totalorder %s271, %s274
      %p280 = scmp.eq.s32.totalorder %s32, 0
      %p281 = por %p279, %p280
      %p282 = scmp.ne.s32.totalorder %s271, %s274
      %p283 = scmp.eq.s32.totalorder %s37, 1
      %p284 = por %p282, %p283
      %p285 = scmp.ne.s32.totalorder %s274, %s275
      %p286 = scmp.eq.s32.totalorder %s37, 0
      %p287 = por %p285, %p286
      %p288 = scmp.ne.s32.totalorder %s274, %s275
      %p289 = scmp.eq.s32.totalorder %s38, 1
      %p290 = por %p288, %p289
      %p292 = scmp.ne.s32.totalorder %s275, %s291
      %p293 = scmp.eq.s32.totalorder %s38, 0
      %p294 = por %p292, %p293
      %s296 = sadd.s32 %s295, 1
      %p299 = scmp.eq.s32.totalorder %s32, 1
      %p300 = scmp.ne.s32.totalorder %s295, %s297
      %p301 = scmp.eq.s32.totalorder %s32, 0
      %p302 = por %p300, %p301
      %p303 = scmp.ne.s32.totalorder %s295, %s297
      %p304 = scmp.eq.s32.totalorder %s37, 1
      %p305 = por %p303, %p304
      %p306 = scmp.ne.s32.totalorder %s297, %s298
      %p307 = scmp.eq.s32.totalorder %s37, 0
      %p308 = por %p306, %p307
      %p309 = scmp.ne.s32.totalorder %s297, %s298
      %p310 = scmp.eq.s32.totalorder %s38, 1
      %p311 = por %p309, %p310
      %p313 = scmp.ne.s32.totalorder %s298, %s312
      %p314 = scmp.eq.s32.totalorder %s38, 0
      %p315 = por %p313, %p314
      %s317 = sadd.s32 %s316, 1
      %p320 = scmp.eq.s32.totalorder %s32, 1
      %p321 = scmp.ne.s32.totalorder %s316, %s318
      %p322 = scmp.eq.s32.totalorder %s32, 0
      %p323 = por %p321, %p322
      %p324 = scmp.ne.s32.totalorder %s316, %s318
      %p325 = scmp.eq.s32.totalorder %s37, 1
      %p326 = por %p324, %p325
      %p327 = scmp.ne.s32.totalorder %s318, %s319
      %p328 = scmp.eq.s32.totalorder %s37, 0
      %p329 = por %p327, %p328
      %p330 = scmp.ne.s32.totalorder %s318, %s319
      %p331 = scmp.eq.s32.totalorder %s38, 1
      %p332 = por %p330, %p331
      %p334 = scmp.ne.s32.totalorder %s319, %s333
      %p335 = scmp.eq.s32.totalorder %s38, 0
      %p336 = por %p334, %p335
      %s338 = sadd.s32 %s337, 1
      %p341 = scmp.eq.s32.totalorder %s32, 1
      %p342 = scmp.ne.s32.totalorder %s337, %s339
      %p343 = scmp.eq.s32.totalorder %s32, 0
      %p344 = por %p342, %p343
      %p345 = scmp.ne.s32.totalorder %s337, %s339
      %p346 = scmp.eq.s32.totalorder %s37, 1
      %p347 = por %p345, %p346
      %p348 = scmp.ne.s32.totalorder %s339, %s340
      %p349 = scmp.eq.s32.totalorder %s37, 0
      %p350 = por %p348, %p349
      %p351 = scmp.ne.s32.totalorder %s339, %s340
      %p352 = scmp.eq.s32.totalorder %s38, 1
      %p353 = por %p351, %p352
      %p355 = scmp.ne.s32.totalorder %s340, %s354
      %p356 = scmp.eq.s32.totalorder %s38, 0
      %p357 = por %p355, %p356
      %s358 = ssub.s32 %s39, %s58
      %s359 = ssub.s32 %s40, %s54
      %s360 = sor.u32 %s358, %s359
      %p361 = scmp.eq.s32.totalorder %s360, 0
      %s363 = sadd.s32 %s362, 1
      %s364 = scalar_select %p361, %s362, %s363
      %p367 = pneg %p361
      %p368 = scmp.eq.s32.totalorder %s32, 1
      %p369 = por %p367, %p368
      %p370 = scmp.ne.s32.totalorder %s362, %s365
      %p371 = scmp.eq.s32.totalorder %s32, 0
      %p372 = por %p370, %p371
      %p373 = scmp.ne.s32.totalorder %s362, %s365
      %p374 = scmp.eq.s32.totalorder %s37, 1
      %p375 = por %p373, %p374
      %p376 = scmp.ne.s32.totalorder %s365, %s366
      %p377 = scmp.eq.s32.totalorder %s37, 0
      %p378 = por %p376, %p377
      %p379 = scmp.ne.s32.totalorder %s365, %s366
      %p380 = scmp.eq.s32.totalorder %s38, 1
      %p381 = por %p379, %p380
      %p383 = scmp.ne.s32.totalorder %s366, %s382
      %p384 = scmp.eq.s32.totalorder %s38, 0
      %p385 = por %p383, %p384
      %p386 = scmp.le.s32.totalorder 1, %s32
      %p387 = scmp.lt.s32.totalorder %s32, 3
      %p388 = pnand %p386, %p387
      %p389 = pneg %p388
      // Predicated region
      $region9: #{transformer_decoder_forward.7} parent=5 // pred_check
        _
      $region10: #{transformer_decoder_forward.7} parent=5 // pred_check_branch
        %391 = sbr.rel (%p388) target = $region12
      $region11: #{transformer_decoder_forward.7} parent=5 // pred_region
        %s392 = ssub.s32 %s32, 1
        // Predicated region
        $region13: #{transformer_decoder_forward.7} parent=11 // pred_check
          %p393 = pneg %p131
        $region14: #{transformer_decoder_forward.7} parent=11 // pred_check_branch
          %395 = sbr.rel (%p393) target = $region16
        $region15: #{transformer_decoder_forward.7} parent=11 // pred_region
          %s397 = ssub.s32 256, 256
          %398 = vsyncadd [#allocation7], %s397
          %s399 = smul.addr %s44, 64
          %s400 = scalar_lea.hbm %s2, %s399
          %s401 = sshll.u32 [#allocation8], 4
          %s402 = int_to_ptr.vmem [resolvable:$true] %s401
          %407 = dma.hbm_to_vmem [thread:$0]  %s400, 256, %s402, [#allocation7], 64, 64, 4
        $region16: #{transformer_decoder_forward.7} parent=11 // pred_fallthru
          _
        // Predicated region
        $region17: #{transformer_decoder_forward.7} parent=11 // pred_check
          %p408 = pneg %p157
        $region18: #{transformer_decoder_forward.7} parent=11 // pred_check_branch
          %410 = sbr.rel (%p408) target = $region20
        $region19: #{transformer_decoder_forward.7} parent=11 // pred_region
          %s412 = ssub.s32 16, 16
          %413 = vsyncadd [#allocation10], %s412
          %s414 = smul.addr %s44, 16
          %s415 = scalar_lea.hbm %s3, %s414
          %s417 = sshll.u32 [#allocation9], 4
          %s418 = int_to_ptr.vmem [resolvable:$true] %s417
          %420 = dma.hbm_to_vmem [thread:$0]  %s415, 16, %s418, [#allocation10]
        $region20: #{transformer_decoder_forward.7} parent=11 // pred_fallthru
          _
        // Predicated region
        $region21: #{transformer_decoder_forward.7} parent=11 // pred_check
          %p421 = pneg %p183
        $region22: #{transformer_decoder_forward.7} parent=11 // pred_check_branch
          %423 = sbr.rel (%p421) target = $region24
        $region23: #{transformer_decoder_forward.7} parent=11 // pred_region
          %s425 = ssub.s32 256, 256
          %426 = vsyncadd [#allocation10], %s425
          %s427 = smul.addr %s44, 64
          %s428 = scalar_lea.hbm %s4, %s427
          %s429 = sshll.u32 [#allocation11], 4
          %s430 = int_to_ptr.vmem [resolvable:$true] %s429
          %435 = dma.hbm_to_vmem [thread:$0]  %s428, 256, %s430, [#allocation10], 64, 64, 4
        $region24: #{transformer_decoder_forward.7} parent=11 // pred_fallthru
          _
        // Predicated region
        $region25: #{transformer_decoder_forward.7} parent=11 // pred_check
          %p436 = pneg %p209
        $region26: #{transformer_decoder_forward.7} parent=11 // pred_check_branch
          %438 = sbr.rel (%p436) target = $region28
        $region27: #{transformer_decoder_forward.7} parent=11 // pred_region
          %s440 = ssub.s32 16, 16
          %441 = vsyncadd [#allocation13], %s440
          %s442 = smul.addr %s44, 16
          %s443 = scalar_lea.hbm %s5, %s442
          %s445 = sshll.u32 [#allocation12], 4
          %s446 = int_to_ptr.vmem [resolvable:$true] %s445
          %448 = dma.hbm_to_vmem [thread:$0]  %s443, 16, %s446, [#allocation13]
        $region28: #{transformer_decoder_forward.7} parent=11 // pred_fallthru
          _
        // Predicated region
        $region29: #{transformer_decoder_forward.7} parent=11 // pred_check
          %p449 = pneg %p235
        $region30: #{transformer_decoder_forward.7} parent=11 // pred_check_branch
          %451 = sbr.rel (%p449) target = $region32
        $region31: #{transformer_decoder_forward.7} parent=11 // pred_region
          %s453 = ssub.s32 256, 256
          %454 = vsyncadd [#allocation13], %s453
          %s455 = smul.addr %s44, 64
          %s456 = scalar_lea.hbm %s6, %s455
          %s457 = sshll.u32 [#allocation14], 4
          %s458 = int_to_ptr.vmem [resolvable:$true] %s457
          %463 = dma.hbm_to_vmem [thread:$0]  %s456, 256, %s458, [#allocation13], 64, 64, 4
        $region32: #{transformer_decoder_forward.7} parent=11 // pred_fallthru
          _
        // Predicated region
        $region33: #{transformer_decoder_forward.7} parent=11 // pred_check
          %p464 = pneg %p261
        $region34: #{transformer_decoder_forward.7} parent=11 // pred_check_branch
          %466 = sbr.rel (%p464) target = $region36
        $region35: #{transformer_decoder_forward.7} parent=11 // pred_region
          %s468 = ssub.s32 16, 16
          %469 = vsyncadd [#allocation16], %s468
          %s470 = smul.addr %s44, 16
          %s471 = scalar_lea.hbm %s7, %s470
          %s473 = sshll.u32 [#allocation15], 4
          %s474 = int_to_ptr.vmem [resolvable:$true] %s473
          %476 = dma.hbm_to_vmem [thread:$0]  %s471, 16, %s474, [#allocation16]
        $region36: #{transformer_decoder_forward.7} parent=11 // pred_fallthru
          _
        // Predicated region
        $region37: #{transformer_decoder_forward.7} parent=11 // pred_check
          %p477 = pneg %p287
        $region38: #{transformer_decoder_forward.7} parent=11 // pred_check_branch
          %479 = sbr.rel (%p477) target = $region40
        $region39: #{transformer_decoder_forward.7} parent=11 // pred_region
          %s480 = smul.u32 4, %s44
          %s482 = ssub.s32 256, 256
          %483 = vsyncadd [#allocation16], %s482
          %s484 = smul.addr %s480, 64
          %s485 = scalar_lea.hbm %s8, %s484
          %s486 = sshll.u32 [#allocation17], 4
          %s487 = int_to_ptr.vmem [resolvable:$true] %s486
          %492 = dma.hbm_to_vmem [thread:$0]  %s485, 256, %s487, [#allocation16], 64, 64, 4
        $region40: #{transformer_decoder_forward.7} parent=11 // pred_fallthru
          _
        // Predicated region
        $region41: #{transformer_decoder_forward.7} parent=11 // pred_check
          %p493 = pneg %p308
        $region42: #{transformer_decoder_forward.7} parent=11 // pred_check_branch
          %495 = sbr.rel (%p493) target = $region44
        $region43: #{transformer_decoder_forward.7} parent=11 // pred_region
          %s497 = ssub.s32 16, 16
          %498 = vsyncadd [#allocation19], %s497
          %s500 = sshll.u32 [#allocation18], 4
          %s501 = int_to_ptr.vmem [resolvable:$true] %s500
          %503 = dma.hbm_to_vmem [thread:$0]  %s9, 16, %s501, [#allocation19]
        $region44: #{transformer_decoder_forward.7} parent=11 // pred_fallthru
          _
        // Predicated region
        $region45: #{transformer_decoder_forward.7} parent=11 // pred_check
          %p504 = pneg %p329
        $region46: #{transformer_decoder_forward.7} parent=11 // pred_check_branch
          %506 = sbr.rel (%p504) target = $region48
        $region47: #{transformer_decoder_forward.7} parent=11 // pred_region
          %s508 = ssub.s32 16, 16
          %509 = vsyncadd [#allocation19], %s508
          %s511 = sshll.u32 [#allocation20], 4
          %s512 = int_to_ptr.vmem [resolvable:$true] %s511
          %514 = dma.hbm_to_vmem [thread:$0]  %s10, 16, %s512, [#allocation19]
        $region48: #{transformer_decoder_forward.7} parent=11 // pred_fallthru
          _
        // Predicated region
        $region49: #{transformer_decoder_forward.7} parent=11 // pred_check
          %p515 = pneg %p350
        $region50: #{transformer_decoder_forward.7} parent=11 // pred_check_branch
          %517 = sbr.rel (%p515) target = $region52
        $region51: #{transformer_decoder_forward.7} parent=11 // pred_region
          %s519 = ssub.s32 16, 16
          %520 = vsyncadd [#allocation22], %s519
          %s522 = sshll.u32 [#allocation21], 4
          %s523 = int_to_ptr.vmem [resolvable:$true] %s522
          %525 = dma.hbm_to_vmem [thread:$0]  %s11, 16, %s523, [#allocation22]
        $region52: #{transformer_decoder_forward.7} parent=11 // pred_fallthru
          _
      $region12: #{transformer_decoder_forward.7} parent=5 // pred_fallthru
        _
      %p526 = scmp.lt.s32.totalorder %s32, 2
      // Predicated region
      $region53: #{transformer_decoder_forward.7} parent=5 // pred_check
        %p527 = pneg %p526
      $region54: #{transformer_decoder_forward.7} parent=5 // pred_check_branch
        %529 = sbr.rel (%p527) target = $region56
      $region55: #{transformer_decoder_forward.7} parent=5 // pred_region
        // Predicated region
        $region57: #{transformer_decoder_forward.7} parent=55 // pred_check
          %p530 = pneg %p73
        $region58: #{transformer_decoder_forward.7} parent=55 // pred_check_branch
          %532 = sbr.rel (%p530) target = $region60
        $region59: #{transformer_decoder_forward.7} parent=55 // pred_region
          %s533 = sand.u32 %s63, 1
          %s534 = scalar_lea.sflag [#allocation4], %s533
          %s535 = sand.u32 %s63, 1
          %s536 = smul.addr %s535, 4
          %s537 = scalar_lea.vmem [#allocation3], %s536
          %s539 = ssub.s32 64, 64
          %540 = vsyncadd %s534, %s539
          %s541 = sadd.s32 %s40, %s39
          %s542 = smul.addr %s541, 64
          %s543 = scalar_lea.hbm %s0, %s542
          %s545 = sshll.u32 %s537, 4
          %s546 = int_to_ptr.vmem [resolvable:$true] %s545
          %548 = dma.hbm_to_vmem [thread:$0]  %s543, 64, %s546, %s534
        $region60: #{transformer_decoder_forward.7} parent=55 // pred_fallthru
          _
        // Predicated region
        $region61: #{transformer_decoder_forward.7} parent=55 // pred_check
          %p549 = pneg %p99
        $region62: #{transformer_decoder_forward.7} parent=55 // pred_check_branch
          %551 = sbr.rel (%p549) target = $region64
        $region63: #{transformer_decoder_forward.7} parent=55 // pred_region
          %s552 = sand.u32 %s32, 1
          %s553 = scalar_lea.sflag [#allocation7], %s552
          %s554 = sand.u32 %s89, 1
          %s555 = smul.addr %s554, 4
          %s556 = scalar_lea.vmem [#allocation6], %s555
          %s558 = ssub.s32 64, 64
          %559 = vsyncadd %s553, %s558
          %s560 = smul.addr %s39, 64
          %s561 = scalar_lea.hbm %s1, %s560
          %s563 = sshll.u32 %s556, 4
          %s564 = int_to_ptr.vmem [resolvable:$true] %s563
          %566 = dma.hbm_to_vmem [thread:$0]  %s561, 64, %s564, %s553
        $region64: #{transformer_decoder_forward.7} parent=55 // pred_fallthru
          _
      $region56: #{transformer_decoder_forward.7} parent=5 // pred_fallthru
        _
      %p567 = scmp.le.s32.totalorder 1, %s32
      %p568 = scmp.lt.s32.totalorder %s32, 3
      %p569 = pnand %p567, %p568
      %p570 = pneg %p569
      // Predicated region
      $region65: #{transformer_decoder_forward.7} parent=5 // pred_check
        _
      $region66: #{transformer_decoder_forward.7} parent=5 // pred_check_branch
        %572 = sbr.rel (%p569) target = $region68
      $region67: #{transformer_decoder_forward.7} parent=5 // pred_region
        %s573 = ssub.s32 %s32, 1
        %s574 = sand.u32 %s66, 1
        %s575 = scalar_lea.sflag [#allocation4], %s574
        %s576 = sand.u32 %s66, 1
        %s577 = smul.addr %s576, 4
        %s578 = scalar_lea.vmem [#allocation3], %s577
        // Predicated region
        $region69: #{transformer_decoder_forward.7} parent=67 // pred_check
          %p579 = pneg %p79
        $region70: #{transformer_decoder_forward.7} parent=67 // pred_check_branch
          %581 = sbr.rel (%p579) target = $region72
        $region71: #{transformer_decoder_forward.7} parent=67 // pred_region
          %582 = dma.done %s575, 64
        $region72: #{transformer_decoder_forward.7} parent=67 // pred_fallthru
          _
        %s583 = sand.u32 %s37, 1
        %s584 = scalar_lea.sflag [#allocation7], %s583
        %s585 = sand.u32 %s92, 1
        %s586 = smul.addr %s585, 4
        %s587 = scalar_lea.vmem [#allocation6], %s586
        // Predicated region
        $region73: #{transformer_decoder_forward.7} parent=67 // pred_check
          %p588 = pneg %p105
        $region74: #{transformer_decoder_forward.7} parent=67 // pred_check_branch
          %590 = sbr.rel (%p588) target = $region76
        $region75: #{transformer_decoder_forward.7} parent=67 // pred_region
          %591 = dma.done %s584, 64
        $region76: #{transformer_decoder_forward.7} parent=67 // pred_fallthru
          _
        // Predicated region
        $region77: #{transformer_decoder_forward.7} parent=67 // pred_check
          %p592 = pneg %p131
        $region78: #{transformer_decoder_forward.7} parent=67 // pred_check_branch
          %594 = sbr.rel (%p592) target = $region80
        $region79: #{transformer_decoder_forward.7} parent=67 // pred_region
          %595 = dma.done [#allocation7], 256
        $region80: #{transformer_decoder_forward.7} parent=67 // pred_fallthru
          _
        // Predicated region
        $region81: #{transformer_decoder_forward.7} parent=67 // pred_check
          %p596 = pneg %p157
        $region82: #{transformer_decoder_forward.7} parent=67 // pred_check_branch
          %598 = sbr.rel (%p596) target = $region84
        $region83: #{transformer_decoder_forward.7} parent=67 // pred_region
          %599 = dma.done [#allocation10], 16
        $region84: #{transformer_decoder_forward.7} parent=67 // pred_fallthru
          _
        // Predicated region
        $region85: #{transformer_decoder_forward.7} parent=67 // pred_check
          %p600 = pneg %p183
        $region86: #{transformer_decoder_forward.7} parent=67 // pred_check_branch
          %602 = sbr.rel (%p600) target = $region88
        $region87: #{transformer_decoder_forward.7} parent=67 // pred_region
          %603 = dma.done [#allocation10], 256
        $region88: #{transformer_decoder_forward.7} parent=67 // pred_fallthru
          _
        // Predicated region
        $region89: #{transformer_decoder_forward.7} parent=67 // pred_check
          %p604 = pneg %p209
        $region90: #{transformer_decoder_forward.7} parent=67 // pred_check_branch
          %606 = sbr.rel (%p604) target = $region92
        $region91: #{transformer_decoder_forward.7} parent=67 // pred_region
          %607 = dma.done [#allocation13], 16
        $region92: #{transformer_decoder_forward.7} parent=67 // pred_fallthru
          _
        // Predicated region
        $region93: #{transformer_decoder_forward.7} parent=67 // pred_check
          %p608 = pneg %p235
        $region94: #{transformer_decoder_forward.7} parent=67 // pred_check_branch
          %610 = sbr.rel (%p608) target = $region96
        $region95: #{transformer_decoder_forward.7} parent=67 // pred_region
          %611 = dma.done [#allocation13], 256
        $region96: #{transformer_decoder_forward.7} parent=67 // pred_fallthru
          _
        // Predicated region
        $region97: #{transformer_decoder_forward.7} parent=67 // pred_check
          %p612 = pneg %p261
        $region98: #{transformer_decoder_forward.7} parent=67 // pred_check_branch
          %614 = sbr.rel (%p612) target = $region100
        $region99: #{transformer_decoder_forward.7} parent=67 // pred_region
          %615 = dma.done [#allocation16], 16
        $region100: #{transformer_decoder_forward.7} parent=67 // pred_fallthru
          _
        // Predicated region
        $region101: #{transformer_decoder_forward.7} parent=67 // pred_check
          %p616 = pneg %p287
        $region102: #{transformer_decoder_forward.7} parent=67 // pred_check_branch
          %618 = sbr.rel (%p616) target = $region104
        $region103: #{transformer_decoder_forward.7} parent=67 // pred_region
          %619 = dma.done [#allocation16], 256
        $region104: #{transformer_decoder_forward.7} parent=67 // pred_fallthru
          _
        // Predicated region
        $region105: #{transformer_decoder_forward.7} parent=67 // pred_check
          %p620 = pneg %p308
        $region106: #{transformer_decoder_forward.7} parent=67 // pred_check_branch
          %622 = sbr.rel (%p620) target = $region108
        $region107: #{transformer_decoder_forward.7} parent=67 // pred_region
          %623 = dma.done [#allocation19], 16
        $region108: #{transformer_decoder_forward.7} parent=67 // pred_fallthru
          _
        // Predicated region
        $region109: #{transformer_decoder_forward.7} parent=67 // pred_check
          %p624 = pneg %p329
        $region110: #{transformer_decoder_forward.7} parent=67 // pred_check_branch
          %626 = sbr.rel (%p624) target = $region112
        $region111: #{transformer_decoder_forward.7} parent=67 // pred_region
          %627 = dma.done [#allocation19], 16
        $region112: #{transformer_decoder_forward.7} parent=67 // pred_fallthru
          _
        // Predicated region
        $region113: #{transformer_decoder_forward.7} parent=67 // pred_check
          %p628 = pneg %p350
        $region114: #{transformer_decoder_forward.7} parent=67 // pred_check_branch
          %630 = sbr.rel (%p628) target = $region116
        $region115: #{transformer_decoder_forward.7} parent=67 // pred_region
          %631 = dma.done [#allocation22], 16
        $region116: #{transformer_decoder_forward.7} parent=67 // pred_fallthru
          _
        %s632 = sand.u32 %s66, 1
        %s633 = scalar_lea.sflag [#allocation4], %s632
        %s634 = sand.u32 %s66, 1
        %s635 = smul.addr %s634, 4
        %s636 = scalar_lea.vmem [#allocation3], %s635
        %p637 = pneg %p79
        %p638 = pneg %p76
        %s639 = sand.u32 %s37, 1
        %s640 = scalar_lea.sflag [#allocation7], %s639
        %s641 = sand.u32 %s92, 1
        %s642 = smul.addr %s641, 4
        %s643 = scalar_lea.vmem [#allocation6], %s642
        %p644 = pneg %p105
        %p645 = pneg %p102
        %p646 = pneg %p131
        %p647 = pneg %p128
        %p648 = pneg %p157
        %p649 = pneg %p154
        %p650 = pneg %p183
        %p651 = pneg %p180
        %p652 = pneg %p209
        %p653 = pneg %p206
        %p654 = pneg %p235
        %p655 = pneg %p232
        %p656 = pneg %p261
        %p657 = pneg %p258
        %p658 = pneg %p287
        %p659 = pneg %p284
        %p660 = pneg %p308
        %p661 = pneg %p305
        %p662 = pneg %p329
        %p663 = pneg %p326
        %p664 = pneg %p350
        %p665 = pneg %p347
        %p666 = pneg %p378
        %p667 = pneg %p375
        %s668 = sand.u32 %s365, 1
        %s669 = scalar_lea.sflag [#allocation5], %s668
        %s670 = sand.u32 %s365, 1
        %s671 = smul.addr %s670, 4
        %s672 = scalar_lea.vmem [#allocation23], %s671
        %s673 = smul.u32 4, %s44
        %v675 = vld [vmem:[%s578] sm:$0xf]
        %v676 = vld [vmem:[%s587] sm:$0xf]
        %p677 = scmp.eq.s32.totalorder %s44, 0
        // Predicated region
        $region117: #{transformer_decoder_forward.7} parent=67 // pred_check
          %p678 = pneg %p677
        $region118: #{transformer_decoder_forward.7} parent=67 // pred_check_branch
          %680 = sbr.rel (%p678) target = $region120
        $region119: #{transformer_decoder_forward.7} parent=67 // pred_region
          %v681 = vunpack.c.l.bf16 %v675
          %v682 = vld [vmem:[#allocation18] sm:$0x1]
          %v684 = vlaneseq
          %v685 = vshrl.u32 %v684, 7
          %v686 = vsub.s32 0, %v685
          %v687 = vrot.slane %v682, %v686
          %v689 = vadd.f32 %v681, %v687
          %vm690 = vcmask 261120
          %691 = vst.msk [vmem:[#allocation2] sm:$0xff] %vm690, %v689
        $region120: #{transformer_decoder_forward.7} parent=67 // pred_fallthru
          _
        %v692 = vld [vmem:[#allocation8] sm:$0xf]
        %v693 = vld [vmem:[#allocation8 + $0x4] sm:$0xf]
        %v694 = vld [vmem:[#allocation8 + $0x8] sm:$0xf]
        %v695 = vld [vmem:[#allocation8 + $0xc] sm:$0xf]
        %v696 = vld [vmem:[#allocation9] sm:$0x1]
        %v698 = vlaneseq
        %v699 = vshrl.u32 %v698, 7
        %v700 = vsub.s32 0, %v699
        %v701 = vrot.slane %v696, %v700
        %v707 = vunpack.c.l.b16 %v692
        %v708 = vunpack.c.l.b16 %v693
        %v709 = vunpack.c.l.b16 %v694
        %v710 = vunpack.c.l.b16 %v695
        %v711 = vpack.c.b16 %v708, %v707
        %v712 = vpack.c.b16 %v710, %v709
        %vm715 = vcmask 261120
        %v717 = vsel %vm715, %v675, 0
        %719 = vmatprep.subr.bf16.mxu0 0
        %720 = vmatpush1.bf16.msra.mxu0 %v711
        %721 = vmatprep.subr.bf16.mxu0 0
        %722 = vmatpush1.bf16.msra.mxu0 %v712
        %723 = vmatprep.subr.bf16.mxu0 0
        %724 = vmatpush1.bf16.msra.mxu0 0
        %725 = vmatprep.subr.bf16.mxu0 0
        %726 = vmatpush1.bf16.msra.mxu0 0
        %727 = vmatprep.subr.bf16.mxu0 0
        %728 = vmatpush1.bf16.msra.mxu0 0
        %729 = vmatprep.subr.bf16.mxu0 0
        %730 = vmatpush1.bf16.msra.mxu0 0
        %731 = vmatprep.subr.bf16.mxu0 0
        %732 = vmatpush1.bf16.msra.mxu0 0
        %733 = vmatprep.subr.bf16.mxu0 0
        %734 = vmatpush1.bf16.msra.mxu0 0
        %735 = vmatprep.subr.bf16.mxu0 0
        %736 = vmatpush1.bf16.msra.mxu0 0
        %737 = vmatprep.subr.bf16.mxu0 0
        %738 = vmatpush1.bf16.msra.mxu0 0
        %739 = vmatprep.subr.bf16.mxu0 0
        %740 = vmatpush1.bf16.msra.mxu0 0
        %741 = vmatprep.subr.bf16.mxu0 0
        %742 = vmatpush1.bf16.msra.mxu0 0
        %743 = vmatprep.subr.bf16.mxu0 0
        %744 = vmatpush1.bf16.msra.mxu0 0
        %745 = vmatprep.subr.bf16.mxu0 0
        %746 = vmatpush1.bf16.msra.mxu0 0
        %747 = vmatprep.subr.bf16.mxu0 0
        %748 = vmatpush1.bf16.msra.mxu0 0
        %749 = vmatprep.subr.bf16.mxu0 0
        %750 = vmatpush1.bf16.msra.mxu0 0
        %751 = vmatprep.mubr.bf16.mxu0 0
        %752 = vmatmul.mubr.bf16.gmra.mrb[0].mxu0 %v717
        %v753 = vpop.f32.mrb[0].mxu0
        %v754 = vadd.f32 %v701, %v753
        %v755 = vpop.f32.mrb[0].mxu0
        %v756 = vpop.f32.mrb[0].mxu0
        %v757 = vpop.f32.mrb[0].mxu0
        %758 = vdwg.mxu0
        %v759 = vpack.c.bf16 %v754, %v754
        %v760 = vld [vmem:[#allocation11] sm:$0xf]
        %v761 = vld [vmem:[#allocation11 + $0x4] sm:$0xf]
        %v762 = vld [vmem:[#allocation11 + $0x8] sm:$0xf]
        %v763 = vld [vmem:[#allocation11 + $0xc] sm:$0xf]
        %v764 = vld [vmem:[#allocation12] sm:$0x1]
        %v766 = vlaneseq
        %v767 = vshrl.u32 %v766, 7
        %v768 = vsub.s32 0, %v767
        %v769 = vrot.slane %v764, %v768
        %v775 = vunpack.c.l.b16 %v760
        %v776 = vunpack.c.l.b16 %v761
        %v777 = vunpack.c.l.b16 %v762
        %v778 = vunpack.c.l.b16 %v763
        %v779 = vpack.c.b16 %v776, %v775
        %v780 = vpack.c.b16 %v778, %v777
        %v784 = vsel %vm715, %v676, 0
        %786 = vmatprep.subr.bf16.mxu0 0
        %787 = vmatpush1.bf16.msra.mxu0 %v779
        %788 = vmatprep.subr.bf16.mxu0 0
        %789 = vmatpush1.bf16.msra.mxu0 %v780
        %790 = vmatprep.subr.bf16.mxu0 0
        %791 = vmatpush1.bf16.msra.mxu0 0
        %792 = vmatprep.subr.bf16.mxu0 0
        %793 = vmatpush1.bf16.msra.mxu0 0
        %794 = vmatprep.subr.bf16.mxu0 0
        %795 = vmatpush1.bf16.msra.mxu0 0
        %796 = vmatprep.subr.bf16.mxu0 0
        %797 = vmatpush1.bf16.msra.mxu0 0
        %798 = vmatprep.subr.bf16.mxu0 0
        %799 = vmatpush1.bf16.msra.mxu0 0
        %800 = vmatprep.subr.bf16.mxu0 0
        %801 = vmatpush1.bf16.msra.mxu0 0
        %802 = vmatprep.subr.bf16.mxu0 0
        %803 = vmatpush1.bf16.msra.mxu0 0
        %804 = vmatprep.subr.bf16.mxu0 0
        %805 = vmatpush1.bf16.msra.mxu0 0
        %806 = vmatprep.subr.bf16.mxu0 0
        %807 = vmatpush1.bf16.msra.mxu0 0
        %808 = vmatprep.subr.bf16.mxu0 0
        %809 = vmatpush1.bf16.msra.mxu0 0
        %810 = vmatprep.subr.bf16.mxu0 0
        %811 = vmatpush1.bf16.msra.mxu0 0
        %812 = vmatprep.subr.bf16.mxu0 0
        %813 = vmatpush1.bf16.msra.mxu0 0
        %814 = vmatprep.subr.bf16.mxu0 0
        %815 = vmatpush1.bf16.msra.mxu0 0
        %816 = vmatprep.subr.bf16.mxu0 0
        %817 = vmatpush1.bf16.msra.mxu0 0
        %818 = vmatprep.mubr.bf16.mxu0 0
        %819 = vmatmul.mubr.bf16.gmra.mrb[0].mxu0 %v784
        %v820 = vpop.f32.mrb[0].mxu0
        %v821 = vadd.f32 %v769, %v820
        %v822 = vpop.f32.mrb[0].mxu0
        %v823 = vpop.f32.mrb[0].mxu0
        %v824 = vpop.f32.mrb[0].mxu0
        %825 = vdwg.mxu0
        %v826 = vpack.c.bf16 %v821, %v821
        %v827 = vld [vmem:[#allocation14] sm:$0xf]
        %v828 = vld [vmem:[#allocation14 + $0x4] sm:$0xf]
        %v829 = vld [vmem:[#allocation14 + $0x8] sm:$0xf]
        %v830 = vld [vmem:[#allocation14 + $0xc] sm:$0xf]
        %v831 = vld [vmem:[#allocation15] sm:$0x1]
        %v833 = vlaneseq
        %v834 = vshrl.u32 %v833, 7
        %v835 = vsub.s32 0, %v834
        %v836 = vrot.slane %v831, %v835
        %v842 = vunpack.c.l.b16 %v827
        %v843 = vunpack.c.l.b16 %v828
        %v844 = vunpack.c.l.b16 %v829
        %v845 = vunpack.c.l.b16 %v830
        %v846 = vpack.c.b16 %v843, %v842
        %v847 = vpack.c.b16 %v845, %v844
        %850 = vmatprep.subr.bf16.mxu0 0
        %851 = vmatpush1.bf16.msra.mxu0 %v846
        %852 = vmatprep.subr.bf16.mxu0 0
        %853 = vmatpush1.bf16.msra.mxu0 %v847
        %854 = vmatprep.subr.bf16.mxu0 0
        %855 = vmatpush1.bf16.msra.mxu0 0
        %856 = vmatprep.subr.bf16.mxu0 0
        %857 = vmatpush1.bf16.msra.mxu0 0
        %858 = vmatprep.subr.bf16.mxu0 0
        %859 = vmatpush1.bf16.msra.mxu0 0
        %860 = vmatprep.subr.bf16.mxu0 0
        %861 = vmatpush1.bf16.msra.mxu0 0
        %862 = vmatprep.subr.bf16.mxu0 0
        %863 = vmatpush1.bf16.msra.mxu0 0
        %864 = vmatprep.subr.bf16.mxu0 0
        %865 = vmatpush1.bf16.msra.mxu0 0
        %866 = vmatprep.subr.bf16.mxu0 0
        %867 = vmatpush1.bf16.msra.mxu0 0
        %868 = vmatprep.subr.bf16.mxu0 0
        %869 = vmatpush1.bf16.msra.mxu0 0
        %870 = vmatprep.subr.bf16.mxu0 0
        %871 = vmatpush1.bf16.msra.mxu0 0
        %872 = vmatprep.subr.bf16.mxu0 0
        %873 = vmatpush1.bf16.msra.mxu0 0
        %874 = vmatprep.subr.bf16.mxu0 0
        %875 = vmatpush1.bf16.msra.mxu0 0
        %876 = vmatprep.subr.bf16.mxu0 0
        %877 = vmatpush1.bf16.msra.mxu0 0
        %878 = vmatprep.subr.bf16.mxu0 0
        %879 = vmatpush1.bf16.msra.mxu0 0
        %880 = vmatprep.subr.bf16.mxu0 0
        %881 = vmatpush1.bf16.msra.mxu0 0
        %882 = vmatprep.mubr.bf16.mxu0 0
        %883 = vmatmul.mubr.bf16.gmra.mrb[0].mxu0 %v784
        %v884 = vpop.f32.mrb[0].mxu0
        %v885 = vadd.f32 %v836, %v884
        %v886 = vpop.f32.mrb[0].mxu0
        %v887 = vpop.f32.mrb[0].mxu0
        %v888 = vpop.f32.mrb[0].mxu0
        %889 = vdwg.mxu0
        %v890 = vpack.c.bf16 %v885, %v885
        %vm891 = vcmask 64512
        %v893 = vsel %vm891, %v759, 0
        %v896 = vsel %vm891, %v826, 0
        %898 = vmatprep.subr.bf16.mxu0 0
        %899 = vmatpush1.bf16.xpose.msra.mxu0 %v896
        %900 = vmatprep.subr.bf16.mxu0 0
        %901 = vmatpush1.bf16.xpose.msra.mxu0 0
        %902 = vmatprep.subr.bf16.mxu0 0
        %903 = vmatpush1.bf16.xpose.msra.mxu0 0
        %904 = vmatprep.subr.bf16.mxu0 0
        %905 = vmatpush1.bf16.xpose.msra.mxu0 0
        %906 = vmatprep.subr.bf16.mxu0 0
        %907 = vmatpush1.bf16.xpose.msra.mxu0 0
        %908 = vmatprep.subr.bf16.mxu0 0
        %909 = vmatpush1.bf16.xpose.msra.mxu0 0
        %910 = vmatprep.subr.bf16.mxu0 0
        %911 = vmatpush1.bf16.xpose.msra.mxu0 0
        %912 = vmatprep.subr.bf16.mxu0 0
        %913 = vmatpush1.bf16.xpose.msra.mxu0 0
        %914 = vmatprep.subr.bf16.mxu0 0
        %915 = vmatpush1.bf16.xpose.msra.mxu0 0
        %916 = vmatprep.subr.bf16.mxu0 0
        %917 = vmatpush1.bf16.xpose.msra.mxu0 0
        %918 = vmatprep.subr.bf16.mxu0 0
        %919 = vmatpush1.bf16.xpose.msra.mxu0 0
        %920 = vmatprep.subr.bf16.mxu0 0
        %921 = vmatpush1.bf16.xpose.msra.mxu0 0
        %922 = vmatprep.subr.bf16.mxu0 0
        %923 = vmatpush1.bf16.xpose.msra.mxu0 0
        %924 = vmatprep.subr.bf16.mxu0 0
        %925 = vmatpush1.bf16.xpose.msra.mxu0 0
        %926 = vmatprep.subr.bf16.mxu0 0
        %927 = vmatpush1.bf16.xpose.msra.mxu0 0
        %928 = vmatprep.subr.bf16.mxu0 0
        %929 = vmatpush1.bf16.xpose.msra.mxu0 0
        %930 = vmatprep.mubr.bf16.mxu0 0
        %931 = vmatmul.mubr.bf16.gmra.mrb[0].mxu0 %v893
        %v932 = vpop.f32.mrb[0].mxu0
        %v933 = vadd.f32 0.0, %v932
        %v934 = vpop.f32.mrb[0].mxu0
        %v935 = vpop.f32.mrb[0].mxu0
        %v936 = vpop.f32.mrb[0].mxu0
        %937 = vdwg.mxu0
        %v938 = vmul.f32 %v933, 0.35355338
        %v939 = vsel %vm891, %v938, -inf
        %940 = vmax.xlane.f32.xlu0 %v939
        %v941 = vpop.xlane.xlu0 %940
        %v942 = vsub.f32 %v938, %v941
        %v943 = vmul.f32 %v942, 1.442695
        %v944 = vpow.pop %v943
        %v945 = vsel %vm891, %v944, 0.0
        %946 = vadd.xlane.f32.xlu0 %v945
        %v947 = vpop.xlane.xlu0 %946
        %v948 = vrcp.pop %v947
        %v949 = vmul.f32 %v944, %v948
        %v950 = vpack.c.bf16 %v949, %v949
        %v952 = vsel %vm891, %v950, 0
        %vm954 = vcmask 1043456
        %v956 = vsel %vm954, %v890, 0
        %958 = vmatprep.subr.bf16.mxu0 0
        %959 = vmatpush1.bf16.msra.mxu0 %v956
        %960 = vmatprep.subr.bf16.mxu0 0
        %961 = vmatpush1.bf16.msra.mxu0 0
        %962 = vmatprep.subr.bf16.mxu0 0
        %963 = vmatpush1.bf16.msra.mxu0 0
        %964 = vmatprep.subr.bf16.mxu0 0
        %965 = vmatpush1.bf16.msra.mxu0 0
        %966 = vmatprep.subr.bf16.mxu0 0
        %967 = vmatpush1.bf16.msra.mxu0 0
        %968 = vmatprep.subr.bf16.mxu0 0
        %969 = vmatpush1.bf16.msra.mxu0 0
        %970 = vmatprep.subr.bf16.mxu0 0
        %971 = vmatpush1.bf16.msra.mxu0 0
        %972 = vmatprep.subr.bf16.mxu0 0
        %973 = vmatpush1.bf16.msra.mxu0 0
        %974 = vmatprep.subr.bf16.mxu0 0
        %975 = vmatpush1.bf16.msra.mxu0 0
        %976 = vmatprep.subr.bf16.mxu0 0
        %977 = vmatpush1.bf16.msra.mxu0 0
        %978 = vmatprep.subr.bf16.mxu0 0
        %979 = vmatpush1.bf16.msra.mxu0 0
        %980 = vmatprep.subr.bf16.mxu0 0
        %981 = vmatpush1.bf16.msra.mxu0 0
        %982 = vmatprep.subr.bf16.mxu0 0
        %983 = vmatpush1.bf16.msra.mxu0 0
        %984 = vmatprep.subr.bf16.mxu0 0
        %985 = vmatpush1.bf16.msra.mxu0 0
        %986 = vmatprep.subr.bf16.mxu0 0
        %987 = vmatpush1.bf16.msra.mxu0 0
        %988 = vmatprep.subr.bf16.mxu0 0
        %989 = vmatpush1.bf16.msra.mxu0 0
        %990 = vmatprep.mubr.bf16.mxu0 0
        %991 = vmatmul.mubr.bf16.gmra.mrb[0].mxu0 %v952
        %v992 = vpop.f32.mrb[0].mxu0
        %v993 = vadd.f32 0.0, %v992
        %v994 = vpop.f32.mrb[0].mxu0
        %v995 = vpop.f32.mrb[0].mxu0
        %v996 = vpop.f32.mrb[0].mxu0
        %997 = vdwg.mxu0
        %v998 = vld [vmem:[#allocation2] sm:$0xff]
        %v999 = vpack.c.bf16 %v993, %v993
        %v1000 = vld [vmem:[#allocation17] sm:$0xf]
        %v1002 = vsel %vm891, %v999, 0
        %v1005 = vsel %vm954, %v1000, 0
        %1007 = vmatprep.subr.bf16.mxu0 0
        %1008 = vmatpush1.bf16.msra.mxu0 %v1005
        %1009 = vmatprep.subr.bf16.mxu0 0
        %1010 = vmatpush1.bf16.msra.mxu0 0
        %1011 = vmatprep.subr.bf16.mxu0 0
        %1012 = vmatpush1.bf16.msra.mxu0 0
        %1013 = vmatprep.subr.bf16.mxu0 0
        %1014 = vmatpush1.bf16.msra.mxu0 0
        %1015 = vmatprep.subr.bf16.mxu0 0
        %1016 = vmatpush1.bf16.msra.mxu0 0
        %1017 = vmatprep.subr.bf16.mxu0 0
        %1018 = vmatpush1.bf16.msra.mxu0 0
        %1019 = vmatprep.subr.bf16.mxu0 0
        %1020 = vmatpush1.bf16.msra.mxu0 0
        %1021 = vmatprep.subr.bf16.mxu0 0
        %1022 = vmatpush1.bf16.msra.mxu0 0
        %1023 = vmatprep.subr.bf16.mxu0 0
        %1024 = vmatpush1.bf16.msra.mxu0 0
        %1025 = vmatprep.subr.bf16.mxu0 0
        %1026 = vmatpush1.bf16.msra.mxu0 0
        %1027 = vmatprep.subr.bf16.mxu0 0
        %1028 = vmatpush1.bf16.msra.mxu0 0
        %1029 = vmatprep.subr.bf16.mxu0 0
        %1030 = vmatpush1.bf16.msra.mxu0 0
        %1031 = vmatprep.subr.bf16.mxu0 0
        %1032 = vmatpush1.bf16.msra.mxu0 0
        %1033 = vmatprep.subr.bf16.mxu0 0
        %1034 = vmatpush1.bf16.msra.mxu0 0
        %1035 = vmatprep.subr.bf16.mxu0 0
        %1036 = vmatpush1.bf16.msra.mxu0 0
        %1037 = vmatprep.subr.bf16.mxu0 0
        %1038 = vmatpush1.bf16.msra.mxu0 0
        %1039 = vmatprep.mubr.bf16.mxu0 0
        %1040 = vmatmul.mubr.bf16.gmra.mrb[0].mxu0 %v1002
        %v1041 = vpop.f32.mrb[0].mxu0
        %v1042 = vadd.f32 0.0, %v1041
        %v1043 = vpop.f32.mrb[0].mxu0
        %v1044 = vpop.f32.mrb[0].mxu0
        %v1045 = vpop.f32.mrb[0].mxu0
        %1046 = vdwg.mxu0
        %v1047 = vadd.f32 %v998, %v1042
        %1048 = vst.msk [vmem:[#allocation2] sm:$0xff] %vm715, %v1047
        %1050 = vrot.lane.b32.xlu0 %v759, 120
        %v1051 = vpop.permute.xlu0 %1050
        %1053 = vrot.lane.b32.xlu0 %v826, 120
        %v1054 = vpop.permute.xlu0 %1053
        %v1056 = vsel %vm891, %v1051, 0
        %v1059 = vsel %vm891, %v1054, 0
        %1061 = vmatprep.subr.bf16.mxu0 0
        %1062 = vmatpush1.bf16.xpose.msra.mxu0 %v1059
        %1063 = vmatprep.subr.bf16.mxu0 0
        %1064 = vmatpush1.bf16.xpose.msra.mxu0 0
        %1065 = vmatprep.subr.bf16.mxu0 0
        %1066 = vmatpush1.bf16.xpose.msra.mxu0 0
        %1067 = vmatprep.subr.bf16.mxu0 0
        %1068 = vmatpush1.bf16.xpose.msra.mxu0 0
        %1069 = vmatprep.subr.bf16.mxu0 0
        %1070 = vmatpush1.bf16.xpose.msra.mxu0 0
        %1071 = vmatprep.subr.bf16.mxu0 0
        %1072 = vmatpush1.bf16.xpose.msra.mxu0 0
        %1073 = vmatprep.subr.bf16.mxu0 0
        %1074 = vmatpush1.bf16.xpose.msra.mxu0 0
        %1075 = vmatprep.subr.bf16.mxu0 0
        %1076 = vmatpush1.bf16.xpose.msra.mxu0 0
        %1077 = vmatprep.subr.bf16.mxu0 0
        %1078 = vmatpush1.bf16.xpose.msra.mxu0 0
        %1079 = vmatprep.subr.bf16.mxu0 0
        %1080 = vmatpush1.bf16.xpose.msra.mxu0 0
        %1081 = vmatprep.subr.bf16.mxu0 0
        %1082 = vmatpush1.bf16.xpose.msra.mxu0 0
        %1083 = vmatprep.subr.bf16.mxu0 0
        %1084 = vmatpush1.bf16.xpose.msra.mxu0 0
        %1085 = vmatprep.subr.bf16.mxu0 0
        %1086 = vmatpush1.bf16.xpose.msra.mxu0 0
        %1087 = vmatprep.subr.bf16.mxu0 0
        %1088 = vmatpush1.bf16.xpose.msra.mxu0 0
        %1089 = vmatprep.subr.bf16.mxu0 0
        %1090 = vmatpush1.bf16.xpose.msra.mxu0 0
        %1091 = vmatprep.subr.bf16.mxu0 0
        %1092 = vmatpush1.bf16.xpose.msra.mxu0 0
        %1093 = vmatprep.mubr.bf16.mxu0 0
        %1094 = vmatmul.mubr.bf16.gmra.mrb[0].mxu0 %v1056
        %v1095 = vpop.f32.mrb[0].mxu0
        %v1096 = vadd.f32 0.0, %v1095
        %v1097 = vpop.f32.mrb[0].mxu0
        %v1098 = vpop.f32.mrb[0].mxu0
        %v1099 = vpop.f32.mrb[0].mxu0
        %1100 = vdwg.mxu0
        %v1101 = vmul.f32 %v1096, 0.35355338
        %v1102 = vsel %vm891, %v1101, -inf
        %1103 = vmax.xlane.f32.xlu0 %v1102
        %v1104 = vpop.xlane.xlu0 %1103
        %v1105 = vsub.f32 %v1101, %v1104
        %v1106 = vmul.f32 %v1105, 1.442695
        %v1107 = vpow.pop %v1106
        %v1108 = vsel %vm891, %v1107, 0.0
        %1109 = vadd.xlane.f32.xlu0 %v1108
        %v1110 = vpop.xlane.xlu0 %1109
        %v1111 = vrcp.pop %v1110
        %v1112 = vmul.f32 %v1107, %v1111
        %v1113 = vpack.c.bf16 %v1112, %v1112
        %1115 = vrot.lane.b32.xlu0 %v890, 120
        %v1116 = vpop.permute.xlu0 %1115
        %v1118 = vsel %vm891, %v1113, 0
        %v1121 = vsel %vm954, %v1116, 0
        %1123 = vmatprep.subr.bf16.mxu0 0
        %1124 = vmatpush1.bf16.msra.mxu0 %v1121
        %1125 = vmatprep.subr.bf16.mxu0 0
        %1126 = vmatpush1.bf16.msra.mxu0 0
        %1127 = vmatprep.subr.bf16.mxu0 0
        %1128 = vmatpush1.bf16.msra.mxu0 0
        %1129 = vmatprep.subr.bf16.mxu0 0
        %1130 = vmatpush1.bf16.msra.mxu0 0
        %1131 = vmatprep.subr.bf16.mxu0 0
        %1132 = vmatpush1.bf16.msra.mxu0 0
        %1133 = vmatprep.subr.bf16.mxu0 0
        %1134 = vmatpush1.bf16.msra.mxu0 0
        %1135 = vmatprep.subr.bf16.mxu0 0
        %1136 = vmatpush1.bf16.msra.mxu0 0
        %1137 = vmatprep.subr.bf16.mxu0 0
        %1138 = vmatpush1.bf16.msra.mxu0 0
        %1139 = vmatprep.subr.bf16.mxu0 0
        %1140 = vmatpush1.bf16.msra.mxu0 0
        %1141 = vmatprep.subr.bf16.mxu0 0
        %1142 = vmatpush1.bf16.msra.mxu0 0
        %1143 = vmatprep.subr.bf16.mxu0 0
        %1144 = vmatpush1.bf16.msra.mxu0 0
        %1145 = vmatprep.subr.bf16.mxu0 0
        %1146 = vmatpush1.bf16.msra.mxu0 0
        %1147 = vmatprep.subr.bf16.mxu0 0
        %1148 = vmatpush1.bf16.msra.mxu0 0
        %1149 = vmatprep.subr.bf16.mxu0 0
        %1150 = vmatpush1.bf16.msra.mxu0 0
        %1151 = vmatprep.subr.bf16.mxu0 0
        %1152 = vmatpush1.bf16.msra.mxu0 0
        %1153 = vmatprep.subr.bf16.mxu0 0
        %1154 = vmatpush1.bf16.msra.mxu0 0
        %1155 = vmatprep.mubr.bf16.mxu0 0
        %1156 = vmatmul.mubr.bf16.gmra.mrb[0].mxu0 %v1118
        %v1157 = vpop.f32.mrb[0].mxu0
        %v1158 = vadd.f32 0.0, %v1157
        %v1159 = vpop.f32.mrb[0].mxu0
        %v1160 = vpop.f32.mrb[0].mxu0
        %v1161 = vpop.f32.mrb[0].mxu0
        %1162 = vdwg.mxu0
        %v1163 = vld [vmem:[#allocation2] sm:$0xff]
        %v1164 = vpack.c.bf16 %v1158, %v1158
        %v1165 = vld [vmem:[#allocation17 + $0x4] sm:$0xf]
        %v1167 = vsel %vm891, %v1164, 0
        %v1170 = vsel %vm954, %v1165, 0
        %1172 = vmatprep.subr.bf16.mxu0 0
        %1173 = vmatpush1.bf16.msra.mxu0 %v1170
        %1174 = vmatprep.subr.bf16.mxu0 0
        %1175 = vmatpush1.bf16.msra.mxu0 0
        %1176 = vmatprep.subr.bf16.mxu0 0
        %1177 = vmatpush1.bf16.msra.mxu0 0
        %1178 = vmatprep.subr.bf16.mxu0 0
        %1179 = vmatpush1.bf16.msra.mxu0 0
        %1180 = vmatprep.subr.bf16.mxu0 0
        %1181 = vmatpush1.bf16.msra.mxu0 0
        %1182 = vmatprep.subr.bf16.mxu0 0
        %1183 = vmatpush1.bf16.msra.mxu0 0
        %1184 = vmatprep.subr.bf16.mxu0 0
        %1185 = vmatpush1.bf16.msra.mxu0 0
        %1186 = vmatprep.subr.bf16.mxu0 0
        %1187 = vmatpush1.bf16.msra.mxu0 0
        %1188 = vmatprep.subr.bf16.mxu0 0
        %1189 = vmatpush1.bf16.msra.mxu0 0
        %1190 = vmatprep.subr.bf16.mxu0 0
        %1191 = vmatpush1.bf16.msra.mxu0 0
        %1192 = vmatprep.subr.bf16.mxu0 0
        %1193 = vmatpush1.bf16.msra.mxu0 0
        %1194 = vmatprep.subr.bf16.mxu0 0
        %1195 = vmatpush1.bf16.msra.mxu0 0
        %1196 = vmatprep.subr.bf16.mxu0 0
        %1197 = vmatpush1.bf16.msra.mxu0 0
        %1198 = vmatprep.subr.bf16.mxu0 0
        %1199 = vmatpush1.bf16.msra.mxu0 0
        %1200 = vmatprep.subr.bf16.mxu0 0
        %1201 = vmatpush1.bf16.msra.mxu0 0
        %1202 = vmatprep.subr.bf16.mxu0 0
        %1203 = vmatpush1.bf16.msra.mxu0 0
        %1204 = vmatprep.mubr.bf16.mxu0 0
        %1205 = vmatmul.mubr.bf16.gmra.mrb[0].mxu0 %v1167
        %v1206 = vpop.f32.mrb[0].mxu0
        %v1207 = vadd.f32 0.0, %v1206
        %v1208 = vpop.f32.mrb[0].mxu0
        %v1209 = vpop.f32.mrb[0].mxu0
        %v1210 = vpop.f32.mrb[0].mxu0
        %1211 = vdwg.mxu0
        %v1212 = vadd.f32 %v1163, %v1207
        %1213 = vst.msk [vmem:[#allocation2] sm:$0xff] %vm715, %v1212
        %1214 = vrot.lane.b32.xlu0 %v759, 112
        %v1215 = vpop.permute.xlu0 %1214
        %1216 = vrot.lane.b32.xlu0 %v826, 112
        %v1217 = vpop.permute.xlu0 %1216
        %v1219 = vsel %vm891, %v1215, 0
        %v1222 = vsel %vm891, %v1217, 0
        %1224 = vmatprep.subr.bf16.mxu0 0
        %1225 = vmatpush1.bf16.xpose.msra.mxu0 %v1222
        %1226 = vmatprep.subr.bf16.mxu0 0
        %1227 = vmatpush1.bf16.xpose.msra.mxu0 0
        %1228 = vmatprep.subr.bf16.mxu0 0
        %1229 = vmatpush1.bf16.xpose.msra.mxu0 0
        %1230 = vmatprep.subr.bf16.mxu0 0
        %1231 = vmatpush1.bf16.xpose.msra.mxu0 0
        %1232 = vmatprep.subr.bf16.mxu0 0
        %1233 = vmatpush1.bf16.xpose.msra.mxu0 0
        %1234 = vmatprep.subr.bf16.mxu0 0
        %1235 = vmatpush1.bf16.xpose.msra.mxu0 0
        %1236 = vmatprep.subr.bf16.mxu0 0
        %1237 = vmatpush1.bf16.xpose.msra.mxu0 0
        %1238 = vmatprep.subr.bf16.mxu0 0
        %1239 = vmatpush1.bf16.xpose.msra.mxu0 0
        %1240 = vmatprep.subr.bf16.mxu0 0
        %1241 = vmatpush1.bf16.xpose.msra.mxu0 0
        %1242 = vmatprep.subr.bf16.mxu0 0
        %1243 = vmatpush1.bf16.xpose.msra.mxu0 0
        %1244 = vmatprep.subr.bf16.mxu0 0
        %1245 = vmatpush1.bf16.xpose.msra.mxu0 0
        %1246 = vmatprep.subr.bf16.mxu0 0
        %1247 = vmatpush1.bf16.xpose.msra.mxu0 0
        %1248 = vmatprep.subr.bf16.mxu0 0
        %1249 = vmatpush1.bf16.xpose.msra.mxu0 0
        %1250 = vmatprep.subr.bf16.mxu0 0
        %1251 = vmatpush1.bf16.xpose.msra.mxu0 0
        %1252 = vmatprep.subr.bf16.mxu0 0
        %1253 = vmatpush1.bf16.xpose.msra.mxu0 0
        %1254 = vmatprep.subr.bf16.mxu0 0
        %1255 = vmatpush1.bf16.xpose.msra.mxu0 0
        %1256 = vmatprep.mubr.bf16.mxu0 0
        %1257 = vmatmul.mubr.bf16.gmra.mrb[0].mxu0 %v1219
        %v1258 = vpop.f32.mrb[0].mxu0
        %v1259 = vadd.f32 0.0, %v1258
        %v1260 = vpop.f32.mrb[0].mxu0
        %v1261 = vpop.f32.mrb[0].mxu0
        %v1262 = vpop.f32.mrb[0].mxu0
        %1263 = vdwg.mxu0
        %v1264 = vmul.f32 %v1259, 0.35355338
        %v1265 = vsel %vm891, %v1264, -inf
        %1266 = vmax.xlane.f32.xlu0 %v1265
        %v1267 = vpop.xlane.xlu0 %1266
        %v1268 = vsub.f32 %v1264, %v1267
        %v1269 = vmul.f32 %v1268, 1.442695
        %v1270 = vpow.pop %v1269
        %v1271 = vsel %vm891, %v1270, 0.0
        %1272 = vadd.xlane.f32.xlu0 %v1271
        %v1273 = vpop.xlane.xlu0 %1272
        %v1274 = vrcp.pop %v1273
        %v1275 = vmul.f32 %v1270, %v1274
        %v1276 = vpack.c.bf16 %v1275, %v1275
        %1277 = vrot.lane.b32.xlu0 %v890, 112
        %v1278 = vpop.permute.xlu0 %1277
        %v1280 = vsel %vm891, %v1276, 0
        %v1283 = vsel %vm954, %v1278, 0
        %1285 = vmatprep.subr.bf16.mxu0 0
        %1286 = vmatpush1.bf16.msra.mxu0 %v1283
        %1287 = vmatprep.subr.bf16.mxu0 0
        %1288 = vmatpush1.bf16.msra.mxu0 0
        %1289 = vmatprep.subr.bf16.mxu0 0
        %1290 = vmatpush1.bf16.msra.mxu0 0
        %1291 = vmatprep.subr.bf16.mxu0 0
        %1292 = vmatpush1.bf16.msra.mxu0 0
        %1293 = vmatprep.subr.bf16.mxu0 0
        %1294 = vmatpush1.bf16.msra.mxu0 0
        %1295 = vmatprep.subr.bf16.mxu0 0
        %1296 = vmatpush1.bf16.msra.mxu0 0
        %1297 = vmatprep.subr.bf16.mxu0 0
        %1298 = vmatpush1.bf16.msra.mxu0 0
        %1299 = vmatprep.subr.bf16.mxu0 0
        %1300 = vmatpush1.bf16.msra.mxu0 0
        %1301 = vmatprep.subr.bf16.mxu0 0
        %1302 = vmatpush1.bf16.msra.mxu0 0
        %1303 = vmatprep.subr.bf16.mxu0 0
        %1304 = vmatpush1.bf16.msra.mxu0 0
        %1305 = vmatprep.subr.bf16.mxu0 0
        %1306 = vmatpush1.bf16.msra.mxu0 0
        %1307 = vmatprep.subr.bf16.mxu0 0
        %1308 = vmatpush1.bf16.msra.mxu0 0
        %1309 = vmatprep.subr.bf16.mxu0 0
        %1310 = vmatpush1.bf16.msra.mxu0 0
        %1311 = vmatprep.subr.bf16.mxu0 0
        %1312 = vmatpush1.bf16.msra.mxu0 0
        %1313 = vmatprep.subr.bf16.mxu0 0
        %1314 = vmatpush1.bf16.msra.mxu0 0
        %1315 = vmatprep.subr.bf16.mxu0 0
        %1316 = vmatpush1.bf16.msra.mxu0 0
        %1317 = vmatprep.mubr.bf16.mxu0 0
        %1318 = vmatmul.mubr.bf16.gmra.mrb[0].mxu0 %v1280
        %v1319 = vpop.f32.mrb[0].mxu0
        %v1320 = vadd.f32 0.0, %v1319
        %v1321 = vpop.f32.mrb[0].mxu0
        %v1322 = vpop.f32.mrb[0].mxu0
        %v1323 = vpop.f32.mrb[0].mxu0
        %1324 = vdwg.mxu0
        %v1325 = vld [vmem:[#allocation2] sm:$0xff]
        %v1326 = vpack.c.bf16 %v1320, %v1320
        %v1327 = vld [vmem:[#allocation17 + $0x8] sm:$0xf]
        %v1329 = vsel %vm891, %v1326, 0
        %v1332 = vsel %vm954, %v1327, 0
        %1334 = vmatprep.subr.bf16.mxu0 0
        %1335 = vmatpush1.bf16.msra.mxu0 %v1332
        %1336 = vmatprep.subr.bf16.mxu0 0
        %1337 = vmatpush1.bf16.msra.mxu0 0
        %1338 = vmatprep.subr.bf16.mxu0 0
        %1339 = vmatpush1.bf16.msra.mxu0 0
        %1340 = vmatprep.subr.bf16.mxu0 0
        %1341 = vmatpush1.bf16.msra.mxu0 0
        %1342 = vmatprep.subr.bf16.mxu0 0
        %1343 = vmatpush1.bf16.msra.mxu0 0
        %1344 = vmatprep.subr.bf16.mxu0 0
        %1345 = vmatpush1.bf16.msra.mxu0 0
        %1346 = vmatprep.subr.bf16.mxu0 0
        %1347 = vmatpush1.bf16.msra.mxu0 0
        %1348 = vmatprep.subr.bf16.mxu0 0
        %1349 = vmatpush1.bf16.msra.mxu0 0
        %1350 = vmatprep.subr.bf16.mxu0 0
        %1351 = vmatpush1.bf16.msra.mxu0 0
        %1352 = vmatprep.subr.bf16.mxu0 0
        %1353 = vmatpush1.bf16.msra.mxu0 0
        %1354 = vmatprep.subr.bf16.mxu0 0
        %1355 = vmatpush1.bf16.msra.mxu0 0
        %1356 = vmatprep.subr.bf16.mxu0 0
        %1357 = vmatpush1.bf16.msra.mxu0 0
        %1358 = vmatprep.subr.bf16.mxu0 0
        %1359 = vmatpush1.bf16.msra.mxu0 0
        %1360 = vmatprep.subr.bf16.mxu0 0
        %1361 = vmatpush1.bf16.msra.mxu0 0
        %1362 = vmatprep.subr.bf16.mxu0 0
        %1363 = vmatpush1.bf16.msra.mxu0 0
        %1364 = vmatprep.subr.bf16.mxu0 0
        %1365 = vmatpush1.bf16.msra.mxu0 0
        %1366 = vmatprep.mubr.bf16.mxu0 0
        %1367 = vmatmul.mubr.bf16.gmra.mrb[0].mxu0 %v1329
        %v1368 = vpop.f32.mrb[0].mxu0
        %v1369 = vadd.f32 0.0, %v1368
        %v1370 = vpop.f32.mrb[0].mxu0
        %v1371 = vpop.f32.mrb[0].mxu0
        %v1372 = vpop.f32.mrb[0].mxu0
        %1373 = vdwg.mxu0
        %v1374 = vadd.f32 %v1325, %v1369
        %1375 = vst.msk [vmem:[#allocation2] sm:$0xff] %vm715, %v1374
        %1376 = vrot.lane.b32.xlu0 %v759, 104
        %v1377 = vpop.permute.xlu0 %1376
        %1378 = vrot.lane.b32.xlu0 %v826, 104
        %v1379 = vpop.permute.xlu0 %1378
        %v1381 = vsel %vm891, %v1377, 0
        %v1384 = vsel %vm891, %v1379, 0
        %1386 = vmatprep.subr.bf16.mxu0 0
        %1387 = vmatpush1.bf16.xpose.msra.mxu0 %v1384
        %1388 = vmatprep.subr.bf16.mxu0 0
        %1389 = vmatpush1.bf16.xpose.msra.mxu0 0
        %1390 = vmatprep.subr.bf16.mxu0 0
        %1391 = vmatpush1.bf16.xpose.msra.mxu0 0
        %1392 = vmatprep.subr.bf16.mxu0 0
        %1393 = vmatpush1.bf16.xpose.msra.mxu0 0
        %1394 = vmatprep.subr.bf16.mxu0 0
        %1395 = vmatpush1.bf16.xpose.msra.mxu0 0
        %1396 = vmatprep.subr.bf16.mxu0 0
        %1397 = vmatpush1.bf16.xpose.msra.mxu0 0
        %1398 = vmatprep.subr.bf16.mxu0 0
        %1399 = vmatpush1.bf16.xpose.msra.mxu0 0
        %1400 = vmatprep.subr.bf16.mxu0 0
        %1401 = vmatpush1.bf16.xpose.msra.mxu0 0
        %1402 = vmatprep.subr.bf16.mxu0 0
        %1403 = vmatpush1.bf16.xpose.msra.mxu0 0
        %1404 = vmatprep.subr.bf16.mxu0 0
        %1405 = vmatpush1.bf16.xpose.msra.mxu0 0
        %1406 = vmatprep.subr.bf16.mxu0 0
        %1407 = vmatpush1.bf16.xpose.msra.mxu0 0
        %1408 = vmatprep.subr.bf16.mxu0 0
        %1409 = vmatpush1.bf16.xpose.msra.mxu0 0
        %1410 = vmatprep.subr.bf16.mxu0 0
        %1411 = vmatpush1.bf16.xpose.msra.mxu0 0
        %1412 = vmatprep.subr.bf16.mxu0 0
        %1413 = vmatpush1.bf16.xpose.msra.mxu0 0
        %1414 = vmatprep.subr.bf16.mxu0 0
        %1415 = vmatpush1.bf16.xpose.msra.mxu0 0
        %1416 = vmatprep.subr.bf16.mxu0 0
        %1417 = vmatpush1.bf16.xpose.msra.mxu0 0
        %1418 = vmatprep.mubr.bf16.mxu0 0
        %1419 = vmatmul.mubr.bf16.gmra.mrb[0].mxu0 %v1381
        %v1420 = vpop.f32.mrb[0].mxu0
        %v1421 = vadd.f32 0.0, %v1420
        %v1422 = vpop.f32.mrb[0].mxu0
        %v1423 = vpop.f32.mrb[0].mxu0
        %v1424 = vpop.f32.mrb[0].mxu0
        %1425 = vdwg.mxu0
        %v1426 = vmul.f32 %v1421, 0.35355338
        %v1427 = vsel %vm891, %v1426, -inf
        %1428 = vmax.xlane.f32.xlu0 %v1427
        %v1429 = vpop.xlane.xlu0 %1428
        %v1430 = vsub.f32 %v1426, %v1429
        %v1431 = vmul.f32 %v1430, 1.442695
        %v1432 = vpow.pop %v1431
        %v1433 = vsel %vm891, %v1432, 0.0
        %1434 = vadd.xlane.f32.xlu0 %v1433
        %v1435 = vpop.xlane.xlu0 %1434
        %v1436 = vrcp.pop %v1435
        %v1437 = vmul.f32 %v1432, %v1436
        %v1438 = vpack.c.bf16 %v1437, %v1437
        %1439 = vrot.lane.b32.xlu0 %v890, 104
        %v1440 = vpop.permute.xlu0 %1439
        %v1442 = vsel %vm891, %v1438, 0
        %v1445 = vsel %vm954, %v1440, 0
        %1447 = vmatprep.subr.bf16.mxu0 0
        %1448 = vmatpush1.bf16.msra.mxu0 %v1445
        %1449 = vmatprep.subr.bf16.mxu0 0
        %1450 = vmatpush1.bf16.msra.mxu0 0
        %1451 = vmatprep.subr.bf16.mxu0 0
        %1452 = vmatpush1.bf16.msra.mxu0 0
        %1453 = vmatprep.subr.bf16.mxu0 0
        %1454 = vmatpush1.bf16.msra.mxu0 0
        %1455 = vmatprep.subr.bf16.mxu0 0
        %1456 = vmatpush1.bf16.msra.mxu0 0
        %1457 = vmatprep.subr.bf16.mxu0 0
        %1458 = vmatpush1.bf16.msra.mxu0 0
        %1459 = vmatprep.subr.bf16.mxu0 0
        %1460 = vmatpush1.bf16.msra.mxu0 0
        %1461 = vmatprep.subr.bf16.mxu0 0
        %1462 = vmatpush1.bf16.msra.mxu0 0
        %1463 = vmatprep.subr.bf16.mxu0 0
        %1464 = vmatpush1.bf16.msra.mxu0 0
        %1465 = vmatprep.subr.bf16.mxu0 0
        %1466 = vmatpush1.bf16.msra.mxu0 0
        %1467 = vmatprep.subr.bf16.mxu0 0
        %1468 = vmatpush1.bf16.msra.mxu0 0
        %1469 = vmatprep.subr.bf16.mxu0 0
        %1470 = vmatpush1.bf16.msra.mxu0 0
        %1471 = vmatprep.subr.bf16.mxu0 0
        %1472 = vmatpush1.bf16.msra.mxu0 0
        %1473 = vmatprep.subr.bf16.mxu0 0
        %1474 = vmatpush1.bf16.msra.mxu0 0
        %1475 = vmatprep.subr.bf16.mxu0 0
        %1476 = vmatpush1.bf16.msra.mxu0 0
        %1477 = vmatprep.subr.bf16.mxu0 0
        %1478 = vmatpush1.bf16.msra.mxu0 0
        %1479 = vmatprep.mubr.bf16.mxu0 0
        %1480 = vmatmul.mubr.bf16.gmra.mrb[0].mxu0 %v1442
        %v1481 = vpop.f32.mrb[0].mxu0
        %v1482 = vadd.f32 0.0, %v1481
        %v1483 = vpop.f32.mrb[0].mxu0
        %v1484 = vpop.f32.mrb[0].mxu0
        %v1485 = vpop.f32.mrb[0].mxu0
        %1486 = vdwg.mxu0
        %v1487 = vld [vmem:[#allocation2] sm:$0xff]
        %v1488 = vpack.c.bf16 %v1482, %v1482
        %v1489 = vld [vmem:[#allocation17 + $0xc] sm:$0xf]
        %v1491 = vsel %vm891, %v1488, 0
        %v1494 = vsel %vm954, %v1489, 0
        %1496 = vmatprep.subr.bf16.mxu0 0
        %1497 = vmatpush1.bf16.msra.mxu0 %v1494
        %1498 = vmatprep.subr.bf16.mxu0 0
        %1499 = vmatpush1.bf16.msra.mxu0 0
        %1500 = vmatprep.subr.bf16.mxu0 0
        %1501 = vmatpush1.bf16.msra.mxu0 0
        %1502 = vmatprep.subr.bf16.mxu0 0
        %1503 = vmatpush1.bf16.msra.mxu0 0
        %1504 = vmatprep.subr.bf16.mxu0 0
        %1505 = vmatpush1.bf16.msra.mxu0 0
        %1506 = vmatprep.subr.bf16.mxu0 0
        %1507 = vmatpush1.bf16.msra.mxu0 0
        %1508 = vmatprep.subr.bf16.mxu0 0
        %1509 = vmatpush1.bf16.msra.mxu0 0
        %1510 = vmatprep.subr.bf16.mxu0 0
        %1511 = vmatpush1.bf16.msra.mxu0 0
        %1512 = vmatprep.subr.bf16.mxu0 0
        %1513 = vmatpush1.bf16.msra.mxu0 0
        %1514 = vmatprep.subr.bf16.mxu0 0
        %1515 = vmatpush1.bf16.msra.mxu0 0
        %1516 = vmatprep.subr.bf16.mxu0 0
        %1517 = vmatpush1.bf16.msra.mxu0 0
        %1518 = vmatprep.subr.bf16.mxu0 0
        %1519 = vmatpush1.bf16.msra.mxu0 0
        %1520 = vmatprep.subr.bf16.mxu0 0
        %1521 = vmatpush1.bf16.msra.mxu0 0
        %1522 = vmatprep.subr.bf16.mxu0 0
        %1523 = vmatpush1.bf16.msra.mxu0 0
        %1524 = vmatprep.subr.bf16.mxu0 0
        %1525 = vmatpush1.bf16.msra.mxu0 0
        %1526 = vmatprep.subr.bf16.mxu0 0
        %1527 = vmatpush1.bf16.msra.mxu0 0
        %1528 = vmatprep.mubr.bf16.mxu0 0
        %1529 = vmatmul.mubr.bf16.gmra.mrb[0].mxu0 %v1491
        %v1530 = vpop.f32.mrb[0].mxu0
        %v1531 = vadd.f32 0.0, %v1530
        %v1532 = vpop.f32.mrb[0].mxu0
        %v1533 = vpop.f32.mrb[0].mxu0
        %v1534 = vpop.f32.mrb[0].mxu0
        %1535 = vdwg.mxu0
        %v1536 = vadd.f32 %v1487, %v1531
        %1537 = vst.msk [vmem:[#allocation2] sm:$0xff] %vm715, %v1536
        // Predicated region
        $region121: #{transformer_decoder_forward.7} parent=67 // pred_check
          %p1538 = pneg %p677
        $region122: #{transformer_decoder_forward.7} parent=67 // pred_check_branch
          %1540 = sbr.rel (%p1538) target = $region124
        $region123: #{transformer_decoder_forward.7} parent=67 // pred_region
          %v1541 = vld [vmem:[#allocation2] sm:$0xff]
          %v1542 = vsel %vm715, %v1541, 0.0
          %1543 = vadd.xlane.f32.xlu0 %v1542
          %v1544 = vpop.xlane.xlu0 %1543
          %v1545 = vrcp.pop 32.0
          %v1546 = vmul.f32 %v1544, %v1545
          %v1547 = vsub.f32 %v1541, %v1546
          %v1548 = vmul.f32 %v1547, %v1547
          %v1549 = vsel %vm715, %v1548, 0.0
          %1550 = vadd.xlane.f32.xlu0 %v1549
          %v1551 = vpop.xlane.xlu0 %1550
          %v1552 = vmul.f32 %v1551, %v1545
          %v1553 = vadd.f32 %v1552, 1e-05
          %v1554 = vrsqrt.pop %v1553
          %v1555 = vmul.f32 %v1547, %v1554
          %v1556 = vld [vmem:[#allocation20] sm:$0x1]
          %v1558 = vlaneseq
          %v1559 = vshrl.u32 %v1558, 7
          %v1560 = vsub.s32 0, %v1559
          %v1561 = vrot.slane %v1556, %v1560
          %v1563 = vmul.f32 %v1555, %v1561
          %v1564 = vld [vmem:[#allocation21] sm:$0x1]
          %v1566 = vlaneseq
          %v1567 = vshrl.u32 %v1566, 7
          %v1568 = vsub.s32 0, %v1567
          %v1569 = vrot.slane %v1564, %v1568
          %v1571 = vadd.f32 %v1563, %v1569
          %v1572 = vpack.c.bf16 %v1571, %v1571
          %vm1573 = vcmask 257024
          %1574 = vst.msk [vmem:[%s672] sm:$0xf] %vm1573, %v1572
        $region124: #{transformer_decoder_forward.7} parent=67 // pred_fallthru
          _
        %s1575 = sand.u32 %s365, 1
        %s1576 = scalar_lea.sflag [#allocation5], %s1575
        %s1577 = sand.u32 %s365, 1
        %s1578 = smul.addr %s1577, 4
        %s1579 = scalar_lea.vmem [#allocation23], %s1578
        // Predicated region
        $region125: #{transformer_decoder_forward.7} parent=67 // pred_check
          %p1580 = pneg %p375
        $region126: #{transformer_decoder_forward.7} parent=67 // pred_check_branch
          %1582 = sbr.rel (%p1580) target = $region128
        $region127: #{transformer_decoder_forward.7} parent=67 // pred_region
          %s1584 = ssub.s32 64, 64
          %1585 = vsyncadd %s1576, %s1584
          %s1586 = sadd.s32 %s43, %s42
          %s1587 = smul.addr %s1586, 64
          %s1588 = scalar_lea.hbm %s12, %s1587
          %s1590 = sshll.u32 %s1579, 4
          %s1591 = int_to_ptr.vmem [resolvable:$true] %s1590
          %1593 = dma.vmem_to_hbm [thread:$0]  %s1591, 64, %s1588, %s1576
        $region128: #{transformer_decoder_forward.7} parent=67 // pred_fallthru
          _
      $region68: #{transformer_decoder_forward.7} parent=5 // pred_fallthru
        _
      %p1594 = scmp.le.s32.totalorder 2, %s32
      // Predicated region
      $region129: #{transformer_decoder_forward.7} parent=5 // pred_check
        %p1595 = pneg %p1594
      $region130: #{transformer_decoder_forward.7} parent=5 // pred_check_branch
        %1597 = sbr.rel (%p1595) target = $region132
      $region131: #{transformer_decoder_forward.7} parent=5 // pred_region
        %s1598 = ssub.s32 %s32, 2
        // Predicated region
        $region133: #{transformer_decoder_forward.7} parent=131 // pred_check
          %p1599 = pneg %p381
        $region134: #{transformer_decoder_forward.7} parent=131 // pred_check_branch
          %1601 = sbr.rel (%p1599) target = $region136
        $region135: #{transformer_decoder_forward.7} parent=131 // pred_region
          %s1602 = sand.u32 %s366, 1
          %s1603 = scalar_lea.sflag [#allocation5], %s1602
          %s1604 = sand.u32 %s366, 1
          %s1605 = smul.addr %s1604, 4
          %s1606 = scalar_lea.vmem [#allocation23], %s1605
          %1607 = dma.done %s1603, 64
        $region136: #{transformer_decoder_forward.7} parent=131 // pred_fallthru
          _
      $region132: #{transformer_decoder_forward.7} parent=5 // pred_fallthru
        _
    $region6: #{transformer_decoder_forward.7} parent=1 // loop_footer
      %s36 = sadd.s32 1, %s32
    $region7: #{transformer_decoder_forward.7} parent=1 // loop_footer_branch
      %31 = sbr.rel target = $region3
    $region8: #{transformer_decoder_forward.7} parent=1 // loop_exit
      _
    %1608 = vsyncpa [#allocation4], 1
    %s1609 = scalar_lea.sflag [#allocation4], 1
    %1610 = vsyncpa %s1609, 1
    %1611 = vsyncpa [#allocation7], 1
    %s1612 = scalar_lea.sflag [#allocation7], 1
    %1613 = vsyncpa %s1612, 1
    %1614 = vsyncpa [#allocation10], 1
    %1615 = vsyncpa [#allocation13], 1
    %1616 = vsyncpa [#allocation16], 1
    %1617 = vsyncpa [#allocation19], 1
    %1618 = vsyncpa [#allocation22], 1
    %1619 = vsyncpa [#allocation5], 1
    %s1620 = scalar_lea.sflag [#allocation5], 1
    %1621 = vsyncpa %s1620, 1

// kernel: transformer_decoder_forward.6
$region0: #{transformer_decoder_forward.6}
  #allocation0 [shape = 'u32[]', space=smem, size = 0x4, offset = 0x4, fixed_abs, tag = 'smem constant byte address 0x4 - core index']
  #allocation1 [shape = 'u32[144,128]{1,0:T(1,128)}', space=vmem, size = 0x12000, scoped, tag = 'internal scratch']
  #allocation2 [shape = 'f32[8,32]{1,0:T(8,128)}', space=vmem, size = 0x1000, scoped, tag = 'scratch operand']
  %s0 = inlined_call_operand.hbm [shape: bf16[2,8,32], index: 0, kind: input, shape index: {}, may-alias: {0,1}]
  %s1 = inlined_call_operand.hbm [shape: bf16[2,8,32], index: 1, kind: input, shape index: {}, may-alias: {0,1}]
  %s2 = inlined_call_operand.hbm [shape: f32[8,8], index: 2, kind: input, shape index: {}]
  %s3 = inlined_call_operand.hbm [shape: bf16[32,32], index: 3, kind: input, shape index: {}]
  %s4 = inlined_call_operand.hbm [shape: f32[1,32], index: 4, kind: input, shape index: {}]
  %s5 = inlined_call_operand.hbm [shape: bf16[32,32], index: 5, kind: input, shape index: {}]
  %s6 = inlined_call_operand.hbm [shape: f32[1,32], index: 6, kind: input, shape index: {}]
  %s7 = inlined_call_operand.hbm [shape: bf16[32,32], index: 7, kind: input, shape index: {}]
  %s8 = inlined_call_operand.hbm [shape: f32[1,32], index: 8, kind: input, shape index: {}]
  %s9 = inlined_call_operand.hbm [shape: bf16[32,32], index: 9, kind: input, shape index: {}]
  %s10 = inlined_call_operand.hbm [shape: f32[1,32], index: 10, kind: input, shape index: {}]
  %s11 = inlined_call_operand.hbm [shape: f32[1,32], index: 11, kind: input, shape index: {}]
  %s12 = inlined_call_operand.hbm [shape: f32[1,32], index: 12, kind: input, shape index: {}]
  %s13 = inlined_call_operand.hbm [shape: bf16[2,8,32], index: 13, kind: output, shape index: {}]
  %s14 = sld [smem:[#allocation0]]
  $region145: #{transformer_decoder_forward.6} parent=0
    _
  %s16 = ssub.s32 1, %s14
  %s17 = scalar_select 0, %s16, %s14
  $region1: #{transformer_decoder_forward.6} parent=0
    #allocation3 [shape = 'u8[4096]{0}', space=vmem, size = 0x1000, scoped, tag = 'input window, operand 0']
    #allocation4 [shape = 's32[2]{0}', space=sflag, size = 0x8, scoped, tag = 'scoped memory for transformer_decoder_forward.6']
    #allocation5 [shape = 's32[2]{0}', space=sflag, size = 0x8, scoped, tag = 'scoped memory for transformer_decoder_forward.6']
    #allocation6 [shape = 'u8[4096]{0}', space=vmem, size = 0x1000, scoped, tag = 'input window, operand 1']
    #allocation7 [shape = 's32[2]{0}', space=sflag, size = 0x8, scoped, tag = 'scoped memory for transformer_decoder_forward.6']
    #allocation8 [shape = 'u8[4096]{0}', space=vmem, size = 0x1000, scoped, tag = 'input window, operand 2, single buffered']
    #allocation9 [shape = 'u8[8192]{0}', space=vmem, size = 0x2000, scoped, tag = 'input window, operand 3, single buffered']
    #allocation10 [shape = 's32[1]{0}', space=sflag, size = 0x4, scoped, tag = 'scoped memory for transformer_decoder_forward.6']
    #allocation11 [shape = 'u8[512]{0}', space=vmem, size = 0x400, scoped, tag = 'input window, operand 4, single buffered']
    #allocation12 [shape = 'u8[8192]{0}', space=vmem, size = 0x2000, scoped, tag = 'input window, operand 5, single buffered']
    #allocation13 [shape = 's32[1]{0}', space=sflag, size = 0x4, scoped, tag = 'scoped memory for transformer_decoder_forward.6']
    #allocation14 [shape = 'u8[512]{0}', space=vmem, size = 0x400, scoped, tag = 'input window, operand 6, single buffered']
    #allocation15 [shape = 'u8[8192]{0}', space=vmem, size = 0x2000, scoped, tag = 'input window, operand 7, single buffered']
    #allocation16 [shape = 's32[1]{0}', space=sflag, size = 0x4, scoped, tag = 'scoped memory for transformer_decoder_forward.6']
    #allocation17 [shape = 'u8[512]{0}', space=vmem, size = 0x400, scoped, tag = 'input window, operand 8, single buffered']
    #allocation18 [shape = 'u8[8192]{0}', space=vmem, size = 0x2000, scoped, tag = 'input window, operand 9, single buffered']
    #allocation19 [shape = 's32[1]{0}', space=sflag, size = 0x4, scoped, tag = 'scoped memory for transformer_decoder_forward.6']
    #allocation20 [shape = 'u8[512]{0}', space=vmem, size = 0x400, scoped, tag = 'input window, operand 10, single buffered']
    #allocation21 [shape = 'u8[512]{0}', space=vmem, size = 0x400, scoped, tag = 'input window, operand 11, single buffered']
    #allocation22 [shape = 's32[1]{0}', space=sflag, size = 0x4, scoped, tag = 'scoped memory for transformer_decoder_forward.6']
    #allocation23 [shape = 'u8[512]{0}', space=vmem, size = 0x400, scoped, tag = 'input window, operand 12, single buffered']
    #allocation24 [shape = 'u8[4096]{0}', space=vmem, size = 0x1000, scoped, tag = 'output window, operand 0']
    %18 = vsyncpa [#allocation4], 0
    %s19 = scalar_lea.sflag [#allocation4], 1
    %20 = vsyncpa %s19, 0
    %21 = vsyncpa [#allocation7], 0
    %s22 = scalar_lea.sflag [#allocation7], 1
    %23 = vsyncpa %s22, 0
    %24 = vsyncpa [#allocation10], 0
    %25 = vsyncpa [#allocation13], 0
    %26 = vsyncpa [#allocation16], 0
    %27 = vsyncpa [#allocation19], 0
    %28 = vsyncpa [#allocation22], 0
    %29 = vsyncpa [#allocation5], 0
    %s30 = scalar_lea.sflag [#allocation5], 1
    %31 = vsyncpa %s30, 0
    loop: start=0, step=1, limit=4
    $region2: #{transformer_decoder_forward.6} parent=1 // loop_pre_header
      _
    $region3: #{transformer_decoder_forward.6} parent=1 // loop_header
      %s33 = sphi 0, %s37
      %p34 = scmp.ge.s32.totalorder %s33, 4
      %s40 = sphi 0, %s59
      %s41 = sphi 0, %s55
      %s42 = sphi 0, %s51
      %s43 = sphi 0, %s40
      %s44 = sphi 0, %s41
      %s45 = sphi 0, %s42
      %s46 = sphi 0, %s43
      %s47 = sphi 0, %s44
      %s48 = sphi 0, %s45
      %s64 = sphi 0, %s66
      %s67 = sphi 0, %s64
      %s68 = sphi 0, %s67
      %s84 = sphi 0, %s68
      %s90 = sphi 0, %s92
      %s93 = sphi 0, %s90
      %s94 = sphi 0, %s93
      %s110 = sphi 0, %s94
      %s116 = sphi 0, %s118
      %s119 = sphi 0, %s116
      %s120 = sphi 0, %s119
      %s136 = sphi 0, %s120
      %s142 = sphi 0, %s144
      %s145 = sphi 0, %s142
      %s146 = sphi 0, %s145
      %s162 = sphi 0, %s146
      %s168 = sphi 0, %s170
      %s171 = sphi 0, %s168
      %s172 = sphi 0, %s171
      %s188 = sphi 0, %s172
      %s194 = sphi 0, %s196
      %s197 = sphi 0, %s194
      %s198 = sphi 0, %s197
      %s214 = sphi 0, %s198
      %s220 = sphi 0, %s222
      %s223 = sphi 0, %s220
      %s224 = sphi 0, %s223
      %s240 = sphi 0, %s224
      %s246 = sphi 0, %s248
      %s249 = sphi 0, %s246
      %s250 = sphi 0, %s249
      %s266 = sphi 0, %s250
      %s272 = sphi 0, %s274
      %s275 = sphi 0, %s272
      %s276 = sphi 0, %s275
      %s292 = sphi 0, %s276
      %s298 = sphi 0, %s300
      %s301 = sphi 0, %s298
      %s302 = sphi 0, %s301
      %s318 = sphi 0, %s302
      %s322 = sphi 0, %s322
      %s324 = sphi 0, %s322
      %s325 = sphi 0, %s324
      %s339 = sphi 0, %s325
      %s343 = sphi 0, %s343
      %s345 = sphi 0, %s343
      %s346 = sphi 0, %s345
      %s360 = sphi 0, %s346
      %s364 = sphi 0, %s364
      %s366 = sphi 0, %s364
      %s367 = sphi 0, %s366
      %s381 = sphi 0, %s367
      %s389 = sphi 0, %s391
      %s392 = sphi 0, %s389
      %s393 = sphi 0, %s392
      %s409 = sphi 0, %s393
    $region4: #{transformer_decoder_forward.6} parent=1 // loop_header_branch
      %36 = sbr.rel (%p34) target = $region8
    $region5: #{transformer_decoder_forward.6} parent=1 // loop_body
      %s38 = ssub.s32 %s33, 1
      %s39 = ssub.s32 %s33, 2
      %s49 = sadd.s32 1, %s42
      %p50 = scmp.ge.s32.totalorder %s49, 1
      %s51 = scalar_select %p50, 0, %s49
      %s52 = sadd.s32 1, %s41
      %s53 = scalar_select %p50, %s52, %s41
      %p54 = scmp.ge.s32.totalorder %s53, 1
      %s55 = scalar_select %p54, 0, %s53
      %s56 = sadd.s32 1, %s40
      %s57 = scalar_select %p54, %s56, %s40
      %p58 = scmp.ge.s32.totalorder %s57, 2
      %s59 = scalar_select %p58, 0, %s57
      %s60 = ssub.s32 %s40, %s59
      %s61 = ssub.s32 %s41, %s55
      %s62 = sor.u32 %s60, %s61
      %p63 = scmp.eq.s32.totalorder %s62, 0
      %s65 = sadd.s32 %s64, 1
      %s66 = scalar_select %p63, %s64, %s65
      %p69 = pneg %p63
      %p70 = scmp.eq.s32.totalorder %s33, 1
      %p71 = por %p69, %p70
      %p72 = scmp.ne.s32.totalorder %s64, %s67
      %p73 = scmp.eq.s32.totalorder %s33, 0
      %p74 = por %p72, %p73
      %p75 = scmp.ne.s32.totalorder %s64, %s67
      %p76 = scmp.eq.s32.totalorder %s38, 1
      %p77 = por %p75, %p76
      %p78 = scmp.ne.s32.totalorder %s67, %s68
      %p79 = scmp.eq.s32.totalorder %s38, 0
      %p80 = por %p78, %p79
      %p81 = scmp.ne.s32.totalorder %s67, %s68
      %p82 = scmp.eq.s32.totalorder %s39, 1
      %p83 = por %p81, %p82
      %p85 = scmp.ne.s32.totalorder %s68, %s84
      %p86 = scmp.eq.s32.totalorder %s39, 0
      %p87 = por %p85, %p86
      %s88 = ssub.s32 %s40, %s59
      %p89 = scmp.eq.s32.totalorder %s88, 0
      %s91 = sadd.s32 %s90, 1
      %s92 = scalar_select %p89, %s90, %s91
      %p95 = pneg %p89
      %p96 = scmp.eq.s32.totalorder %s33, 1
      %p97 = por %p95, %p96
      %p98 = scmp.ne.s32.totalorder %s90, %s93
      %p99 = scmp.eq.s32.totalorder %s33, 0
      %p100 = por %p98, %p99
      %p101 = scmp.ne.s32.totalorder %s90, %s93
      %p102 = scmp.eq.s32.totalorder %s38, 1
      %p103 = por %p101, %p102
      %p104 = scmp.ne.s32.totalorder %s93, %s94
      %p105 = scmp.eq.s32.totalorder %s38, 0
      %p106 = por %p104, %p105
      %p107 = scmp.ne.s32.totalorder %s93, %s94
      %p108 = scmp.eq.s32.totalorder %s39, 1
      %p109 = por %p107, %p108
      %p111 = scmp.ne.s32.totalorder %s94, %s110
      %p112 = scmp.eq.s32.totalorder %s39, 0
      %p113 = por %p111, %p112
      %s114 = ssub.s32 %s41, %s55
      %p115 = scmp.eq.s32.totalorder %s114, 0
      %s117 = sadd.s32 %s116, 1
      %s118 = scalar_select %p115, %s116, %s117
      %p121 = pneg %p115
      %p122 = scmp.eq.s32.totalorder %s33, 1
      %p123 = por %p121, %p122
      %p124 = scmp.ne.s32.totalorder %s116, %s119
      %p125 = scmp.eq.s32.totalorder %s33, 0
      %p126 = por %p124, %p125
      %p127 = scmp.ne.s32.totalorder %s116, %s119
      %p128 = scmp.eq.s32.totalorder %s38, 1
      %p129 = por %p127, %p128
      %p130 = scmp.ne.s32.totalorder %s119, %s120
      %p131 = scmp.eq.s32.totalorder %s38, 0
      %p132 = por %p130, %p131
      %p133 = scmp.ne.s32.totalorder %s119, %s120
      %p134 = scmp.eq.s32.totalorder %s39, 1
      %p135 = por %p133, %p134
      %p137 = scmp.ne.s32.totalorder %s120, %s136
      %p138 = scmp.eq.s32.totalorder %s39, 0
      %p139 = por %p137, %p138
      %s140 = ssub.s32 %s42, %s51
      %p141 = scmp.eq.s32.totalorder %s140, 0
      %s143 = sadd.s32 %s142, 1
      %s144 = scalar_select %p141, %s142, %s143
      %p147 = pneg %p141
      %p148 = scmp.eq.s32.totalorder %s33, 1
      %p149 = por %p147, %p148
      %p150 = scmp.ne.s32.totalorder %s142, %s145
      %p151 = scmp.eq.s32.totalorder %s33, 0
      %p152 = por %p150, %p151
      %p153 = scmp.ne.s32.totalorder %s142, %s145
      %p154 = scmp.eq.s32.totalorder %s38, 1
      %p155 = por %p153, %p154
      %p156 = scmp.ne.s32.totalorder %s145, %s146
      %p157 = scmp.eq.s32.totalorder %s38, 0
      %p158 = por %p156, %p157
      %p159 = scmp.ne.s32.totalorder %s145, %s146
      %p160 = scmp.eq.s32.totalorder %s39, 1
      %p161 = por %p159, %p160
      %p163 = scmp.ne.s32.totalorder %s146, %s162
      %p164 = scmp.eq.s32.totalorder %s39, 0
      %p165 = por %p163, %p164
      %s166 = ssub.s32 %s42, %s51
      %p167 = scmp.eq.s32.totalorder %s166, 0
      %s169 = sadd.s32 %s168, 1
      %s170 = scalar_select %p167, %s168, %s169
      %p173 = pneg %p167
      %p174 = scmp.eq.s32.totalorder %s33, 1
      %p175 = por %p173, %p174
      %p176 = scmp.ne.s32.totalorder %s168, %s171
      %p177 = scmp.eq.s32.totalorder %s33, 0
      %p178 = por %p176, %p177
      %p179 = scmp.ne.s32.totalorder %s168, %s171
      %p180 = scmp.eq.s32.totalorder %s38, 1
      %p181 = por %p179, %p180
      %p182 = scmp.ne.s32.totalorder %s171, %s172
      %p183 = scmp.eq.s32.totalorder %s38, 0
      %p184 = por %p182, %p183
      %p185 = scmp.ne.s32.totalorder %s171, %s172
      %p186 = scmp.eq.s32.totalorder %s39, 1
      %p187 = por %p185, %p186
      %p189 = scmp.ne.s32.totalorder %s172, %s188
      %p190 = scmp.eq.s32.totalorder %s39, 0
      %p191 = por %p189, %p190
      %s192 = ssub.s32 %s42, %s51
      %p193 = scmp.eq.s32.totalorder %s192, 0
      %s195 = sadd.s32 %s194, 1
      %s196 = scalar_select %p193, %s194, %s195
      %p199 = pneg %p193
      %p200 = scmp.eq.s32.totalorder %s33, 1
      %p201 = por %p199, %p200
      %p202 = scmp.ne.s32.totalorder %s194, %s197
      %p203 = scmp.eq.s32.totalorder %s33, 0
      %p204 = por %p202, %p203
      %p205 = scmp.ne.s32.totalorder %s194, %s197
      %p206 = scmp.eq.s32.totalorder %s38, 1
      %p207 = por %p205, %p206
      %p208 = scmp.ne.s32.totalorder %s197, %s198
      %p209 = scmp.eq.s32.totalorder %s38, 0
      %p210 = por %p208, %p209
      %p211 = scmp.ne.s32.totalorder %s197, %s198
      %p212 = scmp.eq.s32.totalorder %s39, 1
      %p213 = por %p211, %p212
      %p215 = scmp.ne.s32.totalorder %s198, %s214
      %p216 = scmp.eq.s32.totalorder %s39, 0
      %p217 = por %p215, %p216
      %s218 = ssub.s32 %s42, %s51
      %p219 = scmp.eq.s32.totalorder %s218, 0
      %s221 = sadd.s32 %s220, 1
      %s222 = scalar_select %p219, %s220, %s221
      %p225 = pneg %p219
      %p226 = scmp.eq.s32.totalorder %s33, 1
      %p227 = por %p225, %p226
      %p228 = scmp.ne.s32.totalorder %s220, %s223
      %p229 = scmp.eq.s32.totalorder %s33, 0
      %p230 = por %p228, %p229
      %p231 = scmp.ne.s32.totalorder %s220, %s223
      %p232 = scmp.eq.s32.totalorder %s38, 1
      %p233 = por %p231, %p232
      %p234 = scmp.ne.s32.totalorder %s223, %s224
      %p235 = scmp.eq.s32.totalorder %s38, 0
      %p236 = por %p234, %p235
      %p237 = scmp.ne.s32.totalorder %s223, %s224
      %p238 = scmp.eq.s32.totalorder %s39, 1
      %p239 = por %p237, %p238
      %p241 = scmp.ne.s32.totalorder %s224, %s240
      %p242 = scmp.eq.s32.totalorder %s39, 0
      %p243 = por %p241, %p242
      %s244 = ssub.s32 %s42, %s51
      %p245 = scmp.eq.s32.totalorder %s244, 0
      %s247 = sadd.s32 %s246, 1
      %s248 = scalar_select %p245, %s246, %s247
      %p251 = pneg %p245
      %p252 = scmp.eq.s32.totalorder %s33, 1
      %p253 = por %p251, %p252
      %p254 = scmp.ne.s32.totalorder %s246, %s249
      %p255 = scmp.eq.s32.totalorder %s33, 0
      %p256 = por %p254, %p255
      %p257 = scmp.ne.s32.totalorder %s246, %s249
      %p258 = scmp.eq.s32.totalorder %s38, 1
      %p259 = por %p257, %p258
      %p260 = scmp.ne.s32.totalorder %s249, %s250
      %p261 = scmp.eq.s32.totalorder %s38, 0
      %p262 = por %p260, %p261
      %p263 = scmp.ne.s32.totalorder %s249, %s250
      %p264 = scmp.eq.s32.totalorder %s39, 1
      %p265 = por %p263, %p264
      %p267 = scmp.ne.s32.totalorder %s250, %s266
      %p268 = scmp.eq.s32.totalorder %s39, 0
      %p269 = por %p267, %p268
      %s270 = ssub.s32 %s42, %s51
      %p271 = scmp.eq.s32.totalorder %s270, 0
      %s273 = sadd.s32 %s272, 1
      %s274 = scalar_select %p271, %s272, %s273
      %p277 = pneg %p271
      %p278 = scmp.eq.s32.totalorder %s33, 1
      %p279 = por %p277, %p278
      %p280 = scmp.ne.s32.totalorder %s272, %s275
      %p281 = scmp.eq.s32.totalorder %s33, 0
      %p282 = por %p280, %p281
      %p283 = scmp.ne.s32.totalorder %s272, %s275
      %p284 = scmp.eq.s32.totalorder %s38, 1
      %p285 = por %p283, %p284
      %p286 = scmp.ne.s32.totalorder %s275, %s276
      %p287 = scmp.eq.s32.totalorder %s38, 0
      %p288 = por %p286, %p287
      %p289 = scmp.ne.s32.totalorder %s275, %s276
      %p290 = scmp.eq.s32.totalorder %s39, 1
      %p291 = por %p289, %p290
      %p293 = scmp.ne.s32.totalorder %s276, %s292
      %p294 = scmp.eq.s32.totalorder %s39, 0
      %p295 = por %p293, %p294
      %s296 = ssub.s32 %s42, %s51
      %p297 = scmp.eq.s32.totalorder %s296, 0
      %s299 = sadd.s32 %s298, 1
      %s300 = scalar_select %p297, %s298, %s299
      %p303 = pneg %p297
      %p304 = scmp.eq.s32.totalorder %s33, 1
      %p305 = por %p303, %p304
      %p306 = scmp.ne.s32.totalorder %s298, %s301
      %p307 = scmp.eq.s32.totalorder %s33, 0
      %p308 = por %p306, %p307
      %p309 = scmp.ne.s32.totalorder %s298, %s301
      %p310 = scmp.eq.s32.totalorder %s38, 1
      %p311 = por %p309, %p310
      %p312 = scmp.ne.s32.totalorder %s301, %s302
      %p313 = scmp.eq.s32.totalorder %s38, 0
      %p314 = por %p312, %p313
      %p315 = scmp.ne.s32.totalorder %s301, %s302
      %p316 = scmp.eq.s32.totalorder %s39, 1
      %p317 = por %p315, %p316
      %p319 = scmp.ne.s32.totalorder %s302, %s318
      %p320 = scmp.eq.s32.totalorder %s39, 0
      %p321 = por %p319, %p320
      %s323 = sadd.s32 %s322, 1
      %p326 = scmp.eq.s32.totalorder %s33, 1
      %p327 = scmp.ne.s32.totalorder %s322, %s324
      %p328 = scmp.eq.s32.totalorder %s33, 0
      %p329 = por %p327, %p328
      %p330 = scmp.ne.s32.totalorder %s322, %s324
      %p331 = scmp.eq.s32.totalorder %s38, 1
      %p332 = por %p330, %p331
      %p333 = scmp.ne.s32.totalorder %s324, %s325
      %p334 = scmp.eq.s32.totalorder %s38, 0
      %p335 = por %p333, %p334
      %p336 = scmp.ne.s32.totalorder %s324, %s325
      %p337 = scmp.eq.s32.totalorder %s39, 1
      %p338 = por %p336, %p337
      %p340 = scmp.ne.s32.totalorder %s325, %s339
      %p341 = scmp.eq.s32.totalorder %s39, 0
      %p342 = por %p340, %p341
      %s344 = sadd.s32 %s343, 1
      %p347 = scmp.eq.s32.totalorder %s33, 1
      %p348 = scmp.ne.s32.totalorder %s343, %s345
      %p349 = scmp.eq.s32.totalorder %s33, 0
      %p350 = por %p348, %p349
      %p351 = scmp.ne.s32.totalorder %s343, %s345
      %p352 = scmp.eq.s32.totalorder %s38, 1
      %p353 = por %p351, %p352
      %p354 = scmp.ne.s32.totalorder %s345, %s346
      %p355 = scmp.eq.s32.totalorder %s38, 0
      %p356 = por %p354, %p355
      %p357 = scmp.ne.s32.totalorder %s345, %s346
      %p358 = scmp.eq.s32.totalorder %s39, 1
      %p359 = por %p357, %p358
      %p361 = scmp.ne.s32.totalorder %s346, %s360
      %p362 = scmp.eq.s32.totalorder %s39, 0
      %p363 = por %p361, %p362
      %s365 = sadd.s32 %s364, 1
      %p368 = scmp.eq.s32.totalorder %s33, 1
      %p369 = scmp.ne.s32.totalorder %s364, %s366
      %p370 = scmp.eq.s32.totalorder %s33, 0
      %p371 = por %p369, %p370
      %p372 = scmp.ne.s32.totalorder %s364, %s366
      %p373 = scmp.eq.s32.totalorder %s38, 1
      %p374 = por %p372, %p373
      %p375 = scmp.ne.s32.totalorder %s366, %s367
      %p376 = scmp.eq.s32.totalorder %s38, 0
      %p377 = por %p375, %p376
      %p378 = scmp.ne.s32.totalorder %s366, %s367
      %p379 = scmp.eq.s32.totalorder %s39, 1
      %p380 = por %p378, %p379
      %p382 = scmp.ne.s32.totalorder %s367, %s381
      %p383 = scmp.eq.s32.totalorder %s39, 0
      %p384 = por %p382, %p383
      %s385 = ssub.s32 %s40, %s59
      %s386 = ssub.s32 %s41, %s55
      %s387 = sor.u32 %s385, %s386
      %p388 = scmp.eq.s32.totalorder %s387, 0
      %s390 = sadd.s32 %s389, 1
      %s391 = scalar_select %p388, %s389, %s390
      %p394 = pneg %p388
      %p395 = scmp.eq.s32.totalorder %s33, 1
      %p396 = por %p394, %p395
      %p397 = scmp.ne.s32.totalorder %s389, %s392
      %p398 = scmp.eq.s32.totalorder %s33, 0
      %p399 = por %p397, %p398
      %p400 = scmp.ne.s32.totalorder %s389, %s392
      %p401 = scmp.eq.s32.totalorder %s38, 1
      %p402 = por %p400, %p401
      %p403 = scmp.ne.s32.totalorder %s392, %s393
      %p404 = scmp.eq.s32.totalorder %s38, 0
      %p405 = por %p403, %p404
      %p406 = scmp.ne.s32.totalorder %s392, %s393
      %p407 = scmp.eq.s32.totalorder %s39, 1
      %p408 = por %p406, %p407
      %p410 = scmp.ne.s32.totalorder %s393, %s409
      %p411 = scmp.eq.s32.totalorder %s39, 0
      %p412 = por %p410, %p411
      %p413 = scmp.le.s32.totalorder 1, %s33
      %p414 = scmp.lt.s32.totalorder %s33, 3
      %p415 = pnand %p413, %p414
      %p416 = pneg %p415
      // Predicated region
      $region9: #{transformer_decoder_forward.6} parent=5 // pred_check
        _
      $region10: #{transformer_decoder_forward.6} parent=5 // pred_check_branch
        %418 = sbr.rel (%p415) target = $region12
      $region11: #{transformer_decoder_forward.6} parent=5 // pred_region
        %s419 = ssub.s32 %s33, 1
        // Predicated region
        $region13: #{transformer_decoder_forward.6} parent=11 // pred_check
          %p420 = pneg %p132
        $region14: #{transformer_decoder_forward.6} parent=11 // pred_check_branch
          %422 = sbr.rel (%p420) target = $region16
        $region15: #{transformer_decoder_forward.6} parent=11 // pred_region
          %s424 = ssub.s32 128, 128
          %425 = vsyncadd [#allocation7], %s424
          %s426 = smul.addr %s44, 128
          %s427 = scalar_lea.hbm %s2, %s426
          %s429 = sshll.u32 [#allocation8], 4
          %s430 = int_to_ptr.vmem [resolvable:$true] %s429
          %432 = dma.hbm_to_vmem [thread:$0]  %s427, 128, %s430, [#allocation7]
        $region16: #{transformer_decoder_forward.6} parent=11 // pred_fallthru
          _
        // Predicated region
        $region17: #{transformer_decoder_forward.6} parent=11 // pred_check
          %p433 = pneg %p158
        $region18: #{transformer_decoder_forward.6} parent=11 // pred_check_branch
          %435 = sbr.rel (%p433) target = $region20
        $region19: #{transformer_decoder_forward.6} parent=11 // pred_region
          %s437 = ssub.s32 256, 256
          %438 = vsyncadd [#allocation10], %s437
          %s439 = smul.addr %s45, 64
          %s440 = scalar_lea.hbm %s3, %s439
          %s441 = sshll.u32 [#allocation9], 4
          %s442 = int_to_ptr.vmem [resolvable:$true] %s441
          %447 = dma.hbm_to_vmem [thread:$0]  %s440, 256, %s442, [#allocation10], 64, 64, 4
        $region20: #{transformer_decoder_forward.6} parent=11 // pred_fallthru
          _
        // Predicated region
        $region21: #{transformer_decoder_forward.6} parent=11 // pred_check
          %p448 = pneg %p184
        $region22: #{transformer_decoder_forward.6} parent=11 // pred_check_branch
          %450 = sbr.rel (%p448) target = $region24
        $region23: #{transformer_decoder_forward.6} parent=11 // pred_region
          %s452 = ssub.s32 16, 16
          %453 = vsyncadd [#allocation10], %s452
          %s454 = smul.addr %s45, 16
          %s455 = scalar_lea.hbm %s4, %s454
          %s457 = sshll.u32 [#allocation11], 4
          %s458 = int_to_ptr.vmem [resolvable:$true] %s457
          %460 = dma.hbm_to_vmem [thread:$0]  %s455, 16, %s458, [#allocation10]
        $region24: #{transformer_decoder_forward.6} parent=11 // pred_fallthru
          _
        // Predicated region
        $region25: #{transformer_decoder_forward.6} parent=11 // pred_check
          %p461 = pneg %p210
        $region26: #{transformer_decoder_forward.6} parent=11 // pred_check_branch
          %463 = sbr.rel (%p461) target = $region28
        $region27: #{transformer_decoder_forward.6} parent=11 // pred_region
          %s465 = ssub.s32 256, 256
          %466 = vsyncadd [#allocation13], %s465
          %s467 = smul.addr %s45, 64
          %s468 = scalar_lea.hbm %s5, %s467
          %s469 = sshll.u32 [#allocation12], 4
          %s470 = int_to_ptr.vmem [resolvable:$true] %s469
          %475 = dma.hbm_to_vmem [thread:$0]  %s468, 256, %s470, [#allocation13], 64, 64, 4
        $region28: #{transformer_decoder_forward.6} parent=11 // pred_fallthru
          _
        // Predicated region
        $region29: #{transformer_decoder_forward.6} parent=11 // pred_check
          %p476 = pneg %p236
        $region30: #{transformer_decoder_forward.6} parent=11 // pred_check_branch
          %478 = sbr.rel (%p476) target = $region32
        $region31: #{transformer_decoder_forward.6} parent=11 // pred_region
          %s480 = ssub.s32 16, 16
          %481 = vsyncadd [#allocation13], %s480
          %s482 = smul.addr %s45, 16
          %s483 = scalar_lea.hbm %s6, %s482
          %s485 = sshll.u32 [#allocation14], 4
          %s486 = int_to_ptr.vmem [resolvable:$true] %s485
          %488 = dma.hbm_to_vmem [thread:$0]  %s483, 16, %s486, [#allocation13]
        $region32: #{transformer_decoder_forward.6} parent=11 // pred_fallthru
          _
        // Predicated region
        $region33: #{transformer_decoder_forward.6} parent=11 // pred_check
          %p489 = pneg %p262
        $region34: #{transformer_decoder_forward.6} parent=11 // pred_check_branch
          %491 = sbr.rel (%p489) target = $region36
        $region35: #{transformer_decoder_forward.6} parent=11 // pred_region
          %s493 = ssub.s32 256, 256
          %494 = vsyncadd [#allocation16], %s493
          %s495 = smul.addr %s45, 64
          %s496 = scalar_lea.hbm %s7, %s495
          %s497 = sshll.u32 [#allocation15], 4
          %s498 = int_to_ptr.vmem [resolvable:$true] %s497
          %503 = dma.hbm_to_vmem [thread:$0]  %s496, 256, %s498, [#allocation16], 64, 64, 4
        $region36: #{transformer_decoder_forward.6} parent=11 // pred_fallthru
          _
        // Predicated region
        $region37: #{transformer_decoder_forward.6} parent=11 // pred_check
          %p504 = pneg %p288
        $region38: #{transformer_decoder_forward.6} parent=11 // pred_check_branch
          %506 = sbr.rel (%p504) target = $region40
        $region39: #{transformer_decoder_forward.6} parent=11 // pred_region
          %s508 = ssub.s32 16, 16
          %509 = vsyncadd [#allocation16], %s508
          %s510 = smul.addr %s45, 16
          %s511 = scalar_lea.hbm %s8, %s510
          %s513 = sshll.u32 [#allocation17], 4
          %s514 = int_to_ptr.vmem [resolvable:$true] %s513
          %516 = dma.hbm_to_vmem [thread:$0]  %s511, 16, %s514, [#allocation16]
        $region40: #{transformer_decoder_forward.6} parent=11 // pred_fallthru
          _
        // Predicated region
        $region41: #{transformer_decoder_forward.6} parent=11 // pred_check
          %p517 = pneg %p314
        $region42: #{transformer_decoder_forward.6} parent=11 // pred_check_branch
          %519 = sbr.rel (%p517) target = $region44
        $region43: #{transformer_decoder_forward.6} parent=11 // pred_region
          %s520 = smul.u32 4, %s45
          %s522 = ssub.s32 256, 256
          %523 = vsyncadd [#allocation19], %s522
          %s524 = smul.addr %s520, 64
          %s525 = scalar_lea.hbm %s9, %s524
          %s526 = sshll.u32 [#allocation18], 4
          %s527 = int_to_ptr.vmem [resolvable:$true] %s526
          %532 = dma.hbm_to_vmem [thread:$0]  %s525, 256, %s527, [#allocation19], 64, 64, 4
        $region44: #{transformer_decoder_forward.6} parent=11 // pred_fallthru
          _
        // Predicated region
        $region45: #{transformer_decoder_forward.6} parent=11 // pred_check
          %p533 = pneg %p335
        $region46: #{transformer_decoder_forward.6} parent=11 // pred_check_branch
          %535 = sbr.rel (%p533) target = $region48
        $region47: #{transformer_decoder_forward.6} parent=11 // pred_region
          %s537 = ssub.s32 16, 16
          %538 = vsyncadd [#allocation19], %s537
          %s540 = sshll.u32 [#allocation20], 4
          %s541 = int_to_ptr.vmem [resolvable:$true] %s540
          %543 = dma.hbm_to_vmem [thread:$0]  %s10, 16, %s541, [#allocation19]
        $region48: #{transformer_decoder_forward.6} parent=11 // pred_fallthru
          _
        // Predicated region
        $region49: #{transformer_decoder_forward.6} parent=11 // pred_check
          %p544 = pneg %p356
        $region50: #{transformer_decoder_forward.6} parent=11 // pred_check_branch
          %546 = sbr.rel (%p544) target = $region52
        $region51: #{transformer_decoder_forward.6} parent=11 // pred_region
          %s548 = ssub.s32 16, 16
          %549 = vsyncadd [#allocation22], %s548
          %s551 = sshll.u32 [#allocation21], 4
          %s552 = int_to_ptr.vmem [resolvable:$true] %s551
          %554 = dma.hbm_to_vmem [thread:$0]  %s11, 16, %s552, [#allocation22]
        $region52: #{transformer_decoder_forward.6} parent=11 // pred_fallthru
          _
        // Predicated region
        $region53: #{transformer_decoder_forward.6} parent=11 // pred_check
          %p555 = pneg %p377
        $region54: #{transformer_decoder_forward.6} parent=11 // pred_check_branch
          %557 = sbr.rel (%p555) target = $region56
        $region55: #{transformer_decoder_forward.6} parent=11 // pred_region
          %s559 = ssub.s32 16, 16
          %560 = vsyncadd [#allocation22], %s559
          %s562 = sshll.u32 [#allocation23], 4
          %s563 = int_to_ptr.vmem [resolvable:$true] %s562
          %565 = dma.hbm_to_vmem [thread:$0]  %s12, 16, %s563, [#allocation22]
        $region56: #{transformer_decoder_forward.6} parent=11 // pred_fallthru
          _
      $region12: #{transformer_decoder_forward.6} parent=5 // pred_fallthru
        _
      %p566 = scmp.lt.s32.totalorder %s33, 2
      // Predicated region
      $region57: #{transformer_decoder_forward.6} parent=5 // pred_check
        %p567 = pneg %p566
      $region58: #{transformer_decoder_forward.6} parent=5 // pred_check_branch
        %569 = sbr.rel (%p567) target = $region60
      $region59: #{transformer_decoder_forward.6} parent=5 // pred_region
        // Predicated region
        $region61: #{transformer_decoder_forward.6} parent=59 // pred_check
          %p570 = pneg %p74
        $region62: #{transformer_decoder_forward.6} parent=59 // pred_check_branch
          %572 = sbr.rel (%p570) target = $region64
        $region63: #{transformer_decoder_forward.6} parent=59 // pred_region
          %s573 = sand.u32 %s64, 1
          %s574 = scalar_lea.sflag [#allocation4], %s573
          %s575 = sand.u32 %s64, 1
          %s576 = smul.addr %s575, 4
          %s577 = scalar_lea.vmem [#allocation3], %s576
          %s579 = ssub.s32 64, 64
          %580 = vsyncadd %s574, %s579
          %s581 = sadd.s32 %s41, %s40
          %s582 = smul.addr %s581, 64
          %s583 = scalar_lea.hbm %s0, %s582
          %s585 = sshll.u32 %s577, 4
          %s586 = int_to_ptr.vmem [resolvable:$true] %s585
          %588 = dma.hbm_to_vmem [thread:$0]  %s583, 64, %s586, %s574
        $region64: #{transformer_decoder_forward.6} parent=59 // pred_fallthru
          _
        // Predicated region
        $region65: #{transformer_decoder_forward.6} parent=59 // pred_check
          %p589 = pneg %p100
        $region66: #{transformer_decoder_forward.6} parent=59 // pred_check_branch
          %591 = sbr.rel (%p589) target = $region68
        $region67: #{transformer_decoder_forward.6} parent=59 // pred_region
          %s592 = sand.u32 %s33, 1
          %s593 = scalar_lea.sflag [#allocation7], %s592
          %s594 = sand.u32 %s90, 1
          %s595 = smul.addr %s594, 4
          %s596 = scalar_lea.vmem [#allocation6], %s595
          %s598 = ssub.s32 64, 64
          %599 = vsyncadd %s593, %s598
          %s600 = smul.addr %s40, 64
          %s601 = scalar_lea.hbm %s1, %s600
          %s603 = sshll.u32 %s596, 4
          %s604 = int_to_ptr.vmem [resolvable:$true] %s603
          %606 = dma.hbm_to_vmem [thread:$0]  %s601, 64, %s604, %s593
        $region68: #{transformer_decoder_forward.6} parent=59 // pred_fallthru
          _
      $region60: #{transformer_decoder_forward.6} parent=5 // pred_fallthru
        _
      %p607 = scmp.le.s32.totalorder 1, %s33
      %p608 = scmp.lt.s32.totalorder %s33, 3
      %p609 = pnand %p607, %p608
      %p610 = pneg %p609
      // Predicated region
      $region69: #{transformer_decoder_forward.6} parent=5 // pred_check
        _
      $region70: #{transformer_decoder_forward.6} parent=5 // pred_check_branch
        %612 = sbr.rel (%p609) target = $region72
      $region71: #{transformer_decoder_forward.6} parent=5 // pred_region
        %s613 = ssub.s32 %s33, 1
        %s614 = sand.u32 %s67, 1
        %s615 = scalar_lea.sflag [#allocation4], %s614
        %s616 = sand.u32 %s67, 1
        %s617 = smul.addr %s616, 4
        %s618 = scalar_lea.vmem [#allocation3], %s617
        // Predicated region
        $region73: #{transformer_decoder_forward.6} parent=71 // pred_check
          %p619 = pneg %p80
        $region74: #{transformer_decoder_forward.6} parent=71 // pred_check_branch
          %621 = sbr.rel (%p619) target = $region76
        $region75: #{transformer_decoder_forward.6} parent=71 // pred_region
          %622 = dma.done %s615, 64
        $region76: #{transformer_decoder_forward.6} parent=71 // pred_fallthru
          _
        %s623 = sand.u32 %s38, 1
        %s624 = scalar_lea.sflag [#allocation7], %s623
        %s625 = sand.u32 %s93, 1
        %s626 = smul.addr %s625, 4
        %s627 = scalar_lea.vmem [#allocation6], %s626
        // Predicated region
        $region77: #{transformer_decoder_forward.6} parent=71 // pred_check
          %p628 = pneg %p106
        $region78: #{transformer_decoder_forward.6} parent=71 // pred_check_branch
          %630 = sbr.rel (%p628) target = $region80
        $region79: #{transformer_decoder_forward.6} parent=71 // pred_region
          %631 = dma.done %s624, 64
        $region80: #{transformer_decoder_forward.6} parent=71 // pred_fallthru
          _
        // Predicated region
        $region81: #{transformer_decoder_forward.6} parent=71 // pred_check
          %p632 = pneg %p132
        $region82: #{transformer_decoder_forward.6} parent=71 // pred_check_branch
          %634 = sbr.rel (%p632) target = $region84
        $region83: #{transformer_decoder_forward.6} parent=71 // pred_region
          %635 = dma.done [#allocation7], 128
        $region84: #{transformer_decoder_forward.6} parent=71 // pred_fallthru
          _
        // Predicated region
        $region85: #{transformer_decoder_forward.6} parent=71 // pred_check
          %p636 = pneg %p158
        $region86: #{transformer_decoder_forward.6} parent=71 // pred_check_branch
          %638 = sbr.rel (%p636) target = $region88
        $region87: #{transformer_decoder_forward.6} parent=71 // pred_region
          %639 = dma.done [#allocation10], 256
        $region88: #{transformer_decoder_forward.6} parent=71 // pred_fallthru
          _
        // Predicated region
        $region89: #{transformer_decoder_forward.6} parent=71 // pred_check
          %p640 = pneg %p184
        $region90: #{transformer_decoder_forward.6} parent=71 // pred_check_branch
          %642 = sbr.rel (%p640) target = $region92
        $region91: #{transformer_decoder_forward.6} parent=71 // pred_region
          %643 = dma.done [#allocation10], 16
        $region92: #{transformer_decoder_forward.6} parent=71 // pred_fallthru
          _
        // Predicated region
        $region93: #{transformer_decoder_forward.6} parent=71 // pred_check
          %p644 = pneg %p210
        $region94: #{transformer_decoder_forward.6} parent=71 // pred_check_branch
          %646 = sbr.rel (%p644) target = $region96
        $region95: #{transformer_decoder_forward.6} parent=71 // pred_region
          %647 = dma.done [#allocation13], 256
        $region96: #{transformer_decoder_forward.6} parent=71 // pred_fallthru
          _
        // Predicated region
        $region97: #{transformer_decoder_forward.6} parent=71 // pred_check
          %p648 = pneg %p236
        $region98: #{transformer_decoder_forward.6} parent=71 // pred_check_branch
          %650 = sbr.rel (%p648) target = $region100
        $region99: #{transformer_decoder_forward.6} parent=71 // pred_region
          %651 = dma.done [#allocation13], 16
        $region100: #{transformer_decoder_forward.6} parent=71 // pred_fallthru
          _
        // Predicated region
        $region101: #{transformer_decoder_forward.6} parent=71 // pred_check
          %p652 = pneg %p262
        $region102: #{transformer_decoder_forward.6} parent=71 // pred_check_branch
          %654 = sbr.rel (%p652) target = $region104
        $region103: #{transformer_decoder_forward.6} parent=71 // pred_region
          %655 = dma.done [#allocation16], 256
        $region104: #{transformer_decoder_forward.6} parent=71 // pred_fallthru
          _
        // Predicated region
        $region105: #{transformer_decoder_forward.6} parent=71 // pred_check
          %p656 = pneg %p288
        $region106: #{transformer_decoder_forward.6} parent=71 // pred_check_branch
          %658 = sbr.rel (%p656) target = $region108
        $region107: #{transformer_decoder_forward.6} parent=71 // pred_region
          %659 = dma.done [#allocation16], 16
        $region108: #{transformer_decoder_forward.6} parent=71 // pred_fallthru
          _
        // Predicated region
        $region109: #{transformer_decoder_forward.6} parent=71 // pred_check
          %p660 = pneg %p314
        $region110: #{transformer_decoder_forward.6} parent=71 // pred_check_branch
          %662 = sbr.rel (%p660) target = $region112
        $region111: #{transformer_decoder_forward.6} parent=71 // pred_region
          %663 = dma.done [#allocation19], 256
        $region112: #{transformer_decoder_forward.6} parent=71 // pred_fallthru
          _
        // Predicated region
        $region113: #{transformer_decoder_forward.6} parent=71 // pred_check
          %p664 = pneg %p335
        $region114: #{transformer_decoder_forward.6} parent=71 // pred_check_branch
          %666 = sbr.rel (%p664) target = $region116
        $region115: #{transformer_decoder_forward.6} parent=71 // pred_region
          %667 = dma.done [#allocation19], 16
        $region116: #{transformer_decoder_forward.6} parent=71 // pred_fallthru
          _
        // Predicated region
        $region117: #{transformer_decoder_forward.6} parent=71 // pred_check
          %p668 = pneg %p356
        $region118: #{transformer_decoder_forward.6} parent=71 // pred_check_branch
          %670 = sbr.rel (%p668) target = $region120
        $region119: #{transformer_decoder_forward.6} parent=71 // pred_region
          %671 = dma.done [#allocation22], 16
        $region120: #{transformer_decoder_forward.6} parent=71 // pred_fallthru
          _
        // Predicated region
        $region121: #{transformer_decoder_forward.6} parent=71 // pred_check
          %p672 = pneg %p377
        $region122: #{transformer_decoder_forward.6} parent=71 // pred_check_branch
          %674 = sbr.rel (%p672) target = $region124
        $region123: #{transformer_decoder_forward.6} parent=71 // pred_region
          %675 = dma.done [#allocation22], 16
        $region124: #{transformer_decoder_forward.6} parent=71 // pred_fallthru
          _
        %s676 = sand.u32 %s67, 1
        %s677 = scalar_lea.sflag [#allocation4], %s676
        %s678 = sand.u32 %s67, 1
        %s679 = smul.addr %s678, 4
        %s680 = scalar_lea.vmem [#allocation3], %s679
        %p681 = pneg %p80
        %p682 = pneg %p77
        %s683 = sand.u32 %s38, 1
        %s684 = scalar_lea.sflag [#allocation7], %s683
        %s685 = sand.u32 %s93, 1
        %s686 = smul.addr %s685, 4
        %s687 = scalar_lea.vmem [#allocation6], %s686
        %p688 = pneg %p106
        %p689 = pneg %p103
        %p690 = pneg %p132
        %p691 = pneg %p129
        %p692 = pneg %p158
        %p693 = pneg %p155
        %p694 = pneg %p184
        %p695 = pneg %p181
        %p696 = pneg %p210
        %p697 = pneg %p207
        %p698 = pneg %p236
        %p699 = pneg %p233
        %p700 = pneg %p262
        %p701 = pneg %p259
        %p702 = pneg %p288
        %p703 = pneg %p285
        %p704 = pneg %p314
        %p705 = pneg %p311
        %p706 = pneg %p335
        %p707 = pneg %p332
        %p708 = pneg %p356
        %p709 = pneg %p353
        %p710 = pneg %p377
        %p711 = pneg %p374
        %p712 = pneg %p405
        %p713 = pneg %p402
        %s714 = sand.u32 %s392, 1
        %s715 = scalar_lea.sflag [#allocation5], %s714
        %s716 = sand.u32 %s392, 1
        %s717 = smul.addr %s716, 4
        %s718 = scalar_lea.vmem [#allocation24], %s717
        %s719 = smul.u32 4, %s45
        %v721 = vld [vmem:[%s618] sm:$0xf]
        %v722 = vld [vmem:[%s627] sm:$0xf]
        %p723 = scmp.eq.s32.totalorder %s45, 0
        // Predicated region
        $region125: #{transformer_decoder_forward.6} parent=71 // pred_check
          %p724 = pneg %p723
        $region126: #{transformer_decoder_forward.6} parent=71 // pred_check_branch
          %726 = sbr.rel (%p724) target = $region128
        $region127: #{transformer_decoder_forward.6} parent=71 // pred_region
          %v727 = vunpack.c.l.bf16 %v721
          %v728 = vld [vmem:[#allocation20] sm:$0x1]
          %v730 = vlaneseq
          %v731 = vshrl.u32 %v730, 7
          %v732 = vsub.s32 0, %v731
          %v733 = vrot.slane %v728, %v732
          %v735 = vadd.f32 %v727, %v733
          %vm736 = vcmask 261120
          %737 = vst.msk [vmem:[#allocation2] sm:$0xff] %vm736, %v735
        $region128: #{transformer_decoder_forward.6} parent=71 // pred_fallthru
          _
        %v738 = vld [vmem:[#allocation9] sm:$0xf]
        %v739 = vld [vmem:[#allocation9 + $0x4] sm:$0xf]
        %v740 = vld [vmem:[#allocation9 + $0x8] sm:$0xf]
        %v741 = vld [vmem:[#allocation9 + $0xc] sm:$0xf]
        %v742 = vld [vmem:[#allocation11] sm:$0x1]
        %v744 = vlaneseq
        %v745 = vshrl.u32 %v744, 7
        %v746 = vsub.s32 0, %v745
        %v747 = vrot.slane %v742, %v746
        %v753 = vunpack.c.l.b16 %v738
        %v754 = vunpack.c.l.b16 %v739
        %v755 = vunpack.c.l.b16 %v740
        %v756 = vunpack.c.l.b16 %v741
        %v757 = vpack.c.b16 %v754, %v753
        %v758 = vpack.c.b16 %v756, %v755
        %vm761 = vcmask 261120
        %v763 = vsel %vm761, %v721, 0
        %765 = vmatprep.subr.bf16.mxu0 0
        %766 = vmatpush1.bf16.msra.mxu0 %v757
        %767 = vmatprep.subr.bf16.mxu0 0
        %768 = vmatpush1.bf16.msra.mxu0 %v758
        %769 = vmatprep.subr.bf16.mxu0 0
        %770 = vmatpush1.bf16.msra.mxu0 0
        %771 = vmatprep.subr.bf16.mxu0 0
        %772 = vmatpush1.bf16.msra.mxu0 0
        %773 = vmatprep.subr.bf16.mxu0 0
        %774 = vmatpush1.bf16.msra.mxu0 0
        %775 = vmatprep.subr.bf16.mxu0 0
        %776 = vmatpush1.bf16.msra.mxu0 0
        %777 = vmatprep.subr.bf16.mxu0 0
        %778 = vmatpush1.bf16.msra.mxu0 0
        %779 = vmatprep.subr.bf16.mxu0 0
        %780 = vmatpush1.bf16.msra.mxu0 0
        %781 = vmatprep.subr.bf16.mxu0 0
        %782 = vmatpush1.bf16.msra.mxu0 0
        %783 = vmatprep.subr.bf16.mxu0 0
        %784 = vmatpush1.bf16.msra.mxu0 0
        %785 = vmatprep.subr.bf16.mxu0 0
        %786 = vmatpush1.bf16.msra.mxu0 0
        %787 = vmatprep.subr.bf16.mxu0 0
        %788 = vmatpush1.bf16.msra.mxu0 0
        %789 = vmatprep.subr.bf16.mxu0 0
        %790 = vmatpush1.bf16.msra.mxu0 0
        %791 = vmatprep.subr.bf16.mxu0 0
        %792 = vmatpush1.bf16.msra.mxu0 0
        %793 = vmatprep.subr.bf16.mxu0 0
        %794 = vmatpush1.bf16.msra.mxu0 0
        %795 = vmatprep.subr.bf16.mxu0 0
        %796 = vmatpush1.bf16.msra.mxu0 0
        %797 = vmatprep.mubr.bf16.mxu0 0
        %798 = vmatmul.mubr.bf16.gmra.mrb[0].mxu0 %v763
        %v799 = vpop.f32.mrb[0].mxu0
        %v800 = vadd.f32 %v747, %v799
        %v801 = vpop.f32.mrb[0].mxu0
        %v802 = vpop.f32.mrb[0].mxu0
        %v803 = vpop.f32.mrb[0].mxu0
        %804 = vdwg.mxu0
        %v805 = vpack.c.bf16 %v800, %v800
        %v806 = vld [vmem:[#allocation12] sm:$0xf]
        %v807 = vld [vmem:[#allocation12 + $0x4] sm:$0xf]
        %v808 = vld [vmem:[#allocation12 + $0x8] sm:$0xf]
        %v809 = vld [vmem:[#allocation12 + $0xc] sm:$0xf]
        %v810 = vld [vmem:[#allocation14] sm:$0x1]
        %v812 = vlaneseq
        %v813 = vshrl.u32 %v812, 7
        %v814 = vsub.s32 0, %v813
        %v815 = vrot.slane %v810, %v814
        %v821 = vunpack.c.l.b16 %v806
        %v822 = vunpack.c.l.b16 %v807
        %v823 = vunpack.c.l.b16 %v808
        %v824 = vunpack.c.l.b16 %v809
        %v825 = vpack.c.b16 %v822, %v821
        %v826 = vpack.c.b16 %v824, %v823
        %v830 = vsel %vm761, %v722, 0
        %832 = vmatprep.subr.bf16.mxu0 0
        %833 = vmatpush1.bf16.msra.mxu0 %v825
        %834 = vmatprep.subr.bf16.mxu0 0
        %835 = vmatpush1.bf16.msra.mxu0 %v826
        %836 = vmatprep.subr.bf16.mxu0 0
        %837 = vmatpush1.bf16.msra.mxu0 0
        %838 = vmatprep.subr.bf16.mxu0 0
        %839 = vmatpush1.bf16.msra.mxu0 0
        %840 = vmatprep.subr.bf16.mxu0 0
        %841 = vmatpush1.bf16.msra.mxu0 0
        %842 = vmatprep.subr.bf16.mxu0 0
        %843 = vmatpush1.bf16.msra.mxu0 0
        %844 = vmatprep.subr.bf16.mxu0 0
        %845 = vmatpush1.bf16.msra.mxu0 0
        %846 = vmatprep.subr.bf16.mxu0 0
        %847 = vmatpush1.bf16.msra.mxu0 0
        %848 = vmatprep.subr.bf16.mxu0 0
        %849 = vmatpush1.bf16.msra.mxu0 0
        %850 = vmatprep.subr.bf16.mxu0 0
        %851 = vmatpush1.bf16.msra.mxu0 0
        %852 = vmatprep.subr.bf16.mxu0 0
        %853 = vmatpush1.bf16.msra.mxu0 0
        %854 = vmatprep.subr.bf16.mxu0 0
        %855 = vmatpush1.bf16.msra.mxu0 0
        %856 = vmatprep.subr.bf16.mxu0 0
        %857 = vmatpush1.bf16.msra.mxu0 0
        %858 = vmatprep.subr.bf16.mxu0 0
        %859 = vmatpush1.bf16.msra.mxu0 0
        %860 = vmatprep.subr.bf16.mxu0 0
        %861 = vmatpush1.bf16.msra.mxu0 0
        %862 = vmatprep.subr.bf16.mxu0 0
        %863 = vmatpush1.bf16.msra.mxu0 0
        %864 = vmatprep.mubr.bf16.mxu0 0
        %865 = vmatmul.mubr.bf16.gmra.mrb[0].mxu0 %v830
        %v866 = vpop.f32.mrb[0].mxu0
        %v867 = vadd.f32 %v815, %v866
        %v868 = vpop.f32.mrb[0].mxu0
        %v869 = vpop.f32.mrb[0].mxu0
        %v870 = vpop.f32.mrb[0].mxu0
        %871 = vdwg.mxu0
        %v872 = vpack.c.bf16 %v867, %v867
        %v873 = vld [vmem:[#allocation15] sm:$0xf]
        %v874 = vld [vmem:[#allocation15 + $0x4] sm:$0xf]
        %v875 = vld [vmem:[#allocation15 + $0x8] sm:$0xf]
        %v876 = vld [vmem:[#allocation15 + $0xc] sm:$0xf]
        %v877 = vld [vmem:[#allocation17] sm:$0x1]
        %v879 = vlaneseq
        %v880 = vshrl.u32 %v879, 7
        %v881 = vsub.s32 0, %v880
        %v882 = vrot.slane %v877, %v881
        %v888 = vunpack.c.l.b16 %v873
        %v889 = vunpack.c.l.b16 %v874
        %v890 = vunpack.c.l.b16 %v875
        %v891 = vunpack.c.l.b16 %v876
        %v892 = vpack.c.b16 %v889, %v888
        %v893 = vpack.c.b16 %v891, %v890
        %896 = vmatprep.subr.bf16.mxu0 0
        %897 = vmatpush1.bf16.msra.mxu0 %v892
        %898 = vmatprep.subr.bf16.mxu0 0
        %899 = vmatpush1.bf16.msra.mxu0 %v893
        %900 = vmatprep.subr.bf16.mxu0 0
        %901 = vmatpush1.bf16.msra.mxu0 0
        %902 = vmatprep.subr.bf16.mxu0 0
        %903 = vmatpush1.bf16.msra.mxu0 0
        %904 = vmatprep.subr.bf16.mxu0 0
        %905 = vmatpush1.bf16.msra.mxu0 0
        %906 = vmatprep.subr.bf16.mxu0 0
        %907 = vmatpush1.bf16.msra.mxu0 0
        %908 = vmatprep.subr.bf16.mxu0 0
        %909 = vmatpush1.bf16.msra.mxu0 0
        %910 = vmatprep.subr.bf16.mxu0 0
        %911 = vmatpush1.bf16.msra.mxu0 0
        %912 = vmatprep.subr.bf16.mxu0 0
        %913 = vmatpush1.bf16.msra.mxu0 0
        %914 = vmatprep.subr.bf16.mxu0 0
        %915 = vmatpush1.bf16.msra.mxu0 0
        %916 = vmatprep.subr.bf16.mxu0 0
        %917 = vmatpush1.bf16.msra.mxu0 0
        %918 = vmatprep.subr.bf16.mxu0 0
        %919 = vmatpush1.bf16.msra.mxu0 0
        %920 = vmatprep.subr.bf16.mxu0 0
        %921 = vmatpush1.bf16.msra.mxu0 0
        %922 = vmatprep.subr.bf16.mxu0 0
        %923 = vmatpush1.bf16.msra.mxu0 0
        %924 = vmatprep.subr.bf16.mxu0 0
        %925 = vmatpush1.bf16.msra.mxu0 0
        %926 = vmatprep.subr.bf16.mxu0 0
        %927 = vmatpush1.bf16.msra.mxu0 0
        %928 = vmatprep.mubr.bf16.mxu0 0
        %929 = vmatmul.mubr.bf16.gmra.mrb[0].mxu0 %v830
        %v930 = vpop.f32.mrb[0].mxu0
        %v931 = vadd.f32 %v882, %v930
        %v932 = vpop.f32.mrb[0].mxu0
        %v933 = vpop.f32.mrb[0].mxu0
        %v934 = vpop.f32.mrb[0].mxu0
        %935 = vdwg.mxu0
        %v936 = vpack.c.bf16 %v931, %v931
        %v937 = vld [vmem:[#allocation8] sm:$0xff]
        %vm938 = vcmask 64512
        %v940 = vsel %vm938, %v805, 0
        %v943 = vsel %vm938, %v872, 0
        %945 = vmatprep.subr.bf16.mxu0 0
        %946 = vmatpush1.bf16.xpose.msra.mxu0 %v943
        %947 = vmatprep.subr.bf16.mxu0 0
        %948 = vmatpush1.bf16.xpose.msra.mxu0 0
        %949 = vmatprep.subr.bf16.mxu0 0
        %950 = vmatpush1.bf16.xpose.msra.mxu0 0
        %951 = vmatprep.subr.bf16.mxu0 0
        %952 = vmatpush1.bf16.xpose.msra.mxu0 0
        %953 = vmatprep.subr.bf16.mxu0 0
        %954 = vmatpush1.bf16.xpose.msra.mxu0 0
        %955 = vmatprep.subr.bf16.mxu0 0
        %956 = vmatpush1.bf16.xpose.msra.mxu0 0
        %957 = vmatprep.subr.bf16.mxu0 0
        %958 = vmatpush1.bf16.xpose.msra.mxu0 0
        %959 = vmatprep.subr.bf16.mxu0 0
        %960 = vmatpush1.bf16.xpose.msra.mxu0 0
        %961 = vmatprep.subr.bf16.mxu0 0
        %962 = vmatpush1.bf16.xpose.msra.mxu0 0
        %963 = vmatprep.subr.bf16.mxu0 0
        %964 = vmatpush1.bf16.xpose.msra.mxu0 0
        %965 = vmatprep.subr.bf16.mxu0 0
        %966 = vmatpush1.bf16.xpose.msra.mxu0 0
        %967 = vmatprep.subr.bf16.mxu0 0
        %968 = vmatpush1.bf16.xpose.msra.mxu0 0
        %969 = vmatprep.subr.bf16.mxu0 0
        %970 = vmatpush1.bf16.xpose.msra.mxu0 0
        %971 = vmatprep.subr.bf16.mxu0 0
        %972 = vmatpush1.bf16.xpose.msra.mxu0 0
        %973 = vmatprep.subr.bf16.mxu0 0
        %974 = vmatpush1.bf16.xpose.msra.mxu0 0
        %975 = vmatprep.subr.bf16.mxu0 0
        %976 = vmatpush1.bf16.xpose.msra.mxu0 0
        %977 = vmatprep.mubr.bf16.mxu0 0
        %978 = vmatmul.mubr.bf16.gmra.mrb[0].mxu0 %v940
        %v979 = vpop.f32.mrb[0].mxu0
        %v980 = vadd.f32 0.0, %v979
        %v981 = vpop.f32.mrb[0].mxu0
        %v982 = vpop.f32.mrb[0].mxu0
        %v983 = vpop.f32.mrb[0].mxu0
        %984 = vdwg.mxu0
        %v985 = vmul.f32 %v980, 0.35355338
        %v986 = vadd.f32 %v985, %v937
        %v987 = vsel %vm938, %v986, -inf
        %988 = vmax.xlane.f32.xlu0 %v987
        %v989 = vpop.xlane.xlu0 %988
        %v990 = vsub.f32 %v986, %v989
        %v991 = vmul.f32 %v990, 1.442695
        %v992 = vpow.pop %v991
        %v993 = vsel %vm938, %v992, 0.0
        %994 = vadd.xlane.f32.xlu0 %v993
        %v995 = vpop.xlane.xlu0 %994
        %v996 = vrcp.pop %v995
        %v997 = vmul.f32 %v992, %v996
        %v998 = vpack.c.bf16 %v997, %v997
        %v1000 = vsel %vm938, %v998, 0
        %vm1002 = vcmask 1043456
        %v1004 = vsel %vm1002, %v936, 0
        %1006 = vmatprep.subr.bf16.mxu0 0
        %1007 = vmatpush1.bf16.msra.mxu0 %v1004
        %1008 = vmatprep.subr.bf16.mxu0 0
        %1009 = vmatpush1.bf16.msra.mxu0 0
        %1010 = vmatprep.subr.bf16.mxu0 0
        %1011 = vmatpush1.bf16.msra.mxu0 0
        %1012 = vmatprep.subr.bf16.mxu0 0
        %1013 = vmatpush1.bf16.msra.mxu0 0
        %1014 = vmatprep.subr.bf16.mxu0 0
        %1015 = vmatpush1.bf16.msra.mxu0 0
        %1016 = vmatprep.subr.bf16.mxu0 0
        %1017 = vmatpush1.bf16.msra.mxu0 0
        %1018 = vmatprep.subr.bf16.mxu0 0
        %1019 = vmatpush1.bf16.msra.mxu0 0
        %1020 = vmatprep.subr.bf16.mxu0 0
        %1021 = vmatpush1.bf16.msra.mxu0 0
        %1022 = vmatprep.subr.bf16.mxu0 0
        %1023 = vmatpush1.bf16.msra.mxu0 0
        %1024 = vmatprep.subr.bf16.mxu0 0
        %1025 = vmatpush1.bf16.msra.mxu0 0
        %1026 = vmatprep.subr.bf16.mxu0 0
        %1027 = vmatpush1.bf16.msra.mxu0 0
        %1028 = vmatprep.subr.bf16.mxu0 0
        %1029 = vmatpush1.bf16.msra.mxu0 0
        %1030 = vmatprep.subr.bf16.mxu0 0
        %1031 = vmatpush1.bf16.msra.mxu0 0
        %1032 = vmatprep.subr.bf16.mxu0 0
        %1033 = vmatpush1.bf16.msra.mxu0 0
        %1034 = vmatprep.subr.bf16.mxu0 0
        %1035 = vmatpush1.bf16.msra.mxu0 0
        %1036 = vmatprep.subr.bf16.mxu0 0
        %1037 = vmatpush1.bf16.msra.mxu0 0
        %1038 = vmatprep.mubr.bf16.mxu0 0
        %1039 = vmatmul.mubr.bf16.gmra.mrb[0].mxu0 %v1000
        %v1040 = vpop.f32.mrb[0].mxu0
        %v1041 = vadd.f32 0.0, %v1040
        %v1042 = vpop.f32.mrb[0].mxu0
        %v1043 = vpop.f32.mrb[0].mxu0
        %v1044 = vpop.f32.mrb[0].mxu0
        %1045 = vdwg.mxu0
        %v1046 = vld [vmem:[#allocation2] sm:$0xff]
        %v1047 = vpack.c.bf16 %v1041, %v1041
        %v1048 = vld [vmem:[#allocation18] sm:$0xf]
        %v1050 = vsel %vm938, %v1047, 0
        %v1053 = vsel %vm1002, %v1048, 0
        %1055 = vmatprep.subr.bf16.mxu0 0
        %1056 = vmatpush1.bf16.msra.mxu0 %v1053
        %1057 = vmatprep.subr.bf16.mxu0 0
        %1058 = vmatpush1.bf16.msra.mxu0 0
        %1059 = vmatprep.subr.bf16.mxu0 0
        %1060 = vmatpush1.bf16.msra.mxu0 0
        %1061 = vmatprep.subr.bf16.mxu0 0
        %1062 = vmatpush1.bf16.msra.mxu0 0
        %1063 = vmatprep.subr.bf16.mxu0 0
        %1064 = vmatpush1.bf16.msra.mxu0 0
        %1065 = vmatprep.subr.bf16.mxu0 0
        %1066 = vmatpush1.bf16.msra.mxu0 0
        %1067 = vmatprep.subr.bf16.mxu0 0
        %1068 = vmatpush1.bf16.msra.mxu0 0
        %1069 = vmatprep.subr.bf16.mxu0 0
        %1070 = vmatpush1.bf16.msra.mxu0 0
        %1071 = vmatprep.subr.bf16.mxu0 0
        %1072 = vmatpush1.bf16.msra.mxu0 0
        %1073 = vmatprep.subr.bf16.mxu0 0
        %1074 = vmatpush1.bf16.msra.mxu0 0
        %1075 = vmatprep.subr.bf16.mxu0 0
        %1076 = vmatpush1.bf16.msra.mxu0 0
        %1077 = vmatprep.subr.bf16.mxu0 0
        %1078 = vmatpush1.bf16.msra.mxu0 0
        %1079 = vmatprep.subr.bf16.mxu0 0
        %1080 = vmatpush1.bf16.msra.mxu0 0
        %1081 = vmatprep.subr.bf16.mxu0 0
        %1082 = vmatpush1.bf16.msra.mxu0 0
        %1083 = vmatprep.subr.bf16.mxu0 0
        %1084 = vmatpush1.bf16.msra.mxu0 0
        %1085 = vmatprep.subr.bf16.mxu0 0
        %1086 = vmatpush1.bf16.msra.mxu0 0
        %1087 = vmatprep.mubr.bf16.mxu0 0
        %1088 = vmatmul.mubr.bf16.gmra.mrb[0].mxu0 %v1050
        %v1089 = vpop.f32.mrb[0].mxu0
        %v1090 = vadd.f32 0.0, %v1089
        %v1091 = vpop.f32.mrb[0].mxu0
        %v1092 = vpop.f32.mrb[0].mxu0
        %v1093 = vpop.f32.mrb[0].mxu0
        %1094 = vdwg.mxu0
        %v1095 = vadd.f32 %v1046, %v1090
        %1096 = vst.msk [vmem:[#allocation2] sm:$0xff] %vm761, %v1095
        %1098 = vrot.lane.b32.xlu0 %v805, 120
        %v1099 = vpop.permute.xlu0 %1098
        %1101 = vrot.lane.b32.xlu0 %v872, 120
        %v1102 = vpop.permute.xlu0 %1101
        %v1104 = vsel %vm938, %v1099, 0
        %v1107 = vsel %vm938, %v1102, 0
        %1109 = vmatprep.subr.bf16.mxu0 0
        %1110 = vmatpush1.bf16.xpose.msra.mxu0 %v1107
        %1111 = vmatprep.subr.bf16.mxu0 0
        %1112 = vmatpush1.bf16.xpose.msra.mxu0 0
        %1113 = vmatprep.subr.bf16.mxu0 0
        %1114 = vmatpush1.bf16.xpose.msra.mxu0 0
        %1115 = vmatprep.subr.bf16.mxu0 0
        %1116 = vmatpush1.bf16.xpose.msra.mxu0 0
        %1117 = vmatprep.subr.bf16.mxu0 0
        %1118 = vmatpush1.bf16.xpose.msra.mxu0 0
        %1119 = vmatprep.subr.bf16.mxu0 0
        %1120 = vmatpush1.bf16.xpose.msra.mxu0 0
        %1121 = vmatprep.subr.bf16.mxu0 0
        %1122 = vmatpush1.bf16.xpose.msra.mxu0 0
        %1123 = vmatprep.subr.bf16.mxu0 0
        %1124 = vmatpush1.bf16.xpose.msra.mxu0 0
        %1125 = vmatprep.subr.bf16.mxu0 0
        %1126 = vmatpush1.bf16.xpose.msra.mxu0 0
        %1127 = vmatprep.subr.bf16.mxu0 0
        %1128 = vmatpush1.bf16.xpose.msra.mxu0 0
        %1129 = vmatprep.subr.bf16.mxu0 0
        %1130 = vmatpush1.bf16.xpose.msra.mxu0 0
        %1131 = vmatprep.subr.bf16.mxu0 0
        %1132 = vmatpush1.bf16.xpose.msra.mxu0 0
        %1133 = vmatprep.subr.bf16.mxu0 0
        %1134 = vmatpush1.bf16.xpose.msra.mxu0 0
        %1135 = vmatprep.subr.bf16.mxu0 0
        %1136 = vmatpush1.bf16.xpose.msra.mxu0 0
        %1137 = vmatprep.subr.bf16.mxu0 0
        %1138 = vmatpush1.bf16.xpose.msra.mxu0 0
        %1139 = vmatprep.subr.bf16.mxu0 0
        %1140 = vmatpush1.bf16.xpose.msra.mxu0 0
        %1141 = vmatprep.mubr.bf16.mxu0 0
        %1142 = vmatmul.mubr.bf16.gmra.mrb[0].mxu0 %v1104
        %v1143 = vpop.f32.mrb[0].mxu0
        %v1144 = vadd.f32 0.0, %v1143
        %v1145 = vpop.f32.mrb[0].mxu0
        %v1146 = vpop.f32.mrb[0].mxu0
        %v1147 = vpop.f32.mrb[0].mxu0
        %1148 = vdwg.mxu0
        %v1149 = vmul.f32 %v1144, 0.35355338
        %v1150 = vadd.f32 %v1149, %v937
        %v1151 = vsel %vm938, %v1150, -inf
        %1152 = vmax.xlane.f32.xlu0 %v1151
        %v1153 = vpop.xlane.xlu0 %1152
        %v1154 = vsub.f32 %v1150, %v1153
        %v1155 = vmul.f32 %v1154, 1.442695
        %v1156 = vpow.pop %v1155
        %v1157 = vsel %vm938, %v1156, 0.0
        %1158 = vadd.xlane.f32.xlu0 %v1157
        %v1159 = vpop.xlane.xlu0 %1158
        %v1160 = vrcp.pop %v1159
        %v1161 = vmul.f32 %v1156, %v1160
        %v1162 = vpack.c.bf16 %v1161, %v1161
        %1164 = vrot.lane.b32.xlu0 %v936, 120
        %v1165 = vpop.permute.xlu0 %1164
        %v1167 = vsel %vm938, %v1162, 0
        %v1170 = vsel %vm1002, %v1165, 0
        %1172 = vmatprep.subr.bf16.mxu0 0
        %1173 = vmatpush1.bf16.msra.mxu0 %v1170
        %1174 = vmatprep.subr.bf16.mxu0 0
        %1175 = vmatpush1.bf16.msra.mxu0 0
        %1176 = vmatprep.subr.bf16.mxu0 0
        %1177 = vmatpush1.bf16.msra.mxu0 0
        %1178 = vmatprep.subr.bf16.mxu0 0
        %1179 = vmatpush1.bf16.msra.mxu0 0
        %1180 = vmatprep.subr.bf16.mxu0 0
        %1181 = vmatpush1.bf16.msra.mxu0 0
        %1182 = vmatprep.subr.bf16.mxu0 0
        %1183 = vmatpush1.bf16.msra.mxu0 0
        %1184 = vmatprep.subr.bf16.mxu0 0
        %1185 = vmatpush1.bf16.msra.mxu0 0
        %1186 = vmatprep.subr.bf16.mxu0 0
        %1187 = vmatpush1.bf16.msra.mxu0 0
        %1188 = vmatprep.subr.bf16.mxu0 0
        %1189 = vmatpush1.bf16.msra.mxu0 0
        %1190 = vmatprep.subr.bf16.mxu0 0
        %1191 = vmatpush1.bf16.msra.mxu0 0
        %1192 = vmatprep.subr.bf16.mxu0 0
        %1193 = vmatpush1.bf16.msra.mxu0 0
        %1194 = vmatprep.subr.bf16.mxu0 0
        %1195 = vmatpush1.bf16.msra.mxu0 0
        %1196 = vmatprep.subr.bf16.mxu0 0
        %1197 = vmatpush1.bf16.msra.mxu0 0
        %1198 = vmatprep.subr.bf16.mxu0 0
        %1199 = vmatpush1.bf16.msra.mxu0 0
        %1200 = vmatprep.subr.bf16.mxu0 0
        %1201 = vmatpush1.bf16.msra.mxu0 0
        %1202 = vmatprep.subr.bf16.mxu0 0
        %1203 = vmatpush1.bf16.msra.mxu0 0
        %1204 = vmatprep.mubr.bf16.mxu0 0
        %1205 = vmatmul.mubr.bf16.gmra.mrb[0].mxu0 %v1167
        %v1206 = vpop.f32.mrb[0].mxu0
        %v1207 = vadd.f32 0.0, %v1206
        %v1208 = vpop.f32.mrb[0].mxu0
        %v1209 = vpop.f32.mrb[0].mxu0
        %v1210 = vpop.f32.mrb[0].mxu0
        %1211 = vdwg.mxu0
        %v1212 = vld [vmem:[#allocation2] sm:$0xff]
        %v1213 = vpack.c.bf16 %v1207, %v1207
        %v1214 = vld [vmem:[#allocation18 + $0x4] sm:$0xf]
        %v1216 = vsel %vm938, %v1213, 0
        %v1219 = vsel %vm1002, %v1214, 0
        %1221 = vmatprep.subr.bf16.mxu0 0
        %1222 = vmatpush1.bf16.msra.mxu0 %v1219
        %1223 = vmatprep.subr.bf16.mxu0 0
        %1224 = vmatpush1.bf16.msra.mxu0 0
        %1225 = vmatprep.subr.bf16.mxu0 0
        %1226 = vmatpush1.bf16.msra.mxu0 0
        %1227 = vmatprep.subr.bf16.mxu0 0
        %1228 = vmatpush1.bf16.msra.mxu0 0
        %1229 = vmatprep.subr.bf16.mxu0 0
        %1230 = vmatpush1.bf16.msra.mxu0 0
        %1231 = vmatprep.subr.bf16.mxu0 0
        %1232 = vmatpush1.bf16.msra.mxu0 0
        %1233 = vmatprep.subr.bf16.mxu0 0
        %1234 = vmatpush1.bf16.msra.mxu0 0
        %1235 = vmatprep.subr.bf16.mxu0 0
        %1236 = vmatpush1.bf16.msra.mxu0 0
        %1237 = vmatprep.subr.bf16.mxu0 0
        %1238 = vmatpush1.bf16.msra.mxu0 0
        %1239 = vmatprep.subr.bf16.mxu0 0
        %1240 = vmatpush1.bf16.msra.mxu0 0
        %1241 = vmatprep.subr.bf16.mxu0 0
        %1242 = vmatpush1.bf16.msra.mxu0 0
        %1243 = vmatprep.subr.bf16.mxu0 0
        %1244 = vmatpush1.bf16.msra.mxu0 0
        %1245 = vmatprep.subr.bf16.mxu0 0
        %1246 = vmatpush1.bf16.msra.mxu0 0
        %1247 = vmatprep.subr.bf16.mxu0 0
        %1248 = vmatpush1.bf16.msra.mxu0 0
        %1249 = vmatprep.subr.bf16.mxu0 0
        %1250 = vmatpush1.bf16.msra.mxu0 0
        %1251 = vmatprep.subr.bf16.mxu0 0
        %1252 = vmatpush1.bf16.msra.mxu0 0
        %1253 = vmatprep.mubr.bf16.mxu0 0
        %1254 = vmatmul.mubr.bf16.gmra.mrb[0].mxu0 %v1216
        %v1255 = vpop.f32.mrb[0].mxu0
        %v1256 = vadd.f32 0.0, %v1255
        %v1257 = vpop.f32.mrb[0].mxu0
        %v1258 = vpop.f32.mrb[0].mxu0
        %v1259 = vpop.f32.mrb[0].mxu0
        %1260 = vdwg.mxu0
        %v1261 = vadd.f32 %v1212, %v1256
        %1262 = vst.msk [vmem:[#allocation2] sm:$0xff] %vm761, %v1261
        %1263 = vrot.lane.b32.xlu0 %v805, 112
        %v1264 = vpop.permute.xlu0 %1263
        %1265 = vrot.lane.b32.xlu0 %v872, 112
        %v1266 = vpop.permute.xlu0 %1265
        %v1268 = vsel %vm938, %v1264, 0
        %v1271 = vsel %vm938, %v1266, 0
        %1273 = vmatprep.subr.bf16.mxu0 0
        %1274 = vmatpush1.bf16.xpose.msra.mxu0 %v1271
        %1275 = vmatprep.subr.bf16.mxu0 0
        %1276 = vmatpush1.bf16.xpose.msra.mxu0 0
        %1277 = vmatprep.subr.bf16.mxu0 0
        %1278 = vmatpush1.bf16.xpose.msra.mxu0 0
        %1279 = vmatprep.subr.bf16.mxu0 0
        %1280 = vmatpush1.bf16.xpose.msra.mxu0 0
        %1281 = vmatprep.subr.bf16.mxu0 0
        %1282 = vmatpush1.bf16.xpose.msra.mxu0 0
        %1283 = vmatprep.subr.bf16.mxu0 0
        %1284 = vmatpush1.bf16.xpose.msra.mxu0 0
        %1285 = vmatprep.subr.bf16.mxu0 0
        %1286 = vmatpush1.bf16.xpose.msra.mxu0 0
        %1287 = vmatprep.subr.bf16.mxu0 0
        %1288 = vmatpush1.bf16.xpose.msra.mxu0 0
        %1289 = vmatprep.subr.bf16.mxu0 0
        %1290 = vmatpush1.bf16.xpose.msra.mxu0 0
        %1291 = vmatprep.subr.bf16.mxu0 0
        %1292 = vmatpush1.bf16.xpose.msra.mxu0 0
        %1293 = vmatprep.subr.bf16.mxu0 0
        %1294 = vmatpush1.bf16.xpose.msra.mxu0 0
        %1295 = vmatprep.subr.bf16.mxu0 0
        %1296 = vmatpush1.bf16.xpose.msra.mxu0 0
        %1297 = vmatprep.subr.bf16.mxu0 0
        %1298 = vmatpush1.bf16.xpose.msra.mxu0 0
        %1299 = vmatprep.subr.bf16.mxu0 0
        %1300 = vmatpush1.bf16.xpose.msra.mxu0 0
        %1301 = vmatprep.subr.bf16.mxu0 0
        %1302 = vmatpush1.bf16.xpose.msra.mxu0 0
        %1303 = vmatprep.subr.bf16.mxu0 0
        %1304 = vmatpush1.bf16.xpose.msra.mxu0 0
        %1305 = vmatprep.mubr.bf16.mxu0 0
        %1306 = vmatmul.mubr.bf16.gmra.mrb[0].mxu0 %v1268
        %v1307 = vpop.f32.mrb[0].mxu0
        %v1308 = vadd.f32 0.0, %v1307
        %v1309 = vpop.f32.mrb[0].mxu0
        %v1310 = vpop.f32.mrb[0].mxu0
        %v1311 = vpop.f32.mrb[0].mxu0
        %1312 = vdwg.mxu0
        %v1313 = vmul.f32 %v1308, 0.35355338
        %v1314 = vadd.f32 %v1313, %v937
        %v1315 = vsel %vm938, %v1314, -inf
        %1316 = vmax.xlane.f32.xlu0 %v1315
        %v1317 = vpop.xlane.xlu0 %1316
        %v1318 = vsub.f32 %v1314, %v1317
        %v1319 = vmul.f32 %v1318, 1.442695
        %v1320 = vpow.pop %v1319
        %v1321 = vsel %vm938, %v1320, 0.0
        %1322 = vadd.xlane.f32.xlu0 %v1321
        %v1323 = vpop.xlane.xlu0 %1322
        %v1324 = vrcp.pop %v1323
        %v1325 = vmul.f32 %v1320, %v1324
        %v1326 = vpack.c.bf16 %v1325, %v1325
        %1327 = vrot.lane.b32.xlu0 %v936, 112
        %v1328 = vpop.permute.xlu0 %1327
        %v1330 = vsel %vm938, %v1326, 0
        %v1333 = vsel %vm1002, %v1328, 0
        %1335 = vmatprep.subr.bf16.mxu0 0
        %1336 = vmatpush1.bf16.msra.mxu0 %v1333
        %1337 = vmatprep.subr.bf16.mxu0 0
        %1338 = vmatpush1.bf16.msra.mxu0 0
        %1339 = vmatprep.subr.bf16.mxu0 0
        %1340 = vmatpush1.bf16.msra.mxu0 0
        %1341 = vmatprep.subr.bf16.mxu0 0
        %1342 = vmatpush1.bf16.msra.mxu0 0
        %1343 = vmatprep.subr.bf16.mxu0 0
        %1344 = vmatpush1.bf16.msra.mxu0 0
        %1345 = vmatprep.subr.bf16.mxu0 0
        %1346 = vmatpush1.bf16.msra.mxu0 0
        %1347 = vmatprep.subr.bf16.mxu0 0
        %1348 = vmatpush1.bf16.msra.mxu0 0
        %1349 = vmatprep.subr.bf16.mxu0 0
        %1350 = vmatpush1.bf16.msra.mxu0 0
        %1351 = vmatprep.subr.bf16.mxu0 0
        %1352 = vmatpush1.bf16.msra.mxu0 0
        %1353 = vmatprep.subr.bf16.mxu0 0
        %1354 = vmatpush1.bf16.msra.mxu0 0
        %1355 = vmatprep.subr.bf16.mxu0 0
        %1356 = vmatpush1.bf16.msra.mxu0 0
        %1357 = vmatprep.subr.bf16.mxu0 0
        %1358 = vmatpush1.bf16.msra.mxu0 0
        %1359 = vmatprep.subr.bf16.mxu0 0
        %1360 = vmatpush1.bf16.msra.mxu0 0
        %1361 = vmatprep.subr.bf16.mxu0 0
        %1362 = vmatpush1.bf16.msra.mxu0 0
        %1363 = vmatprep.subr.bf16.mxu0 0
        %1364 = vmatpush1.bf16.msra.mxu0 0
        %1365 = vmatprep.subr.bf16.mxu0 0
        %1366 = vmatpush1.bf16.msra.mxu0 0
        %1367 = vmatprep.mubr.bf16.mxu0 0
        %1368 = vmatmul.mubr.bf16.gmra.mrb[0].mxu0 %v1330
        %v1369 = vpop.f32.mrb[0].mxu0
        %v1370 = vadd.f32 0.0, %v1369
        %v1371 = vpop.f32.mrb[0].mxu0
        %v1372 = vpop.f32.mrb[0].mxu0
        %v1373 = vpop.f32.mrb[0].mxu0
        %1374 = vdwg.mxu0
        %v1375 = vld [vmem:[#allocation2] sm:$0xff]
        %v1376 = vpack.c.bf16 %v1370, %v1370
        %v1377 = vld [vmem:[#allocation18 + $0x8] sm:$0xf]
        %v1379 = vsel %vm938, %v1376, 0
        %v1382 = vsel %vm1002, %v1377, 0
        %1384 = vmatprep.subr.bf16.mxu0 0
        %1385 = vmatpush1.bf16.msra.mxu0 %v1382
        %1386 = vmatprep.subr.bf16.mxu0 0
        %1387 = vmatpush1.bf16.msra.mxu0 0
        %1388 = vmatprep.subr.bf16.mxu0 0
        %1389 = vmatpush1.bf16.msra.mxu0 0
        %1390 = vmatprep.subr.bf16.mxu0 0
        %1391 = vmatpush1.bf16.msra.mxu0 0
        %1392 = vmatprep.subr.bf16.mxu0 0
        %1393 = vmatpush1.bf16.msra.mxu0 0
        %1394 = vmatprep.subr.bf16.mxu0 0
        %1395 = vmatpush1.bf16.msra.mxu0 0
        %1396 = vmatprep.subr.bf16.mxu0 0
        %1397 = vmatpush1.bf16.msra.mxu0 0
        %1398 = vmatprep.subr.bf16.mxu0 0
        %1399 = vmatpush1.bf16.msra.mxu0 0
        %1400 = vmatprep.subr.bf16.mxu0 0
        %1401 = vmatpush1.bf16.msra.mxu0 0
        %1402 = vmatprep.subr.bf16.mxu0 0
        %1403 = vmatpush1.bf16.msra.mxu0 0
        %1404 = vmatprep.subr.bf16.mxu0 0
        %1405 = vmatpush1.bf16.msra.mxu0 0
        %1406 = vmatprep.subr.bf16.mxu0 0
        %1407 = vmatpush1.bf16.msra.mxu0 0
        %1408 = vmatprep.subr.bf16.mxu0 0
        %1409 = vmatpush1.bf16.msra.mxu0 0
        %1410 = vmatprep.subr.bf16.mxu0 0
        %1411 = vmatpush1.bf16.msra.mxu0 0
        %1412 = vmatprep.subr.bf16.mxu0 0
        %1413 = vmatpush1.bf16.msra.mxu0 0
        %1414 = vmatprep.subr.bf16.mxu0 0
        %1415 = vmatpush1.bf16.msra.mxu0 0
        %1416 = vmatprep.mubr.bf16.mxu0 0
        %1417 = vmatmul.mubr.bf16.gmra.mrb[0].mxu0 %v1379
        %v1418 = vpop.f32.mrb[0].mxu0
        %v1419 = vadd.f32 0.0, %v1418
        %v1420 = vpop.f32.mrb[0].mxu0
        %v1421 = vpop.f32.mrb[0].mxu0
        %v1422 = vpop.f32.mrb[0].mxu0
        %1423 = vdwg.mxu0
        %v1424 = vadd.f32 %v1375, %v1419
        %1425 = vst.msk [vmem:[#allocation2] sm:$0xff] %vm761, %v1424
        %1426 = vrot.lane.b32.xlu0 %v805, 104
        %v1427 = vpop.permute.xlu0 %1426
        %1428 = vrot.lane.b32.xlu0 %v872, 104
        %v1429 = vpop.permute.xlu0 %1428
        %v1431 = vsel %vm938, %v1427, 0
        %v1434 = vsel %vm938, %v1429, 0
        %1436 = vmatprep.subr.bf16.mxu0 0
        %1437 = vmatpush1.bf16.xpose.msra.mxu0 %v1434
        %1438 = vmatprep.subr.bf16.mxu0 0
        %1439 = vmatpush1.bf16.xpose.msra.mxu0 0
        %1440 = vmatprep.subr.bf16.mxu0 0
        %1441 = vmatpush1.bf16.xpose.msra.mxu0 0
        %1442 = vmatprep.subr.bf16.mxu0 0
        %1443 = vmatpush1.bf16.xpose.msra.mxu0 0
        %1444 = vmatprep.subr.bf16.mxu0 0
        %1445 = vmatpush1.bf16.xpose.msra.mxu0 0
        %1446 = vmatprep.subr.bf16.mxu0 0
        %1447 = vmatpush1.bf16.xpose.msra.mxu0 0
        %1448 = vmatprep.subr.bf16.mxu0 0
        %1449 = vmatpush1.bf16.xpose.msra.mxu0 0
        %1450 = vmatprep.subr.bf16.mxu0 0
        %1451 = vmatpush1.bf16.xpose.msra.mxu0 0
        %1452 = vmatprep.subr.bf16.mxu0 0
        %1453 = vmatpush1.bf16.xpose.msra.mxu0 0
        %1454 = vmatprep.subr.bf16.mxu0 0
        %1455 = vmatpush1.bf16.xpose.msra.mxu0 0
        %1456 = vmatprep.subr.bf16.mxu0 0
        %1457 = vmatpush1.bf16.xpose.msra.mxu0 0
        %1458 = vmatprep.subr.bf16.mxu0 0
        %1459 = vmatpush1.bf16.xpose.msra.mxu0 0
        %1460 = vmatprep.subr.bf16.mxu0 0
        %1461 = vmatpush1.bf16.xpose.msra.mxu0 0
        %1462 = vmatprep.subr.bf16.mxu0 0
        %1463 = vmatpush1.bf16.xpose.msra.mxu0 0
        %1464 = vmatprep.subr.bf16.mxu0 0
        %1465 = vmatpush1.bf16.xpose.msra.mxu0 0
        %1466 = vmatprep.subr.bf16.mxu0 0
        %1467 = vmatpush1.bf16.xpose.msra.mxu0 0
        %1468 = vmatprep.mubr.bf16.mxu0 0
        %1469 = vmatmul.mubr.bf16.gmra.mrb[0].mxu0 %v1431
        %v1470 = vpop.f32.mrb[0].mxu0
        %v1471 = vadd.f32 0.0, %v1470
        %v1472 = vpop.f32.mrb[0].mxu0
        %v1473 = vpop.f32.mrb[0].mxu0
        %v1474 = vpop.f32.mrb[0].mxu0
        %1475 = vdwg.mxu0
        %v1476 = vmul.f32 %v1471, 0.35355338
        %v1477 = vadd.f32 %v1476, %v937
        %v1478 = vsel %vm938, %v1477, -inf
        %1479 = vmax.xlane.f32.xlu0 %v1478
        %v1480 = vpop.xlane.xlu0 %1479
        %v1481 = vsub.f32 %v1477, %v1480
        %v1482 = vmul.f32 %v1481, 1.442695
        %v1483 = vpow.pop %v1482
        %v1484 = vsel %vm938, %v1483, 0.0
        %1485 = vadd.xlane.f32.xlu0 %v1484
        %v1486 = vpop.xlane.xlu0 %1485
        %v1487 = vrcp.pop %v1486
        %v1488 = vmul.f32 %v1483, %v1487
        %v1489 = vpack.c.bf16 %v1488, %v1488
        %1490 = vrot.lane.b32.xlu0 %v936, 104
        %v1491 = vpop.permute.xlu0 %1490
        %v1493 = vsel %vm938, %v1489, 0
        %v1496 = vsel %vm1002, %v1491, 0
        %1498 = vmatprep.subr.bf16.mxu0 0
        %1499 = vmatpush1.bf16.msra.mxu0 %v1496
        %1500 = vmatprep.subr.bf16.mxu0 0
        %1501 = vmatpush1.bf16.msra.mxu0 0
        %1502 = vmatprep.subr.bf16.mxu0 0
        %1503 = vmatpush1.bf16.msra.mxu0 0
        %1504 = vmatprep.subr.bf16.mxu0 0
        %1505 = vmatpush1.bf16.msra.mxu0 0
        %1506 = vmatprep.subr.bf16.mxu0 0
        %1507 = vmatpush1.bf16.msra.mxu0 0
        %1508 = vmatprep.subr.bf16.mxu0 0
        %1509 = vmatpush1.bf16.msra.mxu0 0
        %1510 = vmatprep.subr.bf16.mxu0 0
        %1511 = vmatpush1.bf16.msra.mxu0 0
        %1512 = vmatprep.subr.bf16.mxu0 0
        %1513 = vmatpush1.bf16.msra.mxu0 0
        %1514 = vmatprep.subr.bf16.mxu0 0
        %1515 = vmatpush1.bf16.msra.mxu0 0
        %1516 = vmatprep.subr.bf16.mxu0 0
        %1517 = vmatpush1.bf16.msra.mxu0 0
        %1518 = vmatprep.subr.bf16.mxu0 0
        %1519 = vmatpush1.bf16.msra.mxu0 0
        %1520 = vmatprep.subr.bf16.mxu0 0
        %1521 = vmatpush1.bf16.msra.mxu0 0
        %1522 = vmatprep.subr.bf16.mxu0 0
        %1523 = vmatpush1.bf16.msra.mxu0 0
        %1524 = vmatprep.subr.bf16.mxu0 0
        %1525 = vmatpush1.bf16.msra.mxu0 0
        %1526 = vmatprep.subr.bf16.mxu0 0
        %1527 = vmatpush1.bf16.msra.mxu0 0
        %1528 = vmatprep.subr.bf16.mxu0 0
        %1529 = vmatpush1.bf16.msra.mxu0 0
        %1530 = vmatprep.mubr.bf16.mxu0 0
        %1531 = vmatmul.mubr.bf16.gmra.mrb[0].mxu0 %v1493
        %v1532 = vpop.f32.mrb[0].mxu0
        %v1533 = vadd.f32 0.0, %v1532
        %v1534 = vpop.f32.mrb[0].mxu0
        %v1535 = vpop.f32.mrb[0].mxu0
        %v1536 = vpop.f32.mrb[0].mxu0
        %1537 = vdwg.mxu0
        %v1538 = vld [vmem:[#allocation2] sm:$0xff]
        %v1539 = vpack.c.bf16 %v1533, %v1533
        %v1540 = vld [vmem:[#allocation18 + $0xc] sm:$0xf]
        %v1542 = vsel %vm938, %v1539, 0
        %v1545 = vsel %vm1002, %v1540, 0
        %1547 = vmatprep.subr.bf16.mxu0 0
        %1548 = vmatpush1.bf16.msra.mxu0 %v1545
        %1549 = vmatprep.subr.bf16.mxu0 0
        %1550 = vmatpush1.bf16.msra.mxu0 0
        %1551 = vmatprep.subr.bf16.mxu0 0
        %1552 = vmatpush1.bf16.msra.mxu0 0
        %1553 = vmatprep.subr.bf16.mxu0 0
        %1554 = vmatpush1.bf16.msra.mxu0 0
        %1555 = vmatprep.subr.bf16.mxu0 0
        %1556 = vmatpush1.bf16.msra.mxu0 0
        %1557 = vmatprep.subr.bf16.mxu0 0
        %1558 = vmatpush1.bf16.msra.mxu0 0
        %1559 = vmatprep.subr.bf16.mxu0 0
        %1560 = vmatpush1.bf16.msra.mxu0 0
        %1561 = vmatprep.subr.bf16.mxu0 0
        %1562 = vmatpush1.bf16.msra.mxu0 0
        %1563 = vmatprep.subr.bf16.mxu0 0
        %1564 = vmatpush1.bf16.msra.mxu0 0
        %1565 = vmatprep.subr.bf16.mxu0 0
        %1566 = vmatpush1.bf16.msra.mxu0 0
        %1567 = vmatprep.subr.bf16.mxu0 0
        %1568 = vmatpush1.bf16.msra.mxu0 0
        %1569 = vmatprep.subr.bf16.mxu0 0
        %1570 = vmatpush1.bf16.msra.mxu0 0
        %1571 = vmatprep.subr.bf16.mxu0 0
        %1572 = vmatpush1.bf16.msra.mxu0 0
        %1573 = vmatprep.subr.bf16.mxu0 0
        %1574 = vmatpush1.bf16.msra.mxu0 0
        %1575 = vmatprep.subr.bf16.mxu0 0
        %1576 = vmatpush1.bf16.msra.mxu0 0
        %1577 = vmatprep.subr.bf16.mxu0 0
        %1578 = vmatpush1.bf16.msra.mxu0 0
        %1579 = vmatprep.mubr.bf16.mxu0 0
        %1580 = vmatmul.mubr.bf16.gmra.mrb[0].mxu0 %v1542
        %v1581 = vpop.f32.mrb[0].mxu0
        %v1582 = vadd.f32 0.0, %v1581
        %v1583 = vpop.f32.mrb[0].mxu0
        %v1584 = vpop.f32.mrb[0].mxu0
        %v1585 = vpop.f32.mrb[0].mxu0
        %1586 = vdwg.mxu0
        %v1587 = vadd.f32 %v1538, %v1582
        %1588 = vst.msk [vmem:[#allocation2] sm:$0xff] %vm761, %v1587
        // Predicated region
        $region129: #{transformer_decoder_forward.6} parent=71 // pred_check
          %p1589 = pneg %p723
        $region130: #{transformer_decoder_forward.6} parent=71 // pred_check_branch
          %1591 = sbr.rel (%p1589) target = $region132
        $region131: #{transformer_decoder_forward.6} parent=71 // pred_region
          %v1592 = vld [vmem:[#allocation2] sm:$0xff]
          %v1593 = vsel %vm761, %v1592, 0.0
          %1594 = vadd.xlane.f32.xlu0 %v1593
          %v1595 = vpop.xlane.xlu0 %1594
          %v1596 = vrcp.pop 32.0
          %v1597 = vmul.f32 %v1595, %v1596
          %v1598 = vsub.f32 %v1592, %v1597
          %v1599 = vmul.f32 %v1598, %v1598
          %v1600 = vsel %vm761, %v1599, 0.0
          %1601 = vadd.xlane.f32.xlu0 %v1600
          %v1602 = vpop.xlane.xlu0 %1601
          %v1603 = vmul.f32 %v1602, %v1596
          %v1604 = vadd.f32 %v1603, 1e-05
          %v1605 = vrsqrt.pop %v1604
          %v1606 = vmul.f32 %v1598, %v1605
          %v1607 = vld [vmem:[#allocation21] sm:$0x1]
          %v1609 = vlaneseq
          %v1610 = vshrl.u32 %v1609, 7
          %v1611 = vsub.s32 0, %v1610
          %v1612 = vrot.slane %v1607, %v1611
          %v1614 = vmul.f32 %v1606, %v1612
          %v1615 = vld [vmem:[#allocation23] sm:$0x1]
          %v1617 = vlaneseq
          %v1618 = vshrl.u32 %v1617, 7
          %v1619 = vsub.s32 0, %v1618
          %v1620 = vrot.slane %v1615, %v1619
          %v1622 = vadd.f32 %v1614, %v1620
          %v1623 = vpack.c.bf16 %v1622, %v1622
          %vm1624 = vcmask 257024
          %1625 = vst.msk [vmem:[%s718] sm:$0xf] %vm1624, %v1623
        $region132: #{transformer_decoder_forward.6} parent=71 // pred_fallthru
          _
        %s1626 = sand.u32 %s392, 1
        %s1627 = scalar_lea.sflag [#allocation5], %s1626
        %s1628 = sand.u32 %s392, 1
        %s1629 = smul.addr %s1628, 4
        %s1630 = scalar_lea.vmem [#allocation24], %s1629
        // Predicated region
        $region133: #{transformer_decoder_forward.6} parent=71 // pred_check
          %p1631 = pneg %p402
        $region134: #{transformer_decoder_forward.6} parent=71 // pred_check_branch
          %1633 = sbr.rel (%p1631) target = $region136
        $region135: #{transformer_decoder_forward.6} parent=71 // pred_region
          %s1635 = ssub.s32 64, 64
          %1636 = vsyncadd %s1627, %s1635
          %s1637 = sadd.s32 %s44, %s43
          %s1638 = smul.addr %s1637, 64
          %s1639 = scalar_lea.hbm %s13, %s1638
          %s1641 = sshll.u32 %s1630, 4
          %s1642 = int_to_ptr.vmem [resolvable:$true] %s1641
          %1644 = dma.vmem_to_hbm [thread:$0]  %s1642, 64, %s1639, %s1627
        $region136: #{transformer_decoder_forward.6} parent=71 // pred_fallthru
          _
      $region72: #{transformer_decoder_forward.6} parent=5 // pred_fallthru
        _
      %p1645 = scmp.le.s32.totalorder 2, %s33
      // Predicated region
      $region137: #{transformer_decoder_forward.6} parent=5 // pred_check
        %p1646 = pneg %p1645
      $region138: #{transformer_decoder_forward.6} parent=5 // pred_check_branch
        %1648 = sbr.rel (%p1646) target = $region140
      $region139: #{transformer_decoder_forward.6} parent=5 // pred_region
        %s1649 = ssub.s32 %s33, 2
        // Predicated region
        $region141: #{transformer_decoder_forward.6} parent=139 // pred_check
          %p1650 = pneg %p408
        $region142: #{transformer_decoder_forward.6} parent=139 // pred_check_branch
          %1652 = sbr.rel (%p1650) target = $region144
        $region143: #{transformer_decoder_forward.6} parent=139 // pred_region
          %s1653 = sand.u32 %s393, 1
          %s1654 = scalar_lea.sflag [#allocation5], %s1653
          %s1655 = sand.u32 %s393, 1
          %s1656 = smul.addr %s1655, 4
          %s1657 = scalar_lea.vmem [#allocation24], %s1656
          %1658 = dma.done %s1654, 64
        $region144: #{transformer_decoder_forward.6} parent=139 // pred_fallthru
          _
      $region140: #{transformer_decoder_forward.6} parent=5 // pred_fallthru
        _
    $region6: #{transformer_decoder_forward.6} parent=1 // loop_footer
      %s37 = sadd.s32 1, %s33
    $region7: #{transformer_decoder_forward.6} parent=1 // loop_footer_branch
      %32 = sbr.rel target = $region3
    $region8: #{transformer_decoder_forward.6} parent=1 // loop_exit
      _
    %1659 = vsyncpa [#allocation4], 1
    %s1660 = scalar_lea.sflag [#allocation4], 1
    %1661 = vsyncpa %s1660, 1
    %1662 = vsyncpa [#allocation7], 1
    %s1663 = scalar_lea.sflag [#allocation7], 1
    %1664 = vsyncpa %s1663, 1
    %1665 = vsyncpa [#allocation10], 1
    %1666 = vsyncpa [#allocation13], 1
    %1667 = vsyncpa [#allocation16], 1
    %1668 = vsyncpa [#allocation19], 1
    %1669 = vsyncpa [#allocation22], 1
    %1670 = vsyncpa [#allocation5], 1
    %s1671 = scalar_lea.sflag [#allocation5], 1
    %1672 = vsyncpa %s1671, 1

</llo_original>
